<compile_context>
chip_gen: v7x
topology: tpu7x:2x2x1
jax: 0.10.0
libtpu: 0.0.40
codegen_flags: <defaults>
</compile_context>

<pallas_src>
import numpy as np
import jax
import jax.numpy as jnp
from jax.experimental import pallas as pl
from jax.experimental.pallas import tpu as pltpu

# ---- small, ratio-consistent configuration -------------------------------
B = 2            # batch
NUM_WS = 8       # number of w latents per sample
LATENT_DIM = 32  # latent dimension
C = 3            # image channels
H_IN = 32        # synthesized image spatial size (stands in for e.g. 1024)
H_OUT = 8        # pooled size (stands in for ImageProcessing.image_size = 256)

LDIM = NUM_WS * LATENT_DIM            # 256
PLANE = H_IN * H_IN                   # 1024  (one channel plane, flattened)
POOLED = H_OUT * H_OUT                # 64
PIX = C * PLANE                       # 3072

MIN_VAL = -1.0   # PostSynthesisProcessing.min_value
MAX_VAL = 1.0    # PostSynthesisProcessing.max_value


def _make_pool_operator() -> np.ndarray:
    """(PLANE, POOLED) operator with x_flat @ P == adaptive_avg_pool2d(x, H_OUT) flat.

    H_OUT divides H_IN, so adaptive_avg_pool2d is an exact uniform k x k average
    pool; as a single matmul it needs no reshapes/relayouts inside the kernel.
    Built with numpy on the host (pure compile-time constant).
    """
    k = H_IN // H_OUT
    a = np.kron(np.eye(H_OUT, dtype=np.float64),
                np.ones((1, k), dtype=np.float64))          # (H_OUT, H_IN)
    p = np.kron(a, a).T / (k * k)                            # (PLANE, POOLED)
    return p.astype(np.float32)


_POOL_P = _make_pool_operator()


# ---------------------------------------------------------------------------
# Fused kernel: synthesizer matmul + PostSynthesisProcessing + avg pool.
# One channel plane (PLANE pixels) per grid step.
# ---------------------------------------------------------------------------
def fused_kernel(z_ref, w_ref, b_ref, p_ref, out_ref):
    # 1) stand-in synthesizer: bf16 MXU matmul, f32 accumulation, f32 bias.
    # TODO(synk): the real StyleGAN synthesizer is an external module with no given
    #             architecture; replaced by a deterministic linear latent->pixel map.
    img = jnp.dot(z_ref[...], w_ref[...], preferred_element_type=jnp.float32)
    img = img + b_ref[...]                                     # (B, PLANE) f32

    # 2) PostSynthesisProcessing (VPU work, hidden under MXU/DMA; kept in f32).
    img = (img - MIN_VAL) * (255.0 / (MAX_VAL - MIN_VAL))
    img = jnp.clip(img + 0.5, 0.0, 255.0)

    # 3) ImageProcessing: exact uniform average pool as one MXU matmul.
    pooled = jnp.dot(img, p_ref[...],
                     preferred_element_type=jnp.float32,
                     precision=jax.lax.Precision.HIGHEST)       # (B, POOLED)
    out_ref[0] = pooled


def latent_optimizer_forward(dlatents, style, synth_w, synth_b):
    del style  # unused by LatentOptimizer.forward (matches PyTorch semantics)
    bsz = dlatents.shape[0]

    z = dlatents.reshape(bsz, LDIM).astype(jnp.bfloat16)
    w = synth_w.astype(jnp.bfloat16)           # no-op if already bf16
    pool_p = jnp.asarray(_POOL_P)

    out = pl.pallas_call(
        fused_kernel,
        out_shape=jax.ShapeDtypeStruct((C, bsz, POOLED), jnp.float32),
        grid=(C,),
        in_specs=[
            pl.BlockSpec((bsz, LDIM), lambda c: (0, 0)),        # latents, loaded once
            pl.BlockSpec((LDIM, PLANE), lambda c: (0, c)),      # weight tile, pipelined
            pl.BlockSpec((1, PLANE), lambda c: (0, c)),         # bias tile
            pl.BlockSpec((PLANE, POOLED), lambda c: (0, 0)),    # pool operator, loaded once
        ],
        out_specs=pl.BlockSpec((1, bsz, POOLED), lambda c: (c, 0, 0)),
        compiler_params=pltpu.CompilerParams(
            dimension_semantics=("parallel",)),                  # megacore split on v7x
    )(z, w, synth_b, pool_p)

    return out.transpose(1, 0, 2).reshape(bsz, C, H_OUT, H_OUT)


# ---------------------------------------------------------------------------
# Pure-JAX reference for verification
# ---------------------------------------------------------------------------
def ref_forward(dlatents, synth_w, synth_b):
    z = dlatents.reshape(B, LDIM).astype(jnp.bfloat16)
    img = jnp.dot(z, synth_w.astype(jnp.bfloat16),
                  preferred_element_type=jnp.float32) + synth_b
    img = (img - MIN_VAL) * (255.0 / (MAX_VAL - MIN_VAL))
    img = jnp.clip(img + 0.5, 0.0, 255.0)
    img = img.reshape(B, C, H_IN, H_IN)
    k = H_IN // H_OUT
    return img.reshape(B, C, H_OUT, k, H_OUT, k).mean(axis=(3, 5))


if __name__ == "__main__":
    key = jax.random.PRNGKey(0)
    k1, k2, k3, k4 = jax.random.split(key, 4)

    dlatents = jax.random.normal(k1, (B, NUM_WS, LATENT_DIM), dtype=jnp.float32)
    style = jax.random.normal(k2, (B, C, H_IN, H_IN), dtype=jnp.float32)  # unused
    synth_w = (0.05 * jax.random.normal(
        k3, (LDIM, PIX), dtype=jnp.float32)).astype(jnp.bfloat16)
    synth_b = 0.01 * jax.random.normal(k4, (1, PIX), dtype=jnp.float32)

    out = latent_optimizer_forward(dlatents, style, synth_w, synth_b)
    out = jax.block_until_ready(out)

    ref = ref_forward(dlatents, synth_w, synth_b)
    assert out.shape == (B, C, H_OUT, H_OUT), out.shape
    assert jnp.allclose(out, ref, atol=1e-3, rtol=1e-3), \
        float(jnp.max(jnp.abs(out - ref)))

    print("KERNEL_OK")
</pallas_src>

<mosaic_0001>
module attributes {stable_mosaic.version = 11 : i64} {
  func.func @fused_kernel(%arg0: i32, %arg1: memref<2x256xbf16, #tpu.memory_space<vmem>>, %arg2: memref<256x1024xbf16, #tpu.memory_space<vmem>>, %arg3: memref<1x1024xf32, #tpu.memory_space<vmem>>, %arg4: memref<1024x64xf32, #tpu.memory_space<vmem>>, %arg5: memref<1x2x64xf32, #tpu.memory_space<vmem>>) attributes {dimension_semantics = [#tpu.dimension_semantics<parallel>], iteration_bounds = array<i64: 3>, scalar_prefetch = 0 : i64, scratch_operands = 0 : i64, tpu.core_type = #tpu.core_type<tc>, window_params = [{pipeline_mode = #tpu.pipeline_mode<synchronous>, transform_indices = @transform_0, window_bounds = array<i64: 2, 256>}, {transform_indices = @transform_1, window_bounds = array<i64: 256, 1024>}, {transform_indices = @transform_2, window_bounds = array<i64: 1, 1024>}, {pipeline_mode = #tpu.pipeline_mode<synchronous>, transform_indices = @transform_3, window_bounds = array<i64: 1024, 64>}, {transform_indices = @transform_4, window_bounds = array<i64: 1, 2, 64>}]} {
    %c0 = arith.constant 0 : index
    %c0_0 = arith.constant 0 : index
    %0 = vector.load %arg1[%c0, %c0_0] : memref<2x256xbf16, #tpu.memory_space<vmem>>, vector<2x256xbf16>
    %c0_1 = arith.constant 0 : index
    %c0_2 = arith.constant 0 : index
    %1 = vector.load %arg2[%c0_1, %c0_2] : memref<256x1024xbf16, #tpu.memory_space<vmem>>, vector<256x1024xbf16>
    %cst = arith.constant dense<0.000000e+00> : vector<2x1024xf32>
    %2 = tpu.matmul %0, %1, %cst {dimension_numbers = #tpu.dot_dimension_numbers<[1], [0], [0], [1], [0, 0, 1, 1], [], []>} : vector<2x256xbf16>, vector<256x1024xbf16>, vector<2x1024xf32> -> vector<2x1024xf32>
    %c0_3 = arith.constant 0 : index
    %c0_4 = arith.constant 0 : index
    %3 = vector.load %arg3[%c0_3, %c0_4] : memref<1x1024xf32, #tpu.memory_space<vmem>>, vector<1x1024xf32>
    %4 = vector.broadcast %3 : vector<1x1024xf32> to vector<2x1024xf32>
    %5 = arith.addf %2, %4 : vector<2x1024xf32>
    %cst_5 = arith.constant -1.000000e+00 : f32
    %6 = vector.broadcast %cst_5 : f32 to vector<2x1024xf32>
    %7 = arith.subf %5, %6 : vector<2x1024xf32>
    %cst_6 = arith.constant 1.275000e+02 : f32
    %8 = vector.broadcast %cst_6 : f32 to vector<2x1024xf32>
    %9 = arith.mulf %7, %8 : vector<2x1024xf32>
    %cst_7 = arith.constant 5.000000e-01 : f32
    %10 = vector.broadcast %cst_7 : f32 to vector<2x1024xf32>
    %11 = arith.addf %9, %10 : vector<2x1024xf32>
    %cst_8 = arith.constant 0.000000e+00 : f32
    %cst_9 = arith.constant 2.550000e+02 : f32
    %12 = vector.broadcast %cst_8 : f32 to vector<2x1024xf32>
    %13 = arith.maximumf %12, %11 : vector<2x1024xf32>
    %14 = vector.broadcast %cst_9 : f32 to vector<2x1024xf32>
    %15 = arith.minimumf %14, %13 : vector<2x1024xf32>
    %c0_10 = arith.constant 0 : index
    %c0_11 = arith.constant 0 : index
    %16 = vector.load %arg4[%c0_10, %c0_11] : memref<1024x64xf32, #tpu.memory_space<vmem>>, vector<1024x64xf32>
    %cst_12 = arith.constant dense<0.000000e+00> : vector<2x64xf32>
    %17 = tpu.matmul %15, %16, %cst_12 {dimension_numbers = #tpu.dot_dimension_numbers<[1], [0], [0], [1], [0, 0, 1, 1], [], []>, precision = #tpu.contract_precision<fp32>} : vector<2x1024xf32>, vector<1024x64xf32>, vector<2x64xf32> -> vector<2x64xf32>
    %c0_13 = arith.constant 0 : index
    %c0_14 = arith.constant 0 : index
    %c0_15 = arith.constant 0 : index
    %18 = vector.load %arg5[%c0_13, %c0_14, %c0_15] : memref<1x2x64xf32, #tpu.memory_space<vmem>>, vector<1x2x64xf32>
    %19 = vector.shape_cast %18 : vector<1x2x64xf32> to vector<2x64xf32>
    %20 = vector.shape_cast %17 : vector<2x64xf32> to vector<1x2x64xf32>
    tpu.vector_store %arg5[%c0_13, %c0_14, %c0_15], %20 {strides = array<i32>} : memref<1x2x64xf32, #tpu.memory_space<vmem>>, vector<1x2x64xf32>,
    return
  }
  func.func @transform_0(%arg0: i32) -> (i32, i32) {
    %c0_i32 = arith.constant 0 : i32
    %c0_i32_0 = arith.constant 0 : i32
    %c0_i32_1 = arith.constant 0 : i32
    return %c0_i32, %c0_i32_0 : i32, i32
  }
  func.func @transform_1(%arg0: i32) -> (i32, i32) {
    %c0_i32 = arith.constant 0 : i32
    %c0_i32_0 = arith.constant 0 : i32
    return %c0_i32, %arg0 : i32, i32
  }
  func.func @transform_2(%arg0: i32) -> (i32, i32) {
    %c0_i32 = arith.constant 0 : i32
    %c0_i32_0 = arith.constant 0 : i32
    return %c0_i32, %arg0 : i32, i32
  }
  func.func @transform_3(%arg0: i32) -> (i32, i32) {
    %c0_i32 = arith.constant 0 : i32
    %c0_i32_0 = arith.constant 0 : i32
    %c0_i32_1 = arith.constant 0 : i32
    return %c0_i32, %c0_i32_0 : i32, i32
  }
  func.func @transform_4(%arg0: i32) -> (i32, i32, i32) {
    %c0_i32 = arith.constant 0 : i32
    %c0_i32_0 = arith.constant 0 : i32
    %c0_i32_1 = arith.constant 0 : i32
    return %arg0, %c0_i32, %c0_i32_0 : i32, i32, i32
  }
}

</mosaic_0001>

<llo_original>
// kernel: tpu_custom_call.1
$region0: #{tpu_custom_call.1}
  #allocation0 [shape = 'u32[]', space=smem, size = 0x4, offset = 0x4, fixed_abs, tag = 'smem constant byte address 0x4 - core index']
  #allocation1 [shape = 'u32[144,128]{1,0:T(1,128)}', space=vmem, size = 0x12000, scoped, tag = 'internal scratch']
  %s0 = inlined_call_operand.hbm [shape: bf16[2,256], index: 0, kind: input, shape index: {}]
  %s1 = inlined_call_operand.hbm [shape: bf16[256,3072], index: 1, kind: input, shape index: {}]
  %s2 = inlined_call_operand.hbm [shape: f32[1,3072], index: 2, kind: input, shape index: {}]
  %s3 = inlined_call_operand.vmem [shape: f32[1024,64], index: 3, kind: input, shape index: {}]
  %s4 = inlined_call_operand.hbm [shape: f32[3,2,64], index: 4, kind: output, shape index: {}]
  %s5 = sld [smem:[#allocation0]]
  $region61: #{tpu_custom_call.1} parent=0
    _
  %s7 = ssub.s32 1, %s5
  %s8 = scalar_select 0, %s7, %s5
  $region1: #{tpu_custom_call.1} parent=0
    #allocation2 [shape = 'u8[1024]{0}', space=vmem, size = 0x400, scoped, tag = 'input window, operand 0, single buffered']
    #allocation3 [shape = 's32[2]{0}', space=sflag, size = 0x8, scoped, tag = 'scoped memory for tpu_custom_call.1']
    #allocation4 [shape = 's32[2]{0}', space=sflag, size = 0x8, scoped, tag = 'scoped memory for tpu_custom_call.1']
    #allocation5 [shape = 'u8[1048576]{0}', space=vmem, size = 0x100000, scoped, tag = 'input window, operand 1']
    #allocation6 [shape = 's32[2]{0}', space=sflag, size = 0x8, scoped, tag = 'scoped memory for tpu_custom_call.1']
    #allocation7 [shape = 'u8[8192]{0}', space=vmem, size = 0x2000, scoped, tag = 'input window, operand 2']
    #allocation8 [shape = 'u8[2048]{0}', space=vmem, size = 0x800, scoped, tag = 'output window, operand 0']
    %9 = vsyncpa [#allocation3], 0
    %10 = vsyncpa [#allocation6], 0
    %s11 = scalar_lea.sflag [#allocation6], 1
    %12 = vsyncpa %s11, 0
    %13 = vsyncpa [#allocation4], 0
    %s14 = scalar_lea.sflag [#allocation4], 1
    %15 = vsyncpa %s14, 0
    loop: start=0, step=1, limit=5
    $region2: #{tpu_custom_call.1} parent=1 // loop_pre_header
      _
    $region3: #{tpu_custom_call.1} parent=1 // loop_header
      %s17 = sphi 0, %s21
      %p18 = scmp.ge.s32.totalorder %s17, 5
      %s25 = sphi 0, %s25
      %s27 = sphi 0, %s25
      %s28 = sphi 0, %s27
      %s42 = sphi 0, %s28
      %s48 = sphi 0, %s50
      %s51 = sphi 0, %s48
      %s52 = sphi 0, %s51
      %s68 = sphi 0, %s52
      %s74 = sphi 0, %s76
      %s77 = sphi 0, %s74
      %s78 = sphi 0, %s77
      %s94 = sphi 0, %s78
      %s98 = sphi 0, %s98
      %s100 = sphi 0, %s98
      %s101 = sphi 0, %s100
      %s115 = sphi 0, %s101
      %s121 = sphi 0, %s123
      %s124 = sphi 0, %s121
      %s125 = sphi 0, %s124
      %s141 = sphi 0, %s125
    $region4: #{tpu_custom_call.1} parent=1 // loop_header_branch
      %20 = sbr.rel (%p18) target = $region8
    $region5: #{tpu_custom_call.1} parent=1 // loop_body
      %s22 = ssub.s32 %s17, 1
      %s23 = ssub.s32 %s17, 2
      %s24 = sadd.s32 %s17, 1
      %s26 = sadd.s32 %s25, 1
      %p29 = scmp.eq.s32.totalorder %s17, 2
      %p30 = scmp.ne.s32.totalorder %s25, %s27
      %p31 = scmp.eq.s32.totalorder %s17, 0
      %p32 = por %p30, %p31
      %p33 = scmp.ne.s32.totalorder %s25, %s27
      %p34 = scmp.eq.s32.totalorder %s22, 2
      %p35 = por %p33, %p34
      %p36 = scmp.ne.s32.totalorder %s27, %s28
      %p37 = scmp.eq.s32.totalorder %s22, 0
      %p38 = por %p36, %p37
      %p39 = scmp.ne.s32.totalorder %s27, %s28
      %p40 = scmp.eq.s32.totalorder %s23, 2
      %p41 = por %p39, %p40
      %p43 = scmp.ne.s32.totalorder %s28, %s42
      %p44 = scmp.eq.s32.totalorder %s23, 0
      %p45 = por %p43, %p44
      %s46 = ssub.s32 %s17, %s24
      %p47 = scmp.eq.s32.totalorder %s46, 0
      %s49 = sadd.s32 %s48, 1
      %s50 = scalar_select %p47, %s48, %s49
      %p53 = pneg %p47
      %p54 = scmp.eq.s32.totalorder %s17, 2
      %p55 = por %p53, %p54
      %p56 = scmp.ne.s32.totalorder %s48, %s51
      %p57 = scmp.eq.s32.totalorder %s17, 0
      %p58 = por %p56, %p57
      %p59 = scmp.ne.s32.totalorder %s48, %s51
      %p60 = scmp.eq.s32.totalorder %s22, 2
      %p61 = por %p59, %p60
      %p62 = scmp.ne.s32.totalorder %s51, %s52
      %p63 = scmp.eq.s32.totalorder %s22, 0
      %p64 = por %p62, %p63
      %p65 = scmp.ne.s32.totalorder %s51, %s52
      %p66 = scmp.eq.s32.totalorder %s23, 2
      %p67 = por %p65, %p66
      %p69 = scmp.ne.s32.totalorder %s52, %s68
      %p70 = scmp.eq.s32.totalorder %s23, 0
      %p71 = por %p69, %p70
      %s72 = ssub.s32 %s17, %s24
      %p73 = scmp.eq.s32.totalorder %s72, 0
      %s75 = sadd.s32 %s74, 1
      %s76 = scalar_select %p73, %s74, %s75
      %p79 = pneg %p73
      %p80 = scmp.eq.s32.totalorder %s17, 2
      %p81 = por %p79, %p80
      %p82 = scmp.ne.s32.totalorder %s74, %s77
      %p83 = scmp.eq.s32.totalorder %s17, 0
      %p84 = por %p82, %p83
      %p85 = scmp.ne.s32.totalorder %s74, %s77
      %p86 = scmp.eq.s32.totalorder %s22, 2
      %p87 = por %p85, %p86
      %p88 = scmp.ne.s32.totalorder %s77, %s78
      %p89 = scmp.eq.s32.totalorder %s22, 0
      %p90 = por %p88, %p89
      %p91 = scmp.ne.s32.totalorder %s77, %s78
      %p92 = scmp.eq.s32.totalorder %s23, 2
      %p93 = por %p91, %p92
      %p95 = scmp.ne.s32.totalorder %s78, %s94
      %p96 = scmp.eq.s32.totalorder %s23, 0
      %p97 = por %p95, %p96
      %s99 = sadd.s32 %s98, 1
      %p102 = scmp.eq.s32.totalorder %s17, 2
      %p103 = scmp.ne.s32.totalorder %s98, %s100
      %p104 = scmp.eq.s32.totalorder %s17, 0
      %p105 = por %p103, %p104
      %p106 = scmp.ne.s32.totalorder %s98, %s100
      %p107 = scmp.eq.s32.totalorder %s22, 2
      %p108 = por %p106, %p107
      %p109 = scmp.ne.s32.totalorder %s100, %s101
      %p110 = scmp.eq.s32.totalorder %s22, 0
      %p111 = por %p109, %p110
      %p112 = scmp.ne.s32.totalorder %s100, %s101
      %p113 = scmp.eq.s32.totalorder %s23, 2
      %p114 = por %p112, %p113
      %p116 = scmp.ne.s32.totalorder %s101, %s115
      %p117 = scmp.eq.s32.totalorder %s23, 0
      %p118 = por %p116, %p117
      %s119 = ssub.s32 %s17, %s24
      %p120 = scmp.eq.s32.totalorder %s119, 0
      %s122 = sadd.s32 %s121, 1
      %s123 = scalar_select %p120, %s121, %s122
      %p126 = pneg %p120
      %p127 = scmp.eq.s32.totalorder %s17, 2
      %p128 = por %p126, %p127
      %p129 = scmp.ne.s32.totalorder %s121, %s124
      %p130 = scmp.eq.s32.totalorder %s17, 0
      %p131 = por %p129, %p130
      %p132 = scmp.ne.s32.totalorder %s121, %s124
      %p133 = scmp.eq.s32.totalorder %s22, 2
      %p134 = por %p132, %p133
      %p135 = scmp.ne.s32.totalorder %s124, %s125
      %p136 = scmp.eq.s32.totalorder %s22, 0
      %p137 = por %p135, %p136
      %p138 = scmp.ne.s32.totalorder %s124, %s125
      %p139 = scmp.eq.s32.totalorder %s23, 2
      %p140 = por %p138, %p139
      %p142 = scmp.ne.s32.totalorder %s125, %s141
      %p143 = scmp.eq.s32.totalorder %s23, 0
      %p144 = por %p142, %p143
      %p145 = scmp.le.s32.totalorder 1, %s17
      %p146 = scmp.lt.s32.totalorder %s17, 4
      %p147 = pnand %p145, %p146
      %p148 = pneg %p147
      // Predicated region
      $region9: #{tpu_custom_call.1} parent=5 // pred_check
        _
      $region10: #{tpu_custom_call.1} parent=5 // pred_check_branch
        %150 = sbr.rel (%p147) target = $region12
      $region11: #{tpu_custom_call.1} parent=5 // pred_region
        %s151 = ssub.s32 %s17, 1
        // Predicated region
        $region13: #{tpu_custom_call.1} parent=11 // pred_check
          %p152 = pneg %p38
        $region14: #{tpu_custom_call.1} parent=11 // pred_check_branch
          %154 = sbr.rel (%p152) target = $region16
        $region15: #{tpu_custom_call.1} parent=11 // pred_region
          %s156 = ssub.s32 32, 32
          %157 = vsyncadd [#allocation3], %s156
          %s159 = sshll.u32 [#allocation2], 4
          %s160 = int_to_ptr.vmem [resolvable:$true] %s159
          %162 = dma.hbm_to_vmem [thread:$0]  %s0, 32, %s160, [#allocation3]
        $region16: #{tpu_custom_call.1} parent=11 // pred_fallthru
          _
        // Predicated region
        $region17: #{tpu_custom_call.1} parent=11 // pred_check
          %p163 = pneg %p111
        $region18: #{tpu_custom_call.1} parent=11 // pred_check_branch
          %165 = sbr.rel (%p163) target = $region20
        $region19: #{tpu_custom_call.1} parent=11 // pred_region
          _
        $region20: #{tpu_custom_call.1} parent=11 // pred_fallthru
          _
      $region12: #{tpu_custom_call.1} parent=5 // pred_fallthru
        _
      %p166 = scmp.lt.s32.totalorder %s17, 3
      // Predicated region
      $region21: #{tpu_custom_call.1} parent=5 // pred_check
        %p167 = pneg %p166
      $region22: #{tpu_custom_call.1} parent=5 // pred_check_branch
        %169 = sbr.rel (%p167) target = $region24
      $region23: #{tpu_custom_call.1} parent=5 // pred_region
        // Predicated region
        $region25: #{tpu_custom_call.1} parent=23 // pred_check
          %p170 = pneg %p58
        $region26: #{tpu_custom_call.1} parent=23 // pred_check_branch
          %172 = sbr.rel (%p170) target = $region28
        $region27: #{tpu_custom_call.1} parent=23 // pred_region
          %s173 = sand.u32 %s17, 1
          %s174 = scalar_lea.sflag [#allocation6], %s173
          %s175 = sand.u32 %s48, 1
          %s176 = smul.addr %s175, 1024
          %s177 = scalar_lea.vmem [#allocation5], %s176
          %s178 = smul.u32 8, %s17
          %s180 = ssub.s32 16384, 16384
          %181 = vsyncadd %s174, %s180
          %s182 = smul.addr %s178, 64
          %s183 = scalar_lea.hbm %s1, %s182
          %s184 = sshll.u32 %s177, 4
          %s185 = int_to_ptr.vmem [resolvable:$true] %s184
          %190 = dma.hbm_to_vmem [thread:$0]  %s183, 16384, %s185, %s174, 1536, 512, 32
        $region28: #{tpu_custom_call.1} parent=23 // pred_fallthru
          _
        // Predicated region
        $region29: #{tpu_custom_call.1} parent=23 // pred_check
          %p191 = pneg %p84
        $region30: #{tpu_custom_call.1} parent=23 // pred_check_branch
          %193 = sbr.rel (%p191) target = $region32
        $region31: #{tpu_custom_call.1} parent=23 // pred_region
          %s194 = sand.u32 %s17, 1
          %s195 = scalar_lea.sflag [#allocation6], %s194
          %s196 = sand.u32 %s74, 1
          %s197 = smul.addr %s196, 8
          %s198 = scalar_lea.vmem [#allocation7], %s197
          %s199 = smul.u32 8, %s17
          %s201 = ssub.s32 128, 128
          %202 = vsyncadd %s195, %s201
          %s203 = smul.addr %s199, 16
          %s204 = scalar_lea.hbm %s2, %s203
          %s206 = sshll.u32 %s198, 4
          %s207 = int_to_ptr.vmem [resolvable:$true] %s206
          %209 = dma.hbm_to_vmem [thread:$0]  %s204, 128, %s207, %s195
        $region32: #{tpu_custom_call.1} parent=23 // pred_fallthru
          _
      $region24: #{tpu_custom_call.1} parent=5 // pred_fallthru
        _
      %p210 = scmp.le.s32.totalorder 1, %s17
      %p211 = scmp.lt.s32.totalorder %s17, 4
      %p212 = pnand %p210, %p211
      %p213 = pneg %p212
      // Predicated region
      $region33: #{tpu_custom_call.1} parent=5 // pred_check
        _
      $region34: #{tpu_custom_call.1} parent=5 // pred_check_branch
        %215 = sbr.rel (%p212) target = $region36
      $region35: #{tpu_custom_call.1} parent=5 // pred_region
        %s216 = ssub.s32 %s17, 1
        // Predicated region
        $region37: #{tpu_custom_call.1} parent=35 // pred_check
          %p217 = pneg %p38
        $region38: #{tpu_custom_call.1} parent=35 // pred_check_branch
          %219 = sbr.rel (%p217) target = $region40
        $region39: #{tpu_custom_call.1} parent=35 // pred_region
          %220 = dma.done [#allocation3], 32
        $region40: #{tpu_custom_call.1} parent=35 // pred_fallthru
          _
        %s221 = sand.u32 %s22, 1
        %s222 = scalar_lea.sflag [#allocation6], %s221
        %s223 = sand.u32 %s51, 1
        %s224 = smul.addr %s223, 1024
        %s225 = scalar_lea.vmem [#allocation5], %s224
        // Predicated region
        $region41: #{tpu_custom_call.1} parent=35 // pred_check
          %p226 = pneg %p64
        $region42: #{tpu_custom_call.1} parent=35 // pred_check_branch
          %228 = sbr.rel (%p226) target = $region44
        $region43: #{tpu_custom_call.1} parent=35 // pred_region
          %229 = dma.done %s222, 16384
        $region44: #{tpu_custom_call.1} parent=35 // pred_fallthru
          _
        %s230 = sand.u32 %s22, 1
        %s231 = scalar_lea.sflag [#allocation6], %s230
        %s232 = sand.u32 %s77, 1
        %s233 = smul.addr %s232, 8
        %s234 = scalar_lea.vmem [#allocation7], %s233
        // Predicated region
        $region45: #{tpu_custom_call.1} parent=35 // pred_check
          %p235 = pneg %p90
        $region46: #{tpu_custom_call.1} parent=35 // pred_check_branch
          %237 = sbr.rel (%p235) target = $region48
        $region47: #{tpu_custom_call.1} parent=35 // pred_region
          %238 = dma.done %s231, 128
        $region48: #{tpu_custom_call.1} parent=35 // pred_fallthru
          _
        %p239 = pneg %p38
        %p240 = pneg %p35
        %s241 = sand.u32 %s22, 1
        %s242 = scalar_lea.sflag [#allocation6], %s241
        %s243 = sand.u32 %s51, 1
        %s244 = smul.addr %s243, 1024
        %s245 = scalar_lea.vmem [#allocation5], %s244
        %p246 = pneg %p64
        %p247 = pneg %p61
        %s248 = sand.u32 %s22, 1
        %s249 = scalar_lea.sflag [#allocation6], %s248
        %s250 = sand.u32 %s77, 1
        %s251 = smul.addr %s250, 8
        %s252 = scalar_lea.vmem [#allocation7], %s251
        %p253 = pneg %p90
        %p254 = pneg %p87
        %p255 = pneg %p111
        %p256 = pneg %p108
        %p257 = pneg %p137
        %p258 = pneg %p134
        %s259 = sand.u32 %s124, 1
        %s260 = scalar_lea.sflag [#allocation4], %s259
        %s261 = sand.u32 %s124, 1
        %s262 = smul.addr %s261, 2
        %s263 = scalar_lea.vmem [#allocation8], %s262
        %s264 = smul.u32 8, %s22
        %s265 = smul.u32 8, %s22
        %v266 = vld [vmem:[#allocation2] sm:$0x3]
        %v267 = vld [vmem:[%s225] sm:$0xff]
        %v268 = vld [vmem:[%s225 + $0x8] sm:$0xff]
        %v269 = vld [vmem:[%s225 + $0x10] sm:$0xff]
        %v270 = vld [vmem:[%s225 + $0x18] sm:$0xff]
        %v271 = vld [vmem:[%s225 + $0x20] sm:$0xff]
        %v272 = vld [vmem:[%s225 + $0x28] sm:$0xff]
        %v273 = vld [vmem:[%s225 + $0x30] sm:$0xff]
        %v274 = vld [vmem:[%s225 + $0x38] sm:$0xff]
        %v275 = vld [vmem:[%s225 + $0x40] sm:$0xff]
        %v276 = vld [vmem:[%s225 + $0x48] sm:$0xff]
        %v277 = vld [vmem:[%s225 + $0x50] sm:$0xff]
        %v278 = vld [vmem:[%s225 + $0x58] sm:$0xff]
        %v279 = vld [vmem:[%s225 + $0x60] sm:$0xff]
        %v280 = vld [vmem:[%s225 + $0x68] sm:$0xff]
        %v281 = vld [vmem:[%s225 + $0x70] sm:$0xff]
        %v282 = vld [vmem:[%s225 + $0x78] sm:$0xff]
        %v283 = vld [vmem:[%s225 + $0x80] sm:$0xff]
        %v284 = vld [vmem:[%s225 + $0x88] sm:$0xff]
        %v285 = vld [vmem:[%s225 + $0x90] sm:$0xff]
        %v286 = vld [vmem:[%s225 + $0x98] sm:$0xff]
        %v287 = vld [vmem:[%s225 + $0xa0] sm:$0xff]
        %v288 = vld [vmem:[%s225 + $0xa8] sm:$0xff]
        %v289 = vld [vmem:[%s225 + $0xb0] sm:$0xff]
        %v290 = vld [vmem:[%s225 + $0xb8] sm:$0xff]
        %v291 = vld [vmem:[%s225 + $0xc0] sm:$0xff]
        %v292 = vld [vmem:[%s225 + $0xc8] sm:$0xff]
        %v293 = vld [vmem:[%s225 + $0xd0] sm:$0xff]
        %v294 = vld [vmem:[%s225 + $0xd8] sm:$0xff]
        %v295 = vld [vmem:[%s225 + $0xe0] sm:$0xff]
        %v296 = vld [vmem:[%s225 + $0xe8] sm:$0xff]
        %v297 = vld [vmem:[%s225 + $0xf0] sm:$0xff]
        %v298 = vld [vmem:[%s225 + $0xf8] sm:$0xff]
        %v299 = vld [vmem:[%s225 + $0x100] sm:$0xff]
        %v300 = vld [vmem:[%s225 + $0x108] sm:$0xff]
        %v301 = vld [vmem:[%s225 + $0x110] sm:$0xff]
        %v302 = vld [vmem:[%s225 + $0x118] sm:$0xff]
        %v303 = vld [vmem:[%s225 + $0x120] sm:$0xff]
        %v304 = vld [vmem:[%s225 + $0x128] sm:$0xff]
        %v305 = vld [vmem:[%s225 + $0x130] sm:$0xff]
        %v306 = vld [vmem:[%s225 + $0x138] sm:$0xff]
        %v307 = vld [vmem:[%s225 + $0x140] sm:$0xff]
        %v308 = vld [vmem:[%s225 + $0x148] sm:$0xff]
        %v309 = vld [vmem:[%s225 + $0x150] sm:$0xff]
        %v310 = vld [vmem:[%s225 + $0x158] sm:$0xff]
        %v311 = vld [vmem:[%s225 + $0x160] sm:$0xff]
        %v312 = vld [vmem:[%s225 + $0x168] sm:$0xff]
        %v313 = vld [vmem:[%s225 + $0x170] sm:$0xff]
        %v314 = vld [vmem:[%s225 + $0x178] sm:$0xff]
        %v315 = vld [vmem:[%s225 + $0x180] sm:$0xff]
        %v316 = vld [vmem:[%s225 + $0x188] sm:$0xff]
        %v317 = vld [vmem:[%s225 + $0x190] sm:$0xff]
        %v318 = vld [vmem:[%s225 + $0x198] sm:$0xff]
        %v319 = vld [vmem:[%s225 + $0x1a0] sm:$0xff]
        %v320 = vld [vmem:[%s225 + $0x1a8] sm:$0xff]
        %v321 = vld [vmem:[%s225 + $0x1b0] sm:$0xff]
        %v322 = vld [vmem:[%s225 + $0x1b8] sm:$0xff]
        %v323 = vld [vmem:[%s225 + $0x1c0] sm:$0xff]
        %v324 = vld [vmem:[%s225 + $0x1c8] sm:$0xff]
        %v325 = vld [vmem:[%s225 + $0x1d0] sm:$0xff]
        %v326 = vld [vmem:[%s225 + $0x1d8] sm:$0xff]
        %v327 = vld [vmem:[%s225 + $0x1e0] sm:$0xff]
        %v328 = vld [vmem:[%s225 + $0x1e8] sm:$0xff]
        %v329 = vld [vmem:[%s225 + $0x1f0] sm:$0xff]
        %v330 = vld [vmem:[%s225 + $0x1f8] sm:$0xff]
        %v331 = vld [vmem:[%s225 + $0x200] sm:$0xff]
        %v332 = vld [vmem:[%s225 + $0x208] sm:$0xff]
        %v333 = vld [vmem:[%s225 + $0x210] sm:$0xff]
        %v334 = vld [vmem:[%s225 + $0x218] sm:$0xff]
        %v335 = vld [vmem:[%s225 + $0x220] sm:$0xff]
        %v336 = vld [vmem:[%s225 + $0x228] sm:$0xff]
        %v337 = vld [vmem:[%s225 + $0x230] sm:$0xff]
        %v338 = vld [vmem:[%s225 + $0x238] sm:$0xff]
        %v339 = vld [vmem:[%s225 + $0x240] sm:$0xff]
        %v340 = vld [vmem:[%s225 + $0x248] sm:$0xff]
        %v341 = vld [vmem:[%s225 + $0x250] sm:$0xff]
        %v342 = vld [vmem:[%s225 + $0x258] sm:$0xff]
        %v343 = vld [vmem:[%s225 + $0x260] sm:$0xff]
        %v344 = vld [vmem:[%s225 + $0x268] sm:$0xff]
        %v345 = vld [vmem:[%s225 + $0x270] sm:$0xff]
        %v346 = vld [vmem:[%s225 + $0x278] sm:$0xff]
        %v347 = vld [vmem:[%s225 + $0x280] sm:$0xff]
        %v348 = vld [vmem:[%s225 + $0x288] sm:$0xff]
        %v349 = vld [vmem:[%s225 + $0x290] sm:$0xff]
        %v350 = vld [vmem:[%s225 + $0x298] sm:$0xff]
        %v351 = vld [vmem:[%s225 + $0x2a0] sm:$0xff]
        %v352 = vld [vmem:[%s225 + $0x2a8] sm:$0xff]
        %v353 = vld [vmem:[%s225 + $0x2b0] sm:$0xff]
        %v354 = vld [vmem:[%s225 + $0x2b8] sm:$0xff]
        %v355 = vld [vmem:[%s225 + $0x2c0] sm:$0xff]
        %v356 = vld [vmem:[%s225 + $0x2c8] sm:$0xff]
        %v357 = vld [vmem:[%s225 + $0x2d0] sm:$0xff]
        %v358 = vld [vmem:[%s225 + $0x2d8] sm:$0xff]
        %v359 = vld [vmem:[%s225 + $0x2e0] sm:$0xff]
        %v360 = vld [vmem:[%s225 + $0x2e8] sm:$0xff]
        %v361 = vld [vmem:[%s225 + $0x2f0] sm:$0xff]
        %v362 = vld [vmem:[%s225 + $0x2f8] sm:$0xff]
        %v363 = vld [vmem:[%s225 + $0x300] sm:$0xff]
        %v364 = vld [vmem:[%s225 + $0x308] sm:$0xff]
        %v365 = vld [vmem:[%s225 + $0x310] sm:$0xff]
        %v366 = vld [vmem:[%s225 + $0x318] sm:$0xff]
        %v367 = vld [vmem:[%s225 + $0x320] sm:$0xff]
        %v368 = vld [vmem:[%s225 + $0x328] sm:$0xff]
        %v369 = vld [vmem:[%s225 + $0x330] sm:$0xff]
        %v370 = vld [vmem:[%s225 + $0x338] sm:$0xff]
        %v371 = vld [vmem:[%s225 + $0x340] sm:$0xff]
        %v372 = vld [vmem:[%s225 + $0x348] sm:$0xff]
        %v373 = vld [vmem:[%s225 + $0x350] sm:$0xff]
        %v374 = vld [vmem:[%s225 + $0x358] sm:$0xff]
        %v375 = vld [vmem:[%s225 + $0x360] sm:$0xff]
        %v376 = vld [vmem:[%s225 + $0x368] sm:$0xff]
        %v377 = vld [vmem:[%s225 + $0x370] sm:$0xff]
        %v378 = vld [vmem:[%s225 + $0x378] sm:$0xff]
        %v379 = vld [vmem:[%s225 + $0x380] sm:$0xff]
        %v380 = vld [vmem:[%s225 + $0x388] sm:$0xff]
        %v381 = vld [vmem:[%s225 + $0x390] sm:$0xff]
        %v382 = vld [vmem:[%s225 + $0x398] sm:$0xff]
        %v383 = vld [vmem:[%s225 + $0x3a0] sm:$0xff]
        %v384 = vld [vmem:[%s225 + $0x3a8] sm:$0xff]
        %v385 = vld [vmem:[%s225 + $0x3b0] sm:$0xff]
        %v386 = vld [vmem:[%s225 + $0x3b8] sm:$0xff]
        %v387 = vld [vmem:[%s225 + $0x3c0] sm:$0xff]
        %v388 = vld [vmem:[%s225 + $0x3c8] sm:$0xff]
        %v389 = vld [vmem:[%s225 + $0x3d0] sm:$0xff]
        %v390 = vld [vmem:[%s225 + $0x3d8] sm:$0xff]
        %v391 = vld [vmem:[%s225 + $0x3e0] sm:$0xff]
        %v392 = vld [vmem:[%s225 + $0x3e8] sm:$0xff]
        %v393 = vld [vmem:[%s225 + $0x3f0] sm:$0xff]
        %v394 = vld [vmem:[%s225 + $0x3f8] sm:$0xff]
        %v395 = vld [vmem:[%s234] sm:$0xff]
        %v397 = vlaneseq
        %v398 = vshrl.u32 %v397, 7
        %v399 = vsub.s32 0, %v398
        %v400 = vrot.slane %v395, %v399
        %v401 = vlaneseq
        %v402 = vshrl.u32 %v401, 7
        %v403 = vsub.s32 1, %v402
        %v404 = vrot.slane %v395, %v403
        %v405 = vlaneseq
        %v406 = vshrl.u32 %v405, 7
        %v407 = vsub.s32 2, %v406
        %v408 = vrot.slane %v395, %v407
        %v409 = vlaneseq
        %v410 = vshrl.u32 %v409, 7
        %v411 = vsub.s32 3, %v410
        %v412 = vrot.slane %v395, %v411
        %v413 = vlaneseq
        %v414 = vshrl.u32 %v413, 7
        %v415 = vsub.s32 4, %v414
        %v416 = vrot.slane %v395, %v415
        %v417 = vlaneseq
        %v418 = vshrl.u32 %v417, 7
        %v419 = vsub.s32 5, %v418
        %v420 = vrot.slane %v395, %v419
        %v421 = vlaneseq
        %v422 = vshrl.u32 %v421, 7
        %v423 = vsub.s32 6, %v422
        %v424 = vrot.slane %v395, %v423
        %v425 = vlaneseq
        %v426 = vshrl.u32 %v425, 7
        %v427 = vsub.s32 7, %v426
        %v428 = vrot.slane %v395, %v427
        %v439 = vunpack.c.l.s4 1966171168
        %v440 = vunpack.c.0.s8 %v439
        %v441 = vlaneseq
        %v442 = vshrl.u32 %v441, 7
        %v443 = vsub.s32 %v440, %v442
        %v444 = vrot.slane %v266, %v443
        %v445 = vcombine.high %v444, %v444
        %v447 = vunpack.c.l.s4 1966171168
        %v448 = vunpack.c.0.s8 %v447
        %v449 = vlaneseq
        %v450 = vshrl.u32 %v449, 7
        %v451 = vsub.s32 %v448, %v450
        %v452 = vrot.slane %v444, %v451
        %v454 = vunpack.c.l.s4 1966171168
        %v455 = vunpack.c.0.s8 %v454
        %v456 = vlaneseq
        %v457 = vshrl.u32 %v456, 7
        %v458 = vsub.s32 %v455, %v457
        %v459 = vrot.slane %v445, %v458
        %v590 = vunpack.c.l.b16 %v267
        %v591 = vunpack.c.h.b16 %v267
        %v592 = vunpack.c.l.b16 %v268
        %v593 = vunpack.c.h.b16 %v268
        %v594 = vunpack.c.l.b16 %v269
        %v595 = vunpack.c.h.b16 %v269
        %v596 = vunpack.c.l.b16 %v270
        %v597 = vunpack.c.h.b16 %v270
        %v598 = vunpack.c.l.b16 %v271
        %v599 = vunpack.c.h.b16 %v271
        %v600 = vunpack.c.l.b16 %v272
        %v601 = vunpack.c.h.b16 %v272
        %v602 = vunpack.c.l.b16 %v273
        %v603 = vunpack.c.h.b16 %v273
        %v604 = vunpack.c.l.b16 %v274
        %v605 = vunpack.c.h.b16 %v274
        %v606 = vunpack.c.l.b16 %v275
        %v607 = vunpack.c.h.b16 %v275
        %v608 = vunpack.c.l.b16 %v276
        %v609 = vunpack.c.h.b16 %v276
        %v610 = vunpack.c.l.b16 %v277
        %v611 = vunpack.c.h.b16 %v277
        %v612 = vunpack.c.l.b16 %v278
        %v613 = vunpack.c.h.b16 %v278
        %v614 = vunpack.c.l.b16 %v279
        %v615 = vunpack.c.h.b16 %v279
        %v616 = vunpack.c.l.b16 %v280
        %v617 = vunpack.c.h.b16 %v280
        %v618 = vunpack.c.l.b16 %v281
        %v619 = vunpack.c.h.b16 %v281
        %v620 = vunpack.c.l.b16 %v282
        %v621 = vunpack.c.h.b16 %v282
        %v622 = vunpack.c.l.b16 %v283
        %v623 = vunpack.c.h.b16 %v283
        %v624 = vunpack.c.l.b16 %v284
        %v625 = vunpack.c.h.b16 %v284
        %v626 = vunpack.c.l.b16 %v285
        %v627 = vunpack.c.h.b16 %v285
        %v628 = vunpack.c.l.b16 %v286
        %v629 = vunpack.c.h.b16 %v286
        %v630 = vunpack.c.l.b16 %v287
        %v631 = vunpack.c.h.b16 %v287
        %v632 = vunpack.c.l.b16 %v288
        %v633 = vunpack.c.h.b16 %v288
        %v634 = vunpack.c.l.b16 %v289
        %v635 = vunpack.c.h.b16 %v289
        %v636 = vunpack.c.l.b16 %v290
        %v637 = vunpack.c.h.b16 %v290
        %v638 = vunpack.c.l.b16 %v291
        %v639 = vunpack.c.h.b16 %v291
        %v640 = vunpack.c.l.b16 %v292
        %v641 = vunpack.c.h.b16 %v292
        %v642 = vunpack.c.l.b16 %v293
        %v643 = vunpack.c.h.b16 %v293
        %v644 = vunpack.c.l.b16 %v294
        %v645 = vunpack.c.h.b16 %v294
        %v646 = vunpack.c.l.b16 %v295
        %v647 = vunpack.c.h.b16 %v295
        %v648 = vunpack.c.l.b16 %v296
        %v649 = vunpack.c.h.b16 %v296
        %v650 = vunpack.c.l.b16 %v297
        %v651 = vunpack.c.h.b16 %v297
        %v652 = vunpack.c.l.b16 %v298
        %v653 = vunpack.c.h.b16 %v298
        %v654 = vunpack.c.l.b16 %v299
        %v655 = vunpack.c.h.b16 %v299
        %v656 = vunpack.c.l.b16 %v300
        %v657 = vunpack.c.h.b16 %v300
        %v658 = vunpack.c.l.b16 %v301
        %v659 = vunpack.c.h.b16 %v301
        %v660 = vunpack.c.l.b16 %v302
        %v661 = vunpack.c.h.b16 %v302
        %v662 = vunpack.c.l.b16 %v303
        %v663 = vunpack.c.h.b16 %v303
        %v664 = vunpack.c.l.b16 %v304
        %v665 = vunpack.c.h.b16 %v304
        %v666 = vunpack.c.l.b16 %v305
        %v667 = vunpack.c.h.b16 %v305
        %v668 = vunpack.c.l.b16 %v306
        %v669 = vunpack.c.h.b16 %v306
        %v670 = vunpack.c.l.b16 %v307
        %v671 = vunpack.c.h.b16 %v307
        %v672 = vunpack.c.l.b16 %v308
        %v673 = vunpack.c.h.b16 %v308
        %v674 = vunpack.c.l.b16 %v309
        %v675 = vunpack.c.h.b16 %v309
        %v676 = vunpack.c.l.b16 %v310
        %v677 = vunpack.c.h.b16 %v310
        %v678 = vunpack.c.l.b16 %v311
        %v679 = vunpack.c.h.b16 %v311
        %v680 = vunpack.c.l.b16 %v312
        %v681 = vunpack.c.h.b16 %v312
        %v682 = vunpack.c.l.b16 %v313
        %v683 = vunpack.c.h.b16 %v313
        %v684 = vunpack.c.l.b16 %v314
        %v685 = vunpack.c.h.b16 %v314
        %v686 = vunpack.c.l.b16 %v315
        %v687 = vunpack.c.h.b16 %v315
        %v688 = vunpack.c.l.b16 %v316
        %v689 = vunpack.c.h.b16 %v316
        %v690 = vunpack.c.l.b16 %v317
        %v691 = vunpack.c.h.b16 %v317
        %v692 = vunpack.c.l.b16 %v318
        %v693 = vunpack.c.h.b16 %v318
        %v694 = vunpack.c.l.b16 %v319
        %v695 = vunpack.c.h.b16 %v319
        %v696 = vunpack.c.l.b16 %v320
        %v697 = vunpack.c.h.b16 %v320
        %v698 = vunpack.c.l.b16 %v321
        %v699 = vunpack.c.h.b16 %v321
        %v700 = vunpack.c.l.b16 %v322
        %v701 = vunpack.c.h.b16 %v322
        %v702 = vunpack.c.l.b16 %v323
        %v703 = vunpack.c.h.b16 %v323
        %v704 = vunpack.c.l.b16 %v324
        %v705 = vunpack.c.h.b16 %v324
        %v706 = vunpack.c.l.b16 %v325
        %v707 = vunpack.c.h.b16 %v325
        %v708 = vunpack.c.l.b16 %v326
        %v709 = vunpack.c.h.b16 %v326
        %v710 = vunpack.c.l.b16 %v327
        %v711 = vunpack.c.h.b16 %v327
        %v712 = vunpack.c.l.b16 %v328
        %v713 = vunpack.c.h.b16 %v328
        %v714 = vunpack.c.l.b16 %v329
        %v715 = vunpack.c.h.b16 %v329
        %v716 = vunpack.c.l.b16 %v330
        %v717 = vunpack.c.h.b16 %v330
        %v718 = vunpack.c.l.b16 %v331
        %v719 = vunpack.c.h.b16 %v331
        %v720 = vunpack.c.l.b16 %v332
        %v721 = vunpack.c.h.b16 %v332
        %v722 = vunpack.c.l.b16 %v333
        %v723 = vunpack.c.h.b16 %v333
        %v724 = vunpack.c.l.b16 %v334
        %v725 = vunpack.c.h.b16 %v334
        %v726 = vunpack.c.l.b16 %v335
        %v727 = vunpack.c.h.b16 %v335
        %v728 = vunpack.c.l.b16 %v336
        %v729 = vunpack.c.h.b16 %v336
        %v730 = vunpack.c.l.b16 %v337
        %v731 = vunpack.c.h.b16 %v337
        %v732 = vunpack.c.l.b16 %v338
        %v733 = vunpack.c.h.b16 %v338
        %v734 = vunpack.c.l.b16 %v339
        %v735 = vunpack.c.h.b16 %v339
        %v736 = vunpack.c.l.b16 %v340
        %v737 = vunpack.c.h.b16 %v340
        %v738 = vunpack.c.l.b16 %v341
        %v739 = vunpack.c.h.b16 %v341
        %v740 = vunpack.c.l.b16 %v342
        %v741 = vunpack.c.h.b16 %v342
        %v742 = vunpack.c.l.b16 %v343
        %v743 = vunpack.c.h.b16 %v343
        %v744 = vunpack.c.l.b16 %v344
        %v745 = vunpack.c.h.b16 %v344
        %v746 = vunpack.c.l.b16 %v345
        %v747 = vunpack.c.h.b16 %v345
        %v748 = vunpack.c.l.b16 %v346
        %v749 = vunpack.c.h.b16 %v346
        %v750 = vunpack.c.l.b16 %v347
        %v751 = vunpack.c.h.b16 %v347
        %v752 = vunpack.c.l.b16 %v348
        %v753 = vunpack.c.h.b16 %v348
        %v754 = vunpack.c.l.b16 %v349
        %v755 = vunpack.c.h.b16 %v349
        %v756 = vunpack.c.l.b16 %v350
        %v757 = vunpack.c.h.b16 %v350
        %v758 = vunpack.c.l.b16 %v351
        %v759 = vunpack.c.h.b16 %v351
        %v760 = vunpack.c.l.b16 %v352
        %v761 = vunpack.c.h.b16 %v352
        %v762 = vunpack.c.l.b16 %v353
        %v763 = vunpack.c.h.b16 %v353
        %v764 = vunpack.c.l.b16 %v354
        %v765 = vunpack.c.h.b16 %v354
        %v766 = vunpack.c.l.b16 %v355
        %v767 = vunpack.c.h.b16 %v355
        %v768 = vunpack.c.l.b16 %v356
        %v769 = vunpack.c.h.b16 %v356
        %v770 = vunpack.c.l.b16 %v357
        %v771 = vunpack.c.h.b16 %v357
        %v772 = vunpack.c.l.b16 %v358
        %v773 = vunpack.c.h.b16 %v358
        %v774 = vunpack.c.l.b16 %v359
        %v775 = vunpack.c.h.b16 %v359
        %v776 = vunpack.c.l.b16 %v360
        %v777 = vunpack.c.h.b16 %v360
        %v778 = vunpack.c.l.b16 %v361
        %v779 = vunpack.c.h.b16 %v361
        %v780 = vunpack.c.l.b16 %v362
        %v781 = vunpack.c.h.b16 %v362
        %v782 = vunpack.c.l.b16 %v363
        %v783 = vunpack.c.h.b16 %v363
        %v784 = vunpack.c.l.b16 %v364
        %v785 = vunpack.c.h.b16 %v364
        %v786 = vunpack.c.l.b16 %v365
        %v787 = vunpack.c.h.b16 %v365
        %v788 = vunpack.c.l.b16 %v366
        %v789 = vunpack.c.h.b16 %v366
        %v790 = vunpack.c.l.b16 %v367
        %v791 = vunpack.c.h.b16 %v367
        %v792 = vunpack.c.l.b16 %v368
        %v793 = vunpack.c.h.b16 %v368
        %v794 = vunpack.c.l.b16 %v369
        %v795 = vunpack.c.h.b16 %v369
        %v796 = vunpack.c.l.b16 %v370
        %v797 = vunpack.c.h.b16 %v370
        %v798 = vunpack.c.l.b16 %v371
        %v799 = vunpack.c.h.b16 %v371
        %v800 = vunpack.c.l.b16 %v372
        %v801 = vunpack.c.h.b16 %v372
        %v802 = vunpack.c.l.b16 %v373
        %v803 = vunpack.c.h.b16 %v373
        %v804 = vunpack.c.l.b16 %v374
        %v805 = vunpack.c.h.b16 %v374
        %v806 = vunpack.c.l.b16 %v375
        %v807 = vunpack.c.h.b16 %v375
        %v808 = vunpack.c.l.b16 %v376
        %v809 = vunpack.c.h.b16 %v376
        %v810 = vunpack.c.l.b16 %v377
        %v811 = vunpack.c.h.b16 %v377
        %v812 = vunpack.c.l.b16 %v378
        %v813 = vunpack.c.h.b16 %v378
        %v814 = vunpack.c.l.b16 %v379
        %v815 = vunpack.c.h.b16 %v379
        %v816 = vunpack.c.l.b16 %v380
        %v817 = vunpack.c.h.b16 %v380
        %v818 = vunpack.c.l.b16 %v381
        %v819 = vunpack.c.h.b16 %v381
        %v820 = vunpack.c.l.b16 %v382
        %v821 = vunpack.c.h.b16 %v382
        %v822 = vunpack.c.l.b16 %v383
        %v823 = vunpack.c.h.b16 %v383
        %v824 = vunpack.c.l.b16 %v384
        %v825 = vunpack.c.h.b16 %v384
        %v826 = vunpack.c.l.b16 %v385
        %v827 = vunpack.c.h.b16 %v385
        %v828 = vunpack.c.l.b16 %v386
        %v829 = vunpack.c.h.b16 %v386
        %v830 = vunpack.c.l.b16 %v387
        %v831 = vunpack.c.h.b16 %v387
        %v832 = vunpack.c.l.b16 %v388
        %v833 = vunpack.c.h.b16 %v388
        %v834 = vunpack.c.l.b16 %v389
        %v835 = vunpack.c.h.b16 %v389
        %v836 = vunpack.c.l.b16 %v390
        %v837 = vunpack.c.h.b16 %v390
        %v838 = vunpack.c.l.b16 %v391
        %v839 = vunpack.c.h.b16 %v391
        %v840 = vunpack.c.l.b16 %v392
        %v841 = vunpack.c.h.b16 %v392
        %v842 = vunpack.c.l.b16 %v393
        %v843 = vunpack.c.h.b16 %v393
        %v844 = vunpack.c.l.b16 %v394
        %v845 = vunpack.c.h.b16 %v394
        %v846 = vpack.c.b16 %v598, %v590
        %v847 = vpack.c.b16 %v599, %v591
        %v848 = vpack.c.b16 %v600, %v592
        %v849 = vpack.c.b16 %v601, %v593
        %v850 = vpack.c.b16 %v602, %v594
        %v851 = vpack.c.b16 %v603, %v595
        %v852 = vpack.c.b16 %v604, %v596
        %v853 = vpack.c.b16 %v605, %v597
        %v854 = vpack.c.b16 %v614, %v606
        %v855 = vpack.c.b16 %v615, %v607
        %v856 = vpack.c.b16 %v616, %v608
        %v857 = vpack.c.b16 %v617, %v609
        %v858 = vpack.c.b16 %v618, %v610
        %v859 = vpack.c.b16 %v619, %v611
        %v860 = vpack.c.b16 %v620, %v612
        %v861 = vpack.c.b16 %v621, %v613
        %v862 = vpack.c.b16 %v630, %v622
        %v863 = vpack.c.b16 %v631, %v623
        %v864 = vpack.c.b16 %v632, %v624
        %v865 = vpack.c.b16 %v633, %v625
        %v866 = vpack.c.b16 %v634, %v626
        %v867 = vpack.c.b16 %v635, %v627
        %v868 = vpack.c.b16 %v636, %v628
        %v869 = vpack.c.b16 %v637, %v629
        %v870 = vpack.c.b16 %v646, %v638
        %v871 = vpack.c.b16 %v647, %v639
        %v872 = vpack.c.b16 %v648, %v640
        %v873 = vpack.c.b16 %v649, %v641
        %v874 = vpack.c.b16 %v650, %v642
        %v875 = vpack.c.b16 %v651, %v643
        %v876 = vpack.c.b16 %v652, %v644
        %v877 = vpack.c.b16 %v653, %v645
        %v878 = vpack.c.b16 %v662, %v654
        %v879 = vpack.c.b16 %v663, %v655
        %v880 = vpack.c.b16 %v664, %v656
        %v881 = vpack.c.b16 %v665, %v657
        %v882 = vpack.c.b16 %v666, %v658
        %v883 = vpack.c.b16 %v667, %v659
        %v884 = vpack.c.b16 %v668, %v660
        %v885 = vpack.c.b16 %v669, %v661
        %v886 = vpack.c.b16 %v678, %v670
        %v887 = vpack.c.b16 %v679, %v671
        %v888 = vpack.c.b16 %v680, %v672
        %v889 = vpack.c.b16 %v681, %v673
        %v890 = vpack.c.b16 %v682, %v674
        %v891 = vpack.c.b16 %v683, %v675
        %v892 = vpack.c.b16 %v684, %v676
        %v893 = vpack.c.b16 %v685, %v677
        %v894 = vpack.c.b16 %v694, %v686
        %v895 = vpack.c.b16 %v695, %v687
        %v896 = vpack.c.b16 %v696, %v688
        %v897 = vpack.c.b16 %v697, %v689
        %v898 = vpack.c.b16 %v698, %v690
        %v899 = vpack.c.b16 %v699, %v691
        %v900 = vpack.c.b16 %v700, %v692
        %v901 = vpack.c.b16 %v701, %v693
        %v902 = vpack.c.b16 %v710, %v702
        %v903 = vpack.c.b16 %v711, %v703
        %v904 = vpack.c.b16 %v712, %v704
        %v905 = vpack.c.b16 %v713, %v705
        %v906 = vpack.c.b16 %v714, %v706
        %v907 = vpack.c.b16 %v715, %v707
        %v908 = vpack.c.b16 %v716, %v708
        %v909 = vpack.c.b16 %v717, %v709
        %v910 = vpack.c.b16 %v726, %v718
        %v911 = vpack.c.b16 %v727, %v719
        %v912 = vpack.c.b16 %v728, %v720
        %v913 = vpack.c.b16 %v729, %v721
        %v914 = vpack.c.b16 %v730, %v722
        %v915 = vpack.c.b16 %v731, %v723
        %v916 = vpack.c.b16 %v732, %v724
        %v917 = vpack.c.b16 %v733, %v725
        %v918 = vpack.c.b16 %v742, %v734
        %v919 = vpack.c.b16 %v743, %v735
        %v920 = vpack.c.b16 %v744, %v736
        %v921 = vpack.c.b16 %v745, %v737
        %v922 = vpack.c.b16 %v746, %v738
        %v923 = vpack.c.b16 %v747, %v739
        %v924 = vpack.c.b16 %v748, %v740
        %v925 = vpack.c.b16 %v749, %v741
        %v926 = vpack.c.b16 %v758, %v750
        %v927 = vpack.c.b16 %v759, %v751
        %v928 = vpack.c.b16 %v760, %v752
        %v929 = vpack.c.b16 %v761, %v753
        %v930 = vpack.c.b16 %v762, %v754
        %v931 = vpack.c.b16 %v763, %v755
        %v932 = vpack.c.b16 %v764, %v756
        %v933 = vpack.c.b16 %v765, %v757
        %v934 = vpack.c.b16 %v774, %v766
        %v935 = vpack.c.b16 %v775, %v767
        %v936 = vpack.c.b16 %v776, %v768
        %v937 = vpack.c.b16 %v777, %v769
        %v938 = vpack.c.b16 %v778, %v770
        %v939 = vpack.c.b16 %v779, %v771
        %v940 = vpack.c.b16 %v780, %v772
        %v941 = vpack.c.b16 %v781, %v773
        %v942 = vpack.c.b16 %v790, %v782
        %v943 = vpack.c.b16 %v791, %v783
        %v944 = vpack.c.b16 %v792, %v784
        %v945 = vpack.c.b16 %v793, %v785
        %v946 = vpack.c.b16 %v794, %v786
        %v947 = vpack.c.b16 %v795, %v787
        %v948 = vpack.c.b16 %v796, %v788
        %v949 = vpack.c.b16 %v797, %v789
        %v950 = vpack.c.b16 %v806, %v798
        %v951 = vpack.c.b16 %v807, %v799
        %v952 = vpack.c.b16 %v808, %v800
        %v953 = vpack.c.b16 %v809, %v801
        %v954 = vpack.c.b16 %v810, %v802
        %v955 = vpack.c.b16 %v811, %v803
        %v956 = vpack.c.b16 %v812, %v804
        %v957 = vpack.c.b16 %v813, %v805
        %v958 = vpack.c.b16 %v822, %v814
        %v959 = vpack.c.b16 %v823, %v815
        %v960 = vpack.c.b16 %v824, %v816
        %v961 = vpack.c.b16 %v825, %v817
        %v962 = vpack.c.b16 %v826, %v818
        %v963 = vpack.c.b16 %v827, %v819
        %v964 = vpack.c.b16 %v828, %v820
        %v965 = vpack.c.b16 %v829, %v821
        %v966 = vpack.c.b16 %v838, %v830
        %v967 = vpack.c.b16 %v839, %v831
        %v968 = vpack.c.b16 %v840, %v832
        %v969 = vpack.c.b16 %v841, %v833
        %v970 = vpack.c.b16 %v842, %v834
        %v971 = vpack.c.b16 %v843, %v835
        %v972 = vpack.c.b16 %v844, %v836
        %v973 = vpack.c.b16 %v845, %v837
        %1102 = vmatprep.subr.bf16.mxu0 %v847
        %1103 = vmatpush1.bf16.msra.mxu0 %v846
        %1104 = vmatprep.subr.bf16.mxu0 %v855
        %1105 = vmatpush1.bf16.msra.mxu0 %v854
        %1106 = vmatprep.subr.bf16.mxu0 %v863
        %1107 = vmatpush1.bf16.msra.mxu0 %v862
        %1108 = vmatprep.subr.bf16.mxu0 %v871
        %1109 = vmatpush1.bf16.msra.mxu0 %v870
        %1110 = vmatprep.subr.bf16.mxu0 %v879
        %1111 = vmatpush1.bf16.msra.mxu0 %v878
        %1112 = vmatprep.subr.bf16.mxu0 %v887
        %1113 = vmatpush1.bf16.msra.mxu0 %v886
        %1114 = vmatprep.subr.bf16.mxu0 %v895
        %1115 = vmatpush1.bf16.msra.mxu0 %v894
        %1116 = vmatprep.subr.bf16.mxu0 %v903
        %1117 = vmatpush1.bf16.msra.mxu0 %v902
        %1118 = vmatprep.subr.bf16.mxu0 %v911
        %1119 = vmatpush1.bf16.msra.mxu0 %v910
        %1120 = vmatprep.subr.bf16.mxu0 %v919
        %1121 = vmatpush1.bf16.msra.mxu0 %v918
        %1122 = vmatprep.subr.bf16.mxu0 %v927
        %1123 = vmatpush1.bf16.msra.mxu0 %v926
        %1124 = vmatprep.subr.bf16.mxu0 %v935
        %1125 = vmatpush1.bf16.msra.mxu0 %v934
        %1126 = vmatprep.subr.bf16.mxu0 %v943
        %1127 = vmatpush1.bf16.msra.mxu0 %v942
        %1128 = vmatprep.subr.bf16.mxu0 %v951
        %1129 = vmatpush1.bf16.msra.mxu0 %v950
        %1130 = vmatprep.subr.bf16.mxu0 %v959
        %1131 = vmatpush1.bf16.msra.mxu0 %v958
        %1132 = vmatprep.subr.bf16.mxu0 %v967
        %1133 = vmatpush1.bf16.msra.mxu0 %v966
        %1134 = vmatprep.mubr.bf16.mxu0 %v459
        %1135 = vmatmul.mubr.bf16.gmra.mrb[0].mxu0 %v452
        %v1136 = vpop.f32.mrb[0].mxu0
        %v1137 = vadd.f32 %v400, %v1136
        %v1138 = vpop.f32.mrb[0].mxu0
        %v1139 = vadd.f32 %v404, %v1138
        %v1140 = vpop.f32.mrb[0].mxu0
        %v1141 = vpop.f32.mrb[0].mxu0
        %1142 = vdwg.mxu0
        %1143 = vmatprep.subr.bf16.mxu0 %v849
        %1144 = vmatpush1.bf16.msra.mxu0 %v848
        %1145 = vmatprep.subr.bf16.mxu0 %v857
        %1146 = vmatpush1.bf16.msra.mxu0 %v856
        %1147 = vmatprep.subr.bf16.mxu0 %v865
        %1148 = vmatpush1.bf16.msra.mxu0 %v864
        %1149 = vmatprep.subr.bf16.mxu0 %v873
        %1150 = vmatpush1.bf16.msra.mxu0 %v872
        %1151 = vmatprep.subr.bf16.mxu0 %v881
        %1152 = vmatpush1.bf16.msra.mxu0 %v880
        %1153 = vmatprep.subr.bf16.mxu0 %v889
        %1154 = vmatpush1.bf16.msra.mxu0 %v888
        %1155 = vmatprep.subr.bf16.mxu0 %v897
        %1156 = vmatpush1.bf16.msra.mxu0 %v896
        %1157 = vmatprep.subr.bf16.mxu0 %v905
        %1158 = vmatpush1.bf16.msra.mxu0 %v904
        %1159 = vmatprep.subr.bf16.mxu0 %v913
        %1160 = vmatpush1.bf16.msra.mxu0 %v912
        %1161 = vmatprep.subr.bf16.mxu0 %v921
        %1162 = vmatpush1.bf16.msra.mxu0 %v920
        %1163 = vmatprep.subr.bf16.mxu0 %v929
        %1164 = vmatpush1.bf16.msra.mxu0 %v928
        %1165 = vmatprep.subr.bf16.mxu0 %v937
        %1166 = vmatpush1.bf16.msra.mxu0 %v936
        %1167 = vmatprep.subr.bf16.mxu0 %v945
        %1168 = vmatpush1.bf16.msra.mxu0 %v944
        %1169 = vmatprep.subr.bf16.mxu0 %v953
        %1170 = vmatpush1.bf16.msra.mxu0 %v952
        %1171 = vmatprep.subr.bf16.mxu0 %v961
        %1172 = vmatpush1.bf16.msra.mxu0 %v960
        %1173 = vmatprep.subr.bf16.mxu0 %v969
        %1174 = vmatpush1.bf16.msra.mxu0 %v968
        %1175 = vmatprep.mubr.bf16.mxu0 %v459
        %1176 = vmatmul.mubr.bf16.gmra.mrb[0].mxu0 %v452
        %v1177 = vpop.f32.mrb[0].mxu0
        %v1178 = vadd.f32 %v408, %v1177
        %v1179 = vpop.f32.mrb[0].mxu0
        %v1180 = vadd.f32 %v412, %v1179
        %v1181 = vpop.f32.mrb[0].mxu0
        %v1182 = vpop.f32.mrb[0].mxu0
        %1183 = vdwg.mxu0
        %1184 = vmatprep.subr.bf16.mxu0 %v851
        %1185 = vmatpush1.bf16.msra.mxu0 %v850
        %1186 = vmatprep.subr.bf16.mxu0 %v859
        %1187 = vmatpush1.bf16.msra.mxu0 %v858
        %1188 = vmatprep.subr.bf16.mxu0 %v867
        %1189 = vmatpush1.bf16.msra.mxu0 %v866
        %1190 = vmatprep.subr.bf16.mxu0 %v875
        %1191 = vmatpush1.bf16.msra.mxu0 %v874
        %1192 = vmatprep.subr.bf16.mxu0 %v883
        %1193 = vmatpush1.bf16.msra.mxu0 %v882
        %1194 = vmatprep.subr.bf16.mxu0 %v891
        %1195 = vmatpush1.bf16.msra.mxu0 %v890
        %1196 = vmatprep.subr.bf16.mxu0 %v899
        %1197 = vmatpush1.bf16.msra.mxu0 %v898
        %1198 = vmatprep.subr.bf16.mxu0 %v907
        %1199 = vmatpush1.bf16.msra.mxu0 %v906
        %1200 = vmatprep.subr.bf16.mxu0 %v915
        %1201 = vmatpush1.bf16.msra.mxu0 %v914
        %1202 = vmatprep.subr.bf16.mxu0 %v923
        %1203 = vmatpush1.bf16.msra.mxu0 %v922
        %1204 = vmatprep.subr.bf16.mxu0 %v931
        %1205 = vmatpush1.bf16.msra.mxu0 %v930
        %1206 = vmatprep.subr.bf16.mxu0 %v939
        %1207 = vmatpush1.bf16.msra.mxu0 %v938
        %1208 = vmatprep.subr.bf16.mxu0 %v947
        %1209 = vmatpush1.bf16.msra.mxu0 %v946
        %1210 = vmatprep.subr.bf16.mxu0 %v955
        %1211 = vmatpush1.bf16.msra.mxu0 %v954
        %1212 = vmatprep.subr.bf16.mxu0 %v963
        %1213 = vmatpush1.bf16.msra.mxu0 %v962
        %1214 = vmatprep.subr.bf16.mxu0 %v971
        %1215 = vmatpush1.bf16.msra.mxu0 %v970
        %1216 = vmatprep.mubr.bf16.mxu0 %v459
        %1217 = vmatmul.mubr.bf16.gmra.mrb[0].mxu0 %v452
        %v1218 = vpop.f32.mrb[0].mxu0
        %v1219 = vadd.f32 %v416, %v1218
        %v1220 = vpop.f32.mrb[0].mxu0
        %v1221 = vadd.f32 %v420, %v1220
        %v1222 = vpop.f32.mrb[0].mxu0
        %v1223 = vpop.f32.mrb[0].mxu0
        %1224 = vdwg.mxu0
        %1225 = vmatprep.subr.bf16.mxu0 %v853
        %1226 = vmatpush1.bf16.msra.mxu0 %v852
        %1227 = vmatprep.subr.bf16.mxu0 %v861
        %1228 = vmatpush1.bf16.msra.mxu0 %v860
        %1229 = vmatprep.subr.bf16.mxu0 %v869
        %1230 = vmatpush1.bf16.msra.mxu0 %v868
        %1231 = vmatprep.subr.bf16.mxu0 %v877
        %1232 = vmatpush1.bf16.msra.mxu0 %v876
        %1233 = vmatprep.subr.bf16.mxu0 %v885
        %1234 = vmatpush1.bf16.msra.mxu0 %v884
        %1235 = vmatprep.subr.bf16.mxu0 %v893
        %1236 = vmatpush1.bf16.msra.mxu0 %v892
        %1237 = vmatprep.subr.bf16.mxu0 %v901
        %1238 = vmatpush1.bf16.msra.mxu0 %v900
        %1239 = vmatprep.subr.bf16.mxu0 %v909
        %1240 = vmatpush1.bf16.msra.mxu0 %v908
        %1241 = vmatprep.subr.bf16.mxu0 %v917
        %1242 = vmatpush1.bf16.msra.mxu0 %v916
        %1243 = vmatprep.subr.bf16.mxu0 %v925
        %1244 = vmatpush1.bf16.msra.mxu0 %v924
        %1245 = vmatprep.subr.bf16.mxu0 %v933
        %1246 = vmatpush1.bf16.msra.mxu0 %v932
        %1247 = vmatprep.subr.bf16.mxu0 %v941
        %1248 = vmatpush1.bf16.msra.mxu0 %v940
        %1249 = vmatprep.subr.bf16.mxu0 %v949
        %1250 = vmatpush1.bf16.msra.mxu0 %v948
        %1251 = vmatprep.subr.bf16.mxu0 %v957
        %1252 = vmatpush1.bf16.msra.mxu0 %v956
        %1253 = vmatprep.subr.bf16.mxu0 %v965
        %1254 = vmatpush1.bf16.msra.mxu0 %v964
        %1255 = vmatprep.subr.bf16.mxu0 %v973
        %1256 = vmatpush1.bf16.msra.mxu0 %v972
        %1257 = vmatprep.mubr.bf16.mxu0 %v459
        %1258 = vmatmul.mubr.bf16.gmra.mrb[0].mxu0 %v452
        %v1259 = vpop.f32.mrb[0].mxu0
        %v1260 = vadd.f32 %v424, %v1259
        %v1261 = vpop.f32.mrb[0].mxu0
        %v1262 = vadd.f32 %v428, %v1261
        %v1263 = vpop.f32.mrb[0].mxu0
        %v1264 = vpop.f32.mrb[0].mxu0
        %1265 = vdwg.mxu0
        %v1266 = vsub.f32 %v1137, -1.0
        %v1267 = vsub.f32 %v1139, -1.0
        %v1268 = vsub.f32 %v1178, -1.0
        %v1269 = vsub.f32 %v1180, -1.0
        %v1270 = vsub.f32 %v1219, -1.0
        %v1271 = vsub.f32 %v1221, -1.0
        %v1272 = vsub.f32 %v1260, -1.0
        %v1273 = vsub.f32 %v1262, -1.0
        %v1274 = vmul.f32 %v1266, 127.5
        %v1275 = vmul.f32 %v1267, 127.5
        %v1276 = vmul.f32 %v1268, 127.5
        %v1277 = vmul.f32 %v1269, 127.5
        %v1278 = vmul.f32 %v1270, 127.5
        %v1279 = vmul.f32 %v1271, 127.5
        %v1280 = vmul.f32 %v1272, 127.5
        %v1281 = vmul.f32 %v1273, 127.5
        %v1282 = vadd.f32 %v1274, 0.5
        %v1283 = vadd.f32 %v1275, 0.5
        %v1284 = vadd.f32 %v1276, 0.5
        %v1285 = vadd.f32 %v1277, 0.5
        %v1286 = vadd.f32 %v1278, 0.5
        %v1287 = vadd.f32 %v1279, 0.5
        %v1288 = vadd.f32 %v1280, 0.5
        %v1289 = vadd.f32 %v1281, 0.5
        %v1290 = vmax.f32 %v1282, 0.0
        %v1291 = vmax.f32 %v1283, 0.0
        %v1292 = vmax.f32 %v1284, 0.0
        %v1293 = vmax.f32 %v1285, 0.0
        %v1294 = vmax.f32 %v1286, 0.0
        %v1295 = vmax.f32 %v1287, 0.0
        %v1296 = vmax.f32 %v1288, 0.0
        %v1297 = vmax.f32 %v1289, 0.0
        %v1298 = vmin.f32 %v1290, 255.0
        %v1299 = vmin.f32 %v1291, 255.0
        %v1300 = vmin.f32 %v1292, 255.0
        %v1301 = vmin.f32 %v1293, 255.0
        %v1302 = vmin.f32 %v1294, 255.0
        %v1303 = vmin.f32 %v1295, 255.0
        %v1304 = vmin.f32 %v1296, 255.0
        %v1305 = vmin.f32 %v1297, 255.0
        %v1306 = vld [vmem:[%s3] sm:$0xff]
        %v1307 = vld [vmem:[%s3 + $0x8] sm:$0xff]
        %v1308 = vld [vmem:[%s3 + $0x10] sm:$0xff]
        %v1309 = vld [vmem:[%s3 + $0x18] sm:$0xff]
        %v1310 = vld [vmem:[%s3 + $0x20] sm:$0xff]
        %v1311 = vld [vmem:[%s3 + $0x28] sm:$0xff]
        %v1312 = vld [vmem:[%s3 + $0x30] sm:$0xff]
        %v1313 = vld [vmem:[%s3 + $0x38] sm:$0xff]
        %v1314 = vld [vmem:[%s3 + $0x40] sm:$0xff]
        %v1315 = vld [vmem:[%s3 + $0x48] sm:$0xff]
        %v1316 = vld [vmem:[%s3 + $0x50] sm:$0xff]
        %v1317 = vld [vmem:[%s3 + $0x58] sm:$0xff]
        %v1318 = vld [vmem:[%s3 + $0x60] sm:$0xff]
        %v1319 = vld [vmem:[%s3 + $0x68] sm:$0xff]
        %v1320 = vld [vmem:[%s3 + $0x70] sm:$0xff]
        %v1321 = vld [vmem:[%s3 + $0x78] sm:$0xff]
        %v1322 = vld [vmem:[%s3 + $0x80] sm:$0xff]
        %v1323 = vld [vmem:[%s3 + $0x88] sm:$0xff]
        %v1324 = vld [vmem:[%s3 + $0x90] sm:$0xff]
        %v1325 = vld [vmem:[%s3 + $0x98] sm:$0xff]
        %v1326 = vld [vmem:[%s3 + $0xa0] sm:$0xff]
        %v1327 = vld [vmem:[%s3 + $0xa8] sm:$0xff]
        %v1328 = vld [vmem:[%s3 + $0xb0] sm:$0xff]
        %v1329 = vld [vmem:[%s3 + $0xb8] sm:$0xff]
        %v1330 = vld [vmem:[%s3 + $0xc0] sm:$0xff]
        %v1331 = vld [vmem:[%s3 + $0xc8] sm:$0xff]
        %v1332 = vld [vmem:[%s3 + $0xd0] sm:$0xff]
        %v1333 = vld [vmem:[%s3 + $0xd8] sm:$0xff]
        %v1334 = vld [vmem:[%s3 + $0xe0] sm:$0xff]
        %v1335 = vld [vmem:[%s3 + $0xe8] sm:$0xff]
        %v1336 = vld [vmem:[%s3 + $0xf0] sm:$0xff]
        %v1337 = vld [vmem:[%s3 + $0xf8] sm:$0xff]
        %v1338 = vld [vmem:[%s3 + $0x100] sm:$0xff]
        %v1339 = vld [vmem:[%s3 + $0x108] sm:$0xff]
        %v1340 = vld [vmem:[%s3 + $0x110] sm:$0xff]
        %v1341 = vld [vmem:[%s3 + $0x118] sm:$0xff]
        %v1342 = vld [vmem:[%s3 + $0x120] sm:$0xff]
        %v1343 = vld [vmem:[%s3 + $0x128] sm:$0xff]
        %v1344 = vld [vmem:[%s3 + $0x130] sm:$0xff]
        %v1345 = vld [vmem:[%s3 + $0x138] sm:$0xff]
        %v1346 = vld [vmem:[%s3 + $0x140] sm:$0xff]
        %v1347 = vld [vmem:[%s3 + $0x148] sm:$0xff]
        %v1348 = vld [vmem:[%s3 + $0x150] sm:$0xff]
        %v1349 = vld [vmem:[%s3 + $0x158] sm:$0xff]
        %v1350 = vld [vmem:[%s3 + $0x160] sm:$0xff]
        %v1351 = vld [vmem:[%s3 + $0x168] sm:$0xff]
        %v1352 = vld [vmem:[%s3 + $0x170] sm:$0xff]
        %v1353 = vld [vmem:[%s3 + $0x178] sm:$0xff]
        %v1354 = vld [vmem:[%s3 + $0x180] sm:$0xff]
        %v1355 = vld [vmem:[%s3 + $0x188] sm:$0xff]
        %v1356 = vld [vmem:[%s3 + $0x190] sm:$0xff]
        %v1357 = vld [vmem:[%s3 + $0x198] sm:$0xff]
        %v1358 = vld [vmem:[%s3 + $0x1a0] sm:$0xff]
        %v1359 = vld [vmem:[%s3 + $0x1a8] sm:$0xff]
        %v1360 = vld [vmem:[%s3 + $0x1b0] sm:$0xff]
        %v1361 = vld [vmem:[%s3 + $0x1b8] sm:$0xff]
        %v1362 = vld [vmem:[%s3 + $0x1c0] sm:$0xff]
        %v1363 = vld [vmem:[%s3 + $0x1c8] sm:$0xff]
        %v1364 = vld [vmem:[%s3 + $0x1d0] sm:$0xff]
        %v1365 = vld [vmem:[%s3 + $0x1d8] sm:$0xff]
        %v1366 = vld [vmem:[%s3 + $0x1e0] sm:$0xff]
        %v1367 = vld [vmem:[%s3 + $0x1e8] sm:$0xff]
        %v1368 = vld [vmem:[%s3 + $0x1f0] sm:$0xff]
        %v1369 = vld [vmem:[%s3 + $0x1f8] sm:$0xff]
        %v1370 = vld [vmem:[%s3 + $0x200] sm:$0xff]
        %v1371 = vld [vmem:[%s3 + $0x208] sm:$0xff]
        %v1372 = vld [vmem:[%s3 + $0x210] sm:$0xff]
        %v1373 = vld [vmem:[%s3 + $0x218] sm:$0xff]
        %v1374 = vld [vmem:[%s3 + $0x220] sm:$0xff]
        %v1375 = vld [vmem:[%s3 + $0x228] sm:$0xff]
        %v1376 = vld [vmem:[%s3 + $0x230] sm:$0xff]
        %v1377 = vld [vmem:[%s3 + $0x238] sm:$0xff]
        %v1378 = vld [vmem:[%s3 + $0x240] sm:$0xff]
        %v1379 = vld [vmem:[%s3 + $0x248] sm:$0xff]
        %v1380 = vld [vmem:[%s3 + $0x250] sm:$0xff]
        %v1381 = vld [vmem:[%s3 + $0x258] sm:$0xff]
        %v1382 = vld [vmem:[%s3 + $0x260] sm:$0xff]
        %v1383 = vld [vmem:[%s3 + $0x268] sm:$0xff]
        %v1384 = vld [vmem:[%s3 + $0x270] sm:$0xff]
        %v1385 = vld [vmem:[%s3 + $0x278] sm:$0xff]
        %v1386 = vld [vmem:[%s3 + $0x280] sm:$0xff]
        %v1387 = vld [vmem:[%s3 + $0x288] sm:$0xff]
        %v1388 = vld [vmem:[%s3 + $0x290] sm:$0xff]
        %v1389 = vld [vmem:[%s3 + $0x298] sm:$0xff]
        %v1390 = vld [vmem:[%s3 + $0x2a0] sm:$0xff]
        %v1391 = vld [vmem:[%s3 + $0x2a8] sm:$0xff]
        %v1392 = vld [vmem:[%s3 + $0x2b0] sm:$0xff]
        %v1393 = vld [vmem:[%s3 + $0x2b8] sm:$0xff]
        %v1394 = vld [vmem:[%s3 + $0x2c0] sm:$0xff]
        %v1395 = vld [vmem:[%s3 + $0x2c8] sm:$0xff]
        %v1396 = vld [vmem:[%s3 + $0x2d0] sm:$0xff]
        %v1397 = vld [vmem:[%s3 + $0x2d8] sm:$0xff]
        %v1398 = vld [vmem:[%s3 + $0x2e0] sm:$0xff]
        %v1399 = vld [vmem:[%s3 + $0x2e8] sm:$0xff]
        %v1400 = vld [vmem:[%s3 + $0x2f0] sm:$0xff]
        %v1401 = vld [vmem:[%s3 + $0x2f8] sm:$0xff]
        %v1402 = vld [vmem:[%s3 + $0x300] sm:$0xff]
        %v1403 = vld [vmem:[%s3 + $0x308] sm:$0xff]
        %v1404 = vld [vmem:[%s3 + $0x310] sm:$0xff]
        %v1405 = vld [vmem:[%s3 + $0x318] sm:$0xff]
        %v1406 = vld [vmem:[%s3 + $0x320] sm:$0xff]
        %v1407 = vld [vmem:[%s3 + $0x328] sm:$0xff]
        %v1408 = vld [vmem:[%s3 + $0x330] sm:$0xff]
        %v1409 = vld [vmem:[%s3 + $0x338] sm:$0xff]
        %v1410 = vld [vmem:[%s3 + $0x340] sm:$0xff]
        %v1411 = vld [vmem:[%s3 + $0x348] sm:$0xff]
        %v1412 = vld [vmem:[%s3 + $0x350] sm:$0xff]
        %v1413 = vld [vmem:[%s3 + $0x358] sm:$0xff]
        %v1414 = vld [vmem:[%s3 + $0x360] sm:$0xff]
        %v1415 = vld [vmem:[%s3 + $0x368] sm:$0xff]
        %v1416 = vld [vmem:[%s3 + $0x370] sm:$0xff]
        %v1417 = vld [vmem:[%s3 + $0x378] sm:$0xff]
        %v1418 = vld [vmem:[%s3 + $0x380] sm:$0xff]
        %v1419 = vld [vmem:[%s3 + $0x388] sm:$0xff]
        %v1420 = vld [vmem:[%s3 + $0x390] sm:$0xff]
        %v1421 = vld [vmem:[%s3 + $0x398] sm:$0xff]
        %v1422 = vld [vmem:[%s3 + $0x3a0] sm:$0xff]
        %v1423 = vld [vmem:[%s3 + $0x3a8] sm:$0xff]
        %v1424 = vld [vmem:[%s3 + $0x3b0] sm:$0xff]
        %v1425 = vld [vmem:[%s3 + $0x3b8] sm:$0xff]
        %v1426 = vld [vmem:[%s3 + $0x3c0] sm:$0xff]
        %v1427 = vld [vmem:[%s3 + $0x3c8] sm:$0xff]
        %v1428 = vld [vmem:[%s3 + $0x3d0] sm:$0xff]
        %v1429 = vld [vmem:[%s3 + $0x3d8] sm:$0xff]
        %v1430 = vld [vmem:[%s3 + $0x3e0] sm:$0xff]
        %v1431 = vld [vmem:[%s3 + $0x3e8] sm:$0xff]
        %v1432 = vld [vmem:[%s3 + $0x3f0] sm:$0xff]
        %v1433 = vld [vmem:[%s3 + $0x3f8] sm:$0xff]
        %1434 = vmatprep.subr.mxu0 0.0
        %v1435 = vand.u32 %v1306, 4294901760
        %1436 = vmatpush1.msra.mxu0 %v1435
        %1437 = vmatprep.subr.mxu0 0.0
        %v1438 = vand.u32 %v1307, 4294901760
        %1439 = vmatpush1.msra.mxu0 %v1438
        %1440 = vmatprep.subr.mxu0 0.0
        %v1441 = vand.u32 %v1308, 4294901760
        %1442 = vmatpush1.msra.mxu0 %v1441
        %1443 = vmatprep.subr.mxu0 0.0
        %v1444 = vand.u32 %v1309, 4294901760
        %1445 = vmatpush1.msra.mxu0 %v1444
        %1446 = vmatprep.subr.mxu0 0.0
        %v1447 = vand.u32 %v1310, 4294901760
        %1448 = vmatpush1.msra.mxu0 %v1447
        %1449 = vmatprep.subr.mxu0 0.0
        %v1450 = vand.u32 %v1311, 4294901760
        %1451 = vmatpush1.msra.mxu0 %v1450
        %1452 = vmatprep.subr.mxu0 0.0
        %v1453 = vand.u32 %v1312, 4294901760
        %1454 = vmatpush1.msra.mxu0 %v1453
        %1455 = vmatprep.subr.mxu0 0.0
        %v1456 = vand.u32 %v1313, 4294901760
        %1457 = vmatpush1.msra.mxu0 %v1456
        %1458 = vmatprep.subr.mxu0 0.0
        %v1459 = vand.u32 %v1314, 4294901760
        %1460 = vmatpush1.msra.mxu0 %v1459
        %1461 = vmatprep.subr.mxu0 0.0
        %v1462 = vand.u32 %v1315, 4294901760
        %1463 = vmatpush1.msra.mxu0 %v1462
        %1464 = vmatprep.subr.mxu0 0.0
        %v1465 = vand.u32 %v1316, 4294901760
        %1466 = vmatpush1.msra.mxu0 %v1465
        %1467 = vmatprep.subr.mxu0 0.0
        %v1468 = vand.u32 %v1317, 4294901760
        %1469 = vmatpush1.msra.mxu0 %v1468
        %1470 = vmatprep.subr.mxu0 0.0
        %v1471 = vand.u32 %v1318, 4294901760
        %1472 = vmatpush1.msra.mxu0 %v1471
        %1473 = vmatprep.subr.mxu0 0.0
        %v1474 = vand.u32 %v1319, 4294901760
        %1475 = vmatpush1.msra.mxu0 %v1474
        %1476 = vmatprep.subr.mxu0 0.0
        %v1477 = vand.u32 %v1320, 4294901760
        %1478 = vmatpush1.msra.mxu0 %v1477
        %1479 = vmatprep.subr.mxu0 0.0
        %v1480 = vand.u32 %v1321, 4294901760
        %1481 = vmatpush1.msra.mxu0 %v1480
        %1482 = vmatprep.subr.mxu0 0.0
        %v1483 = vand.u32 %v1322, 4294901760
        %1484 = vmatpush1.msra.mxu0 %v1483
        %1485 = vmatprep.subr.mxu0 0.0
        %v1486 = vand.u32 %v1323, 4294901760
        %1487 = vmatpush1.msra.mxu0 %v1486
        %1488 = vmatprep.subr.mxu0 0.0
        %v1489 = vand.u32 %v1324, 4294901760
        %1490 = vmatpush1.msra.mxu0 %v1489
        %1491 = vmatprep.subr.mxu0 0.0
        %v1492 = vand.u32 %v1325, 4294901760
        %1493 = vmatpush1.msra.mxu0 %v1492
        %1494 = vmatprep.subr.mxu0 0.0
        %v1495 = vand.u32 %v1326, 4294901760
        %1496 = vmatpush1.msra.mxu0 %v1495
        %1497 = vmatprep.subr.mxu0 0.0
        %v1498 = vand.u32 %v1327, 4294901760
        %1499 = vmatpush1.msra.mxu0 %v1498
        %1500 = vmatprep.subr.mxu0 0.0
        %v1501 = vand.u32 %v1328, 4294901760
        %1502 = vmatpush1.msra.mxu0 %v1501
        %1503 = vmatprep.subr.mxu0 0.0
        %v1504 = vand.u32 %v1329, 4294901760
        %1505 = vmatpush1.msra.mxu0 %v1504
        %1506 = vmatprep.subr.mxu0 0.0
        %v1507 = vand.u32 %v1330, 4294901760
        %1508 = vmatpush1.msra.mxu0 %v1507
        %1509 = vmatprep.subr.mxu0 0.0
        %v1510 = vand.u32 %v1331, 4294901760
        %1511 = vmatpush1.msra.mxu0 %v1510
        %1512 = vmatprep.subr.mxu0 0.0
        %v1513 = vand.u32 %v1332, 4294901760
        %1514 = vmatpush1.msra.mxu0 %v1513
        %1515 = vmatprep.subr.mxu0 0.0
        %v1516 = vand.u32 %v1333, 4294901760
        %1517 = vmatpush1.msra.mxu0 %v1516
        %1518 = vmatprep.subr.mxu0 0.0
        %v1519 = vand.u32 %v1334, 4294901760
        %1520 = vmatpush1.msra.mxu0 %v1519
        %1521 = vmatprep.subr.mxu0 0.0
        %v1522 = vand.u32 %v1335, 4294901760
        %1523 = vmatpush1.msra.mxu0 %v1522
        %1524 = vmatprep.subr.mxu0 0.0
        %v1525 = vand.u32 %v1336, 4294901760
        %1526 = vmatpush1.msra.mxu0 %v1525
        %1527 = vmatprep.subr.mxu0 0.0
        %v1528 = vand.u32 %v1337, 4294901760
        %1529 = vmatpush1.msra.mxu0 %v1528
        %v1530 = vand.u32 %v1299, 4294901760
        %v1531 = vsub.f32 %v1299, %v1530
        %v1532 = vand.u32 %v1531, 4294901760
        %v1533 = vsub.f32 %v1531, %v1532
        %v1534 = vand.u32 %v1533, 4294901760
        %1535 = vmatprep.mubr.f32.mxu0 %v1534
        %v1536 = vand.u32 %v1298, 4294901760
        %v1537 = vsub.f32 %v1298, %v1536
        %v1538 = vand.u32 %v1537, 4294901760
        %v1539 = vsub.f32 %v1537, %v1538
        %v1540 = vand.u32 %v1539, 4294901760
        %1541 = vmatmul.mubr.f32.gmra.mrb[0].mxu0 %v1540
        %v1542 = vpop.f32.mrb[0].mxu0
        %v1543 = vadd.f32 0.0, %v1542
        %v1544 = vpop.f32.mrb[0].mxu0
        %1545 = vdwg.mxu0
        %1546 = vmatprep.subr.mxu0 0.0
        %v1547 = vand.u32 %v1306, 4294901760
        %v1548 = vsub.f32 %v1306, %v1547
        %v1549 = vand.u32 %v1548, 4294901760
        %v1550 = vsub.f32 %v1548, %v1549
        %v1551 = vand.u32 %v1550, 4294901760
        %1552 = vmatpush1.msra.mxu0 %v1551
        %1553 = vmatprep.subr.mxu0 0.0
        %v1554 = vand.u32 %v1307, 4294901760
        %v1555 = vsub.f32 %v1307, %v1554
        %v1556 = vand.u32 %v1555, 4294901760
        %v1557 = vsub.f32 %v1555, %v1556
        %v1558 = vand.u32 %v1557, 4294901760
        %1559 = vmatpush1.msra.mxu0 %v1558
        %1560 = vmatprep.subr.mxu0 0.0
        %v1561 = vand.u32 %v1308, 4294901760
        %v1562 = vsub.f32 %v1308, %v1561
        %v1563 = vand.u32 %v1562, 4294901760
        %v1564 = vsub.f32 %v1562, %v1563
        %v1565 = vand.u32 %v1564, 4294901760
        %1566 = vmatpush1.msra.mxu0 %v1565
        %1567 = vmatprep.subr.mxu0 0.0
        %v1568 = vand.u32 %v1309, 4294901760
        %v1569 = vsub.f32 %v1309, %v1568
        %v1570 = vand.u32 %v1569, 4294901760
        %v1571 = vsub.f32 %v1569, %v1570
        %v1572 = vand.u32 %v1571, 4294901760
        %1573 = vmatpush1.msra.mxu0 %v1572
        %1574 = vmatprep.subr.mxu0 0.0
        %v1575 = vand.u32 %v1310, 4294901760
        %v1576 = vsub.f32 %v1310, %v1575
        %v1577 = vand.u32 %v1576, 4294901760
        %v1578 = vsub.f32 %v1576, %v1577
        %v1579 = vand.u32 %v1578, 4294901760
        %1580 = vmatpush1.msra.mxu0 %v1579
        %1581 = vmatprep.subr.mxu0 0.0
        %v1582 = vand.u32 %v1311, 4294901760
        %v1583 = vsub.f32 %v1311, %v1582
        %v1584 = vand.u32 %v1583, 4294901760
        %v1585 = vsub.f32 %v1583, %v1584
        %v1586 = vand.u32 %v1585, 4294901760
        %1587 = vmatpush1.msra.mxu0 %v1586
        %1588 = vmatprep.subr.mxu0 0.0
        %v1589 = vand.u32 %v1312, 4294901760
        %v1590 = vsub.f32 %v1312, %v1589
        %v1591 = vand.u32 %v1590, 4294901760
        %v1592 = vsub.f32 %v1590, %v1591
        %v1593 = vand.u32 %v1592, 4294901760
        %1594 = vmatpush1.msra.mxu0 %v1593
        %1595 = vmatprep.subr.mxu0 0.0
        %v1596 = vand.u32 %v1313, 4294901760
        %v1597 = vsub.f32 %v1313, %v1596
        %v1598 = vand.u32 %v1597, 4294901760
        %v1599 = vsub.f32 %v1597, %v1598
        %v1600 = vand.u32 %v1599, 4294901760
        %1601 = vmatpush1.msra.mxu0 %v1600
        %1602 = vmatprep.subr.mxu0 0.0
        %v1603 = vand.u32 %v1314, 4294901760
        %v1604 = vsub.f32 %v1314, %v1603
        %v1605 = vand.u32 %v1604, 4294901760
        %v1606 = vsub.f32 %v1604, %v1605
        %v1607 = vand.u32 %v1606, 4294901760
        %1608 = vmatpush1.msra.mxu0 %v1607
        %1609 = vmatprep.subr.mxu0 0.0
        %v1610 = vand.u32 %v1315, 4294901760
        %v1611 = vsub.f32 %v1315, %v1610
        %v1612 = vand.u32 %v1611, 4294901760
        %v1613 = vsub.f32 %v1611, %v1612
        %v1614 = vand.u32 %v1613, 4294901760
        %1615 = vmatpush1.msra.mxu0 %v1614
        %1616 = vmatprep.subr.mxu0 0.0
        %v1617 = vand.u32 %v1316, 4294901760
        %v1618 = vsub.f32 %v1316, %v1617
        %v1619 = vand.u32 %v1618, 4294901760
        %v1620 = vsub.f32 %v1618, %v1619
        %v1621 = vand.u32 %v1620, 4294901760
        %1622 = vmatpush1.msra.mxu0 %v1621
        %1623 = vmatprep.subr.mxu0 0.0
        %v1624 = vand.u32 %v1317, 4294901760
        %v1625 = vsub.f32 %v1317, %v1624
        %v1626 = vand.u32 %v1625, 4294901760
        %v1627 = vsub.f32 %v1625, %v1626
        %v1628 = vand.u32 %v1627, 4294901760
        %1629 = vmatpush1.msra.mxu0 %v1628
        %1630 = vmatprep.subr.mxu0 0.0
        %v1631 = vand.u32 %v1318, 4294901760
        %v1632 = vsub.f32 %v1318, %v1631
        %v1633 = vand.u32 %v1632, 4294901760
        %v1634 = vsub.f32 %v1632, %v1633
        %v1635 = vand.u32 %v1634, 4294901760
        %1636 = vmatpush1.msra.mxu0 %v1635
        %1637 = vmatprep.subr.mxu0 0.0
        %v1638 = vand.u32 %v1319, 4294901760
        %v1639 = vsub.f32 %v1319, %v1638
        %v1640 = vand.u32 %v1639, 4294901760
        %v1641 = vsub.f32 %v1639, %v1640
        %v1642 = vand.u32 %v1641, 4294901760
        %1643 = vmatpush1.msra.mxu0 %v1642
        %1644 = vmatprep.subr.mxu0 0.0
        %v1645 = vand.u32 %v1320, 4294901760
        %v1646 = vsub.f32 %v1320, %v1645
        %v1647 = vand.u32 %v1646, 4294901760
        %v1648 = vsub.f32 %v1646, %v1647
        %v1649 = vand.u32 %v1648, 4294901760
        %1650 = vmatpush1.msra.mxu0 %v1649
        %1651 = vmatprep.subr.mxu0 0.0
        %v1652 = vand.u32 %v1321, 4294901760
        %v1653 = vsub.f32 %v1321, %v1652
        %v1654 = vand.u32 %v1653, 4294901760
        %v1655 = vsub.f32 %v1653, %v1654
        %v1656 = vand.u32 %v1655, 4294901760
        %1657 = vmatpush1.msra.mxu0 %v1656
        %1658 = vmatprep.subr.mxu0 0.0
        %v1659 = vand.u32 %v1322, 4294901760
        %v1660 = vsub.f32 %v1322, %v1659
        %v1661 = vand.u32 %v1660, 4294901760
        %v1662 = vsub.f32 %v1660, %v1661
        %v1663 = vand.u32 %v1662, 4294901760
        %1664 = vmatpush1.msra.mxu0 %v1663
        %1665 = vmatprep.subr.mxu0 0.0
        %v1666 = vand.u32 %v1323, 4294901760
        %v1667 = vsub.f32 %v1323, %v1666
        %v1668 = vand.u32 %v1667, 4294901760
        %v1669 = vsub.f32 %v1667, %v1668
        %v1670 = vand.u32 %v1669, 4294901760
        %1671 = vmatpush1.msra.mxu0 %v1670
        %1672 = vmatprep.subr.mxu0 0.0
        %v1673 = vand.u32 %v1324, 4294901760
        %v1674 = vsub.f32 %v1324, %v1673
        %v1675 = vand.u32 %v1674, 4294901760
        %v1676 = vsub.f32 %v1674, %v1675
        %v1677 = vand.u32 %v1676, 4294901760
        %1678 = vmatpush1.msra.mxu0 %v1677
        %1679 = vmatprep.subr.mxu0 0.0
        %v1680 = vand.u32 %v1325, 4294901760
        %v1681 = vsub.f32 %v1325, %v1680
        %v1682 = vand.u32 %v1681, 4294901760
        %v1683 = vsub.f32 %v1681, %v1682
        %v1684 = vand.u32 %v1683, 4294901760
        %1685 = vmatpush1.msra.mxu0 %v1684
        %1686 = vmatprep.subr.mxu0 0.0
        %v1687 = vand.u32 %v1326, 4294901760
        %v1688 = vsub.f32 %v1326, %v1687
        %v1689 = vand.u32 %v1688, 4294901760
        %v1690 = vsub.f32 %v1688, %v1689
        %v1691 = vand.u32 %v1690, 4294901760
        %1692 = vmatpush1.msra.mxu0 %v1691
        %1693 = vmatprep.subr.mxu0 0.0
        %v1694 = vand.u32 %v1327, 4294901760
        %v1695 = vsub.f32 %v1327, %v1694
        %v1696 = vand.u32 %v1695, 4294901760
        %v1697 = vsub.f32 %v1695, %v1696
        %v1698 = vand.u32 %v1697, 4294901760
        %1699 = vmatpush1.msra.mxu0 %v1698
        %1700 = vmatprep.subr.mxu0 0.0
        %v1701 = vand.u32 %v1328, 4294901760
        %v1702 = vsub.f32 %v1328, %v1701
        %v1703 = vand.u32 %v1702, 4294901760
        %v1704 = vsub.f32 %v1702, %v1703
        %v1705 = vand.u32 %v1704, 4294901760
        %1706 = vmatpush1.msra.mxu0 %v1705
        %1707 = vmatprep.subr.mxu0 0.0
        %v1708 = vand.u32 %v1329, 4294901760
        %v1709 = vsub.f32 %v1329, %v1708
        %v1710 = vand.u32 %v1709, 4294901760
        %v1711 = vsub.f32 %v1709, %v1710
        %v1712 = vand.u32 %v1711, 4294901760
        %1713 = vmatpush1.msra.mxu0 %v1712
        %1714 = vmatprep.subr.mxu0 0.0
        %v1715 = vand.u32 %v1330, 4294901760
        %v1716 = vsub.f32 %v1330, %v1715
        %v1717 = vand.u32 %v1716, 4294901760
        %v1718 = vsub.f32 %v1716, %v1717
        %v1719 = vand.u32 %v1718, 4294901760
        %1720 = vmatpush1.msra.mxu0 %v1719
        %1721 = vmatprep.subr.mxu0 0.0
        %v1722 = vand.u32 %v1331, 4294901760
        %v1723 = vsub.f32 %v1331, %v1722
        %v1724 = vand.u32 %v1723, 4294901760
        %v1725 = vsub.f32 %v1723, %v1724
        %v1726 = vand.u32 %v1725, 4294901760
        %1727 = vmatpush1.msra.mxu0 %v1726
        %1728 = vmatprep.subr.mxu0 0.0
        %v1729 = vand.u32 %v1332, 4294901760
        %v1730 = vsub.f32 %v1332, %v1729
        %v1731 = vand.u32 %v1730, 4294901760
        %v1732 = vsub.f32 %v1730, %v1731
        %v1733 = vand.u32 %v1732, 4294901760
        %1734 = vmatpush1.msra.mxu0 %v1733
        %1735 = vmatprep.subr.mxu0 0.0
        %v1736 = vand.u32 %v1333, 4294901760
        %v1737 = vsub.f32 %v1333, %v1736
        %v1738 = vand.u32 %v1737, 4294901760
        %v1739 = vsub.f32 %v1737, %v1738
        %v1740 = vand.u32 %v1739, 4294901760
        %1741 = vmatpush1.msra.mxu0 %v1740
        %1742 = vmatprep.subr.mxu0 0.0
        %v1743 = vand.u32 %v1334, 4294901760
        %v1744 = vsub.f32 %v1334, %v1743
        %v1745 = vand.u32 %v1744, 4294901760
        %v1746 = vsub.f32 %v1744, %v1745
        %v1747 = vand.u32 %v1746, 4294901760
        %1748 = vmatpush1.msra.mxu0 %v1747
        %1749 = vmatprep.subr.mxu0 0.0
        %v1750 = vand.u32 %v1335, 4294901760
        %v1751 = vsub.f32 %v1335, %v1750
        %v1752 = vand.u32 %v1751, 4294901760
        %v1753 = vsub.f32 %v1751, %v1752
        %v1754 = vand.u32 %v1753, 4294901760
        %1755 = vmatpush1.msra.mxu0 %v1754
        %1756 = vmatprep.subr.mxu0 0.0
        %v1757 = vand.u32 %v1336, 4294901760
        %v1758 = vsub.f32 %v1336, %v1757
        %v1759 = vand.u32 %v1758, 4294901760
        %v1760 = vsub.f32 %v1758, %v1759
        %v1761 = vand.u32 %v1760, 4294901760
        %1762 = vmatpush1.msra.mxu0 %v1761
        %1763 = vmatprep.subr.mxu0 0.0
        %v1764 = vand.u32 %v1337, 4294901760
        %v1765 = vsub.f32 %v1337, %v1764
        %v1766 = vand.u32 %v1765, 4294901760
        %v1767 = vsub.f32 %v1765, %v1766
        %v1768 = vand.u32 %v1767, 4294901760
        %1769 = vmatpush1.msra.mxu0 %v1768
        %v1770 = vand.u32 %v1299, 4294901760
        %1771 = vmatprep.mubr.f32.mxu0 %v1770
        %v1772 = vand.u32 %v1298, 4294901760
        %1773 = vmatmul.mubr.f32.gmra.mrb[0].mxu0 %v1772
        %v1774 = vpop.f32.mrb[0].mxu0
        %v1775 = vadd.f32 %v1543, %v1774
        %v1776 = vpop.f32.mrb[0].mxu0
        %1777 = vdwg.mxu0
        %1778 = vmatprep.subr.mxu0 0.0
        %v1779 = vand.u32 %v1306, 4294901760
        %v1780 = vsub.f32 %v1306, %v1779
        %1781 = vmatpush1.msra.mxu0 %v1780
        %1782 = vmatprep.subr.mxu0 0.0
        %v1783 = vand.u32 %v1307, 4294901760
        %v1784 = vsub.f32 %v1307, %v1783
        %1785 = vmatpush1.msra.mxu0 %v1784
        %1786 = vmatprep.subr.mxu0 0.0
        %v1787 = vand.u32 %v1308, 4294901760
        %v1788 = vsub.f32 %v1308, %v1787
        %1789 = vmatpush1.msra.mxu0 %v1788
        %1790 = vmatprep.subr.mxu0 0.0
        %v1791 = vand.u32 %v1309, 4294901760
        %v1792 = vsub.f32 %v1309, %v1791
        %1793 = vmatpush1.msra.mxu0 %v1792
        %1794 = vmatprep.subr.mxu0 0.0
        %v1795 = vand.u32 %v1310, 4294901760
        %v1796 = vsub.f32 %v1310, %v1795
        %1797 = vmatpush1.msra.mxu0 %v1796
        %1798 = vmatprep.subr.mxu0 0.0
        %v1799 = vand.u32 %v1311, 4294901760
        %v1800 = vsub.f32 %v1311, %v1799
        %1801 = vmatpush1.msra.mxu0 %v1800
        %1802 = vmatprep.subr.mxu0 0.0
        %v1803 = vand.u32 %v1312, 4294901760
        %v1804 = vsub.f32 %v1312, %v1803
        %1805 = vmatpush1.msra.mxu0 %v1804
        %1806 = vmatprep.subr.mxu0 0.0
        %v1807 = vand.u32 %v1313, 4294901760
        %v1808 = vsub.f32 %v1313, %v1807
        %1809 = vmatpush1.msra.mxu0 %v1808
        %1810 = vmatprep.subr.mxu0 0.0
        %v1811 = vand.u32 %v1314, 4294901760
        %v1812 = vsub.f32 %v1314, %v1811
        %1813 = vmatpush1.msra.mxu0 %v1812
        %1814 = vmatprep.subr.mxu0 0.0
        %v1815 = vand.u32 %v1315, 4294901760
        %v1816 = vsub.f32 %v1315, %v1815
        %1817 = vmatpush1.msra.mxu0 %v1816
        %1818 = vmatprep.subr.mxu0 0.0
        %v1819 = vand.u32 %v1316, 4294901760
        %v1820 = vsub.f32 %v1316, %v1819
        %1821 = vmatpush1.msra.mxu0 %v1820
        %1822 = vmatprep.subr.mxu0 0.0
        %v1823 = vand.u32 %v1317, 4294901760
        %v1824 = vsub.f32 %v1317, %v1823
        %1825 = vmatpush1.msra.mxu0 %v1824
        %1826 = vmatprep.subr.mxu0 0.0
        %v1827 = vand.u32 %v1318, 4294901760
        %v1828 = vsub.f32 %v1318, %v1827
        %1829 = vmatpush1.msra.mxu0 %v1828
        %1830 = vmatprep.subr.mxu0 0.0
        %v1831 = vand.u32 %v1319, 4294901760
        %v1832 = vsub.f32 %v1319, %v1831
        %1833 = vmatpush1.msra.mxu0 %v1832
        %1834 = vmatprep.subr.mxu0 0.0
        %v1835 = vand.u32 %v1320, 4294901760
        %v1836 = vsub.f32 %v1320, %v1835
        %1837 = vmatpush1.msra.mxu0 %v1836
        %1838 = vmatprep.subr.mxu0 0.0
        %v1839 = vand.u32 %v1321, 4294901760
        %v1840 = vsub.f32 %v1321, %v1839
        %1841 = vmatpush1.msra.mxu0 %v1840
        %1842 = vmatprep.subr.mxu0 0.0
        %v1843 = vand.u32 %v1322, 4294901760
        %v1844 = vsub.f32 %v1322, %v1843
        %1845 = vmatpush1.msra.mxu0 %v1844
        %1846 = vmatprep.subr.mxu0 0.0
        %v1847 = vand.u32 %v1323, 4294901760
        %v1848 = vsub.f32 %v1323, %v1847
        %1849 = vmatpush1.msra.mxu0 %v1848
        %1850 = vmatprep.subr.mxu0 0.0
        %v1851 = vand.u32 %v1324, 4294901760
        %v1852 = vsub.f32 %v1324, %v1851
        %1853 = vmatpush1.msra.mxu0 %v1852
        %1854 = vmatprep.subr.mxu0 0.0
        %v1855 = vand.u32 %v1325, 4294901760
        %v1856 = vsub.f32 %v1325, %v1855
        %1857 = vmatpush1.msra.mxu0 %v1856
        %1858 = vmatprep.subr.mxu0 0.0
        %v1859 = vand.u32 %v1326, 4294901760
        %v1860 = vsub.f32 %v1326, %v1859
        %1861 = vmatpush1.msra.mxu0 %v1860
        %1862 = vmatprep.subr.mxu0 0.0
        %v1863 = vand.u32 %v1327, 4294901760
        %v1864 = vsub.f32 %v1327, %v1863
        %1865 = vmatpush1.msra.mxu0 %v1864
        %1866 = vmatprep.subr.mxu0 0.0
        %v1867 = vand.u32 %v1328, 4294901760
        %v1868 = vsub.f32 %v1328, %v1867
        %1869 = vmatpush1.msra.mxu0 %v1868
        %1870 = vmatprep.subr.mxu0 0.0
        %v1871 = vand.u32 %v1329, 4294901760
        %v1872 = vsub.f32 %v1329, %v1871
        %1873 = vmatpush1.msra.mxu0 %v1872
        %1874 = vmatprep.subr.mxu0 0.0
        %v1875 = vand.u32 %v1330, 4294901760
        %v1876 = vsub.f32 %v1330, %v1875
        %1877 = vmatpush1.msra.mxu0 %v1876
        %1878 = vmatprep.subr.mxu0 0.0
        %v1879 = vand.u32 %v1331, 4294901760
        %v1880 = vsub.f32 %v1331, %v1879
        %1881 = vmatpush1.msra.mxu0 %v1880
        %1882 = vmatprep.subr.mxu0 0.0
        %v1883 = vand.u32 %v1332, 4294901760
        %v1884 = vsub.f32 %v1332, %v1883
        %1885 = vmatpush1.msra.mxu0 %v1884
        %1886 = vmatprep.subr.mxu0 0.0
        %v1887 = vand.u32 %v1333, 4294901760
        %v1888 = vsub.f32 %v1333, %v1887
        %1889 = vmatpush1.msra.mxu0 %v1888
        %1890 = vmatprep.subr.mxu0 0.0
        %v1891 = vand.u32 %v1334, 4294901760
        %v1892 = vsub.f32 %v1334, %v1891
        %1893 = vmatpush1.msra.mxu0 %v1892
        %1894 = vmatprep.subr.mxu0 0.0
        %v1895 = vand.u32 %v1335, 4294901760
        %v1896 = vsub.f32 %v1335, %v1895
        %1897 = vmatpush1.msra.mxu0 %v1896
        %1898 = vmatprep.subr.mxu0 0.0
        %v1899 = vand.u32 %v1336, 4294901760
        %v1900 = vsub.f32 %v1336, %v1899
        %1901 = vmatpush1.msra.mxu0 %v1900
        %1902 = vmatprep.subr.mxu0 0.0
        %v1903 = vand.u32 %v1337, 4294901760
        %v1904 = vsub.f32 %v1337, %v1903
        %1905 = vmatpush1.msra.mxu0 %v1904
        %v1906 = vand.u32 %v1299, 4294901760
        %v1907 = vsub.f32 %v1299, %v1906
        %1908 = vmatprep.mubr.f32.mxu0 %v1907
        %v1909 = vand.u32 %v1298, 4294901760
        %v1910 = vsub.f32 %v1298, %v1909
        %1911 = vmatmul.mubr.f32.gmra.mrb[0].mxu0 %v1910
        %v1912 = vpop.f32.mrb[0].mxu0
        %v1913 = vadd.f32 %v1775, %v1912
        %v1914 = vpop.f32.mrb[0].mxu0
        %1915 = vdwg.mxu0
        %1916 = vmatprep.subr.mxu0 0.0
        %v1917 = vand.u32 %v1306, 4294901760
        %1918 = vmatpush1.msra.mxu0 %v1917
        %1919 = vmatprep.subr.mxu0 0.0
        %v1920 = vand.u32 %v1307, 4294901760
        %1921 = vmatpush1.msra.mxu0 %v1920
        %1922 = vmatprep.subr.mxu0 0.0
        %v1923 = vand.u32 %v1308, 4294901760
        %1924 = vmatpush1.msra.mxu0 %v1923
        %1925 = vmatprep.subr.mxu0 0.0
        %v1926 = vand.u32 %v1309, 4294901760
        %1927 = vmatpush1.msra.mxu0 %v1926
        %1928 = vmatprep.subr.mxu0 0.0
        %v1929 = vand.u32 %v1310, 4294901760
        %1930 = vmatpush1.msra.mxu0 %v1929
        %1931 = vmatprep.subr.mxu0 0.0
        %v1932 = vand.u32 %v1311, 4294901760
        %1933 = vmatpush1.msra.mxu0 %v1932
        %1934 = vmatprep.subr.mxu0 0.0
        %v1935 = vand.u32 %v1312, 4294901760
        %1936 = vmatpush1.msra.mxu0 %v1935
        %1937 = vmatprep.subr.mxu0 0.0
        %v1938 = vand.u32 %v1313, 4294901760
        %1939 = vmatpush1.msra.mxu0 %v1938
        %1940 = vmatprep.subr.mxu0 0.0
        %v1941 = vand.u32 %v1314, 4294901760
        %1942 = vmatpush1.msra.mxu0 %v1941
        %1943 = vmatprep.subr.mxu0 0.0
        %v1944 = vand.u32 %v1315, 4294901760
        %1945 = vmatpush1.msra.mxu0 %v1944
        %1946 = vmatprep.subr.mxu0 0.0
        %v1947 = vand.u32 %v1316, 4294901760
        %1948 = vmatpush1.msra.mxu0 %v1947
        %1949 = vmatprep.subr.mxu0 0.0
        %v1950 = vand.u32 %v1317, 4294901760
        %1951 = vmatpush1.msra.mxu0 %v1950
        %1952 = vmatprep.subr.mxu0 0.0
        %v1953 = vand.u32 %v1318, 4294901760
        %1954 = vmatpush1.msra.mxu0 %v1953
        %1955 = vmatprep.subr.mxu0 0.0
        %v1956 = vand.u32 %v1319, 4294901760
        %1957 = vmatpush1.msra.mxu0 %v1956
        %1958 = vmatprep.subr.mxu0 0.0
        %v1959 = vand.u32 %v1320, 4294901760
        %1960 = vmatpush1.msra.mxu0 %v1959
        %1961 = vmatprep.subr.mxu0 0.0
        %v1962 = vand.u32 %v1321, 4294901760
        %1963 = vmatpush1.msra.mxu0 %v1962
        %1964 = vmatprep.subr.mxu0 0.0
        %v1965 = vand.u32 %v1322, 4294901760
        %1966 = vmatpush1.msra.mxu0 %v1965
        %1967 = vmatprep.subr.mxu0 0.0
        %v1968 = vand.u32 %v1323, 4294901760
        %1969 = vmatpush1.msra.mxu0 %v1968
        %1970 = vmatprep.subr.mxu0 0.0
        %v1971 = vand.u32 %v1324, 4294901760
        %1972 = vmatpush1.msra.mxu0 %v1971
        %1973 = vmatprep.subr.mxu0 0.0
        %v1974 = vand.u32 %v1325, 4294901760
        %1975 = vmatpush1.msra.mxu0 %v1974
        %1976 = vmatprep.subr.mxu0 0.0
        %v1977 = vand.u32 %v1326, 4294901760
        %1978 = vmatpush1.msra.mxu0 %v1977
        %1979 = vmatprep.subr.mxu0 0.0
        %v1980 = vand.u32 %v1327, 4294901760
        %1981 = vmatpush1.msra.mxu0 %v1980
        %1982 = vmatprep.subr.mxu0 0.0
        %v1983 = vand.u32 %v1328, 4294901760
        %1984 = vmatpush1.msra.mxu0 %v1983
        %1985 = vmatprep.subr.mxu0 0.0
        %v1986 = vand.u32 %v1329, 4294901760
        %1987 = vmatpush1.msra.mxu0 %v1986
        %1988 = vmatprep.subr.mxu0 0.0
        %v1989 = vand.u32 %v1330, 4294901760
        %1990 = vmatpush1.msra.mxu0 %v1989
        %1991 = vmatprep.subr.mxu0 0.0
        %v1992 = vand.u32 %v1331, 4294901760
        %1993 = vmatpush1.msra.mxu0 %v1992
        %1994 = vmatprep.subr.mxu0 0.0
        %v1995 = vand.u32 %v1332, 4294901760
        %1996 = vmatpush1.msra.mxu0 %v1995
        %1997 = vmatprep.subr.mxu0 0.0
        %v1998 = vand.u32 %v1333, 4294901760
        %1999 = vmatpush1.msra.mxu0 %v1998
        %2000 = vmatprep.subr.mxu0 0.0
        %v2001 = vand.u32 %v1334, 4294901760
        %2002 = vmatpush1.msra.mxu0 %v2001
        %2003 = vmatprep.subr.mxu0 0.0
        %v2004 = vand.u32 %v1335, 4294901760
        %2005 = vmatpush1.msra.mxu0 %v2004
        %2006 = vmatprep.subr.mxu0 0.0
        %v2007 = vand.u32 %v1336, 4294901760
        %2008 = vmatpush1.msra.mxu0 %v2007
        %2009 = vmatprep.subr.mxu0 0.0
        %v2010 = vand.u32 %v1337, 4294901760
        %2011 = vmatpush1.msra.mxu0 %v2010
        %v2012 = vand.u32 %v1299, 4294901760
        %v2013 = vsub.f32 %v1299, %v2012
        %v2014 = vand.u32 %v2013, 4294901760
        %2015 = vmatprep.mubr.f32.mxu0 %v2014
        %v2016 = vand.u32 %v1298, 4294901760
        %v2017 = vsub.f32 %v1298, %v2016
        %v2018 = vand.u32 %v2017, 4294901760
        %2019 = vmatmul.mubr.f32.gmra.mrb[0].mxu0 %v2018
        %v2020 = vpop.f32.mrb[0].mxu0
        %v2021 = vadd.f32 %v1913, %v2020
        %v2022 = vpop.f32.mrb[0].mxu0
        %2023 = vdwg.mxu0
        %2024 = vmatprep.subr.mxu0 0.0
        %v2025 = vand.u32 %v1306, 4294901760
        %v2026 = vsub.f32 %v1306, %v2025
        %v2027 = vand.u32 %v2026, 4294901760
        %2028 = vmatpush1.msra.mxu0 %v2027
        %2029 = vmatprep.subr.mxu0 0.0
        %v2030 = vand.u32 %v1307, 4294901760
        %v2031 = vsub.f32 %v1307, %v2030
        %v2032 = vand.u32 %v2031, 4294901760
        %2033 = vmatpush1.msra.mxu0 %v2032
        %2034 = vmatprep.subr.mxu0 0.0
        %v2035 = vand.u32 %v1308, 4294901760
        %v2036 = vsub.f32 %v1308, %v2035
        %v2037 = vand.u32 %v2036, 4294901760
        %2038 = vmatpush1.msra.mxu0 %v2037
        %2039 = vmatprep.subr.mxu0 0.0
        %v2040 = vand.u32 %v1309, 4294901760
        %v2041 = vsub.f32 %v1309, %v2040
        %v2042 = vand.u32 %v2041, 4294901760
        %2043 = vmatpush1.msra.mxu0 %v2042
        %2044 = vmatprep.subr.mxu0 0.0
        %v2045 = vand.u32 %v1310, 4294901760
        %v2046 = vsub.f32 %v1310, %v2045
        %v2047 = vand.u32 %v2046, 4294901760
        %2048 = vmatpush1.msra.mxu0 %v2047
        %2049 = vmatprep.subr.mxu0 0.0
        %v2050 = vand.u32 %v1311, 4294901760
        %v2051 = vsub.f32 %v1311, %v2050
        %v2052 = vand.u32 %v2051, 4294901760
        %2053 = vmatpush1.msra.mxu0 %v2052
        %2054 = vmatprep.subr.mxu0 0.0
        %v2055 = vand.u32 %v1312, 4294901760
        %v2056 = vsub.f32 %v1312, %v2055
        %v2057 = vand.u32 %v2056, 4294901760
        %2058 = vmatpush1.msra.mxu0 %v2057
        %2059 = vmatprep.subr.mxu0 0.0
        %v2060 = vand.u32 %v1313, 4294901760
        %v2061 = vsub.f32 %v1313, %v2060
        %v2062 = vand.u32 %v2061, 4294901760
        %2063 = vmatpush1.msra.mxu0 %v2062
        %2064 = vmatprep.subr.mxu0 0.0
        %v2065 = vand.u32 %v1314, 4294901760
        %v2066 = vsub.f32 %v1314, %v2065
        %v2067 = vand.u32 %v2066, 4294901760
        %2068 = vmatpush1.msra.mxu0 %v2067
        %2069 = vmatprep.subr.mxu0 0.0
        %v2070 = vand.u32 %v1315, 4294901760
        %v2071 = vsub.f32 %v1315, %v2070
        %v2072 = vand.u32 %v2071, 4294901760
        %2073 = vmatpush1.msra.mxu0 %v2072
        %2074 = vmatprep.subr.mxu0 0.0
        %v2075 = vand.u32 %v1316, 4294901760
        %v2076 = vsub.f32 %v1316, %v2075
        %v2077 = vand.u32 %v2076, 4294901760
        %2078 = vmatpush1.msra.mxu0 %v2077
        %2079 = vmatprep.subr.mxu0 0.0
        %v2080 = vand.u32 %v1317, 4294901760
        %v2081 = vsub.f32 %v1317, %v2080
        %v2082 = vand.u32 %v2081, 4294901760
        %2083 = vmatpush1.msra.mxu0 %v2082
        %2084 = vmatprep.subr.mxu0 0.0
        %v2085 = vand.u32 %v1318, 4294901760
        %v2086 = vsub.f32 %v1318, %v2085
        %v2087 = vand.u32 %v2086, 4294901760
        %2088 = vmatpush1.msra.mxu0 %v2087
        %2089 = vmatprep.subr.mxu0 0.0
        %v2090 = vand.u32 %v1319, 4294901760
        %v2091 = vsub.f32 %v1319, %v2090
        %v2092 = vand.u32 %v2091, 4294901760
        %2093 = vmatpush1.msra.mxu0 %v2092
        %2094 = vmatprep.subr.mxu0 0.0
        %v2095 = vand.u32 %v1320, 4294901760
        %v2096 = vsub.f32 %v1320, %v2095
        %v2097 = vand.u32 %v2096, 4294901760
        %2098 = vmatpush1.msra.mxu0 %v2097
        %2099 = vmatprep.subr.mxu0 0.0
        %v2100 = vand.u32 %v1321, 4294901760
        %v2101 = vsub.f32 %v1321, %v2100
        %v2102 = vand.u32 %v2101, 4294901760
        %2103 = vmatpush1.msra.mxu0 %v2102
        %2104 = vmatprep.subr.mxu0 0.0
        %v2105 = vand.u32 %v1322, 4294901760
        %v2106 = vsub.f32 %v1322, %v2105
        %v2107 = vand.u32 %v2106, 4294901760
        %2108 = vmatpush1.msra.mxu0 %v2107
        %2109 = vmatprep.subr.mxu0 0.0
        %v2110 = vand.u32 %v1323, 4294901760
        %v2111 = vsub.f32 %v1323, %v2110
        %v2112 = vand.u32 %v2111, 4294901760
        %2113 = vmatpush1.msra.mxu0 %v2112
        %2114 = vmatprep.subr.mxu0 0.0
        %v2115 = vand.u32 %v1324, 4294901760
        %v2116 = vsub.f32 %v1324, %v2115
        %v2117 = vand.u32 %v2116, 4294901760
        %2118 = vmatpush1.msra.mxu0 %v2117
        %2119 = vmatprep.subr.mxu0 0.0
        %v2120 = vand.u32 %v1325, 4294901760
        %v2121 = vsub.f32 %v1325, %v2120
        %v2122 = vand.u32 %v2121, 4294901760
        %2123 = vmatpush1.msra.mxu0 %v2122
        %2124 = vmatprep.subr.mxu0 0.0
        %v2125 = vand.u32 %v1326, 4294901760
        %v2126 = vsub.f32 %v1326, %v2125
        %v2127 = vand.u32 %v2126, 4294901760
        %2128 = vmatpush1.msra.mxu0 %v2127
        %2129 = vmatprep.subr.mxu0 0.0
        %v2130 = vand.u32 %v1327, 4294901760
        %v2131 = vsub.f32 %v1327, %v2130
        %v2132 = vand.u32 %v2131, 4294901760
        %2133 = vmatpush1.msra.mxu0 %v2132
        %2134 = vmatprep.subr.mxu0 0.0
        %v2135 = vand.u32 %v1328, 4294901760
        %v2136 = vsub.f32 %v1328, %v2135
        %v2137 = vand.u32 %v2136, 4294901760
        %2138 = vmatpush1.msra.mxu0 %v2137
        %2139 = vmatprep.subr.mxu0 0.0
        %v2140 = vand.u32 %v1329, 4294901760
        %v2141 = vsub.f32 %v1329, %v2140
        %v2142 = vand.u32 %v2141, 4294901760
        %2143 = vmatpush1.msra.mxu0 %v2142
        %2144 = vmatprep.subr.mxu0 0.0
        %v2145 = vand.u32 %v1330, 4294901760
        %v2146 = vsub.f32 %v1330, %v2145
        %v2147 = vand.u32 %v2146, 4294901760
        %2148 = vmatpush1.msra.mxu0 %v2147
        %2149 = vmatprep.subr.mxu0 0.0
        %v2150 = vand.u32 %v1331, 4294901760
        %v2151 = vsub.f32 %v1331, %v2150
        %v2152 = vand.u32 %v2151, 4294901760
        %2153 = vmatpush1.msra.mxu0 %v2152
        %2154 = vmatprep.subr.mxu0 0.0
        %v2155 = vand.u32 %v1332, 4294901760
        %v2156 = vsub.f32 %v1332, %v2155
        %v2157 = vand.u32 %v2156, 4294901760
        %2158 = vmatpush1.msra.mxu0 %v2157
        %2159 = vmatprep.subr.mxu0 0.0
        %v2160 = vand.u32 %v1333, 4294901760
        %v2161 = vsub.f32 %v1333, %v2160
        %v2162 = vand.u32 %v2161, 4294901760
        %2163 = vmatpush1.msra.mxu0 %v2162
        %2164 = vmatprep.subr.mxu0 0.0
        %v2165 = vand.u32 %v1334, 4294901760
        %v2166 = vsub.f32 %v1334, %v2165
        %v2167 = vand.u32 %v2166, 4294901760
        %2168 = vmatpush1.msra.mxu0 %v2167
        %2169 = vmatprep.subr.mxu0 0.0
        %v2170 = vand.u32 %v1335, 4294901760
        %v2171 = vsub.f32 %v1335, %v2170
        %v2172 = vand.u32 %v2171, 4294901760
        %2173 = vmatpush1.msra.mxu0 %v2172
        %2174 = vmatprep.subr.mxu0 0.0
        %v2175 = vand.u32 %v1336, 4294901760
        %v2176 = vsub.f32 %v1336, %v2175
        %v2177 = vand.u32 %v2176, 4294901760
        %2178 = vmatpush1.msra.mxu0 %v2177
        %2179 = vmatprep.subr.mxu0 0.0
        %v2180 = vand.u32 %v1337, 4294901760
        %v2181 = vsub.f32 %v1337, %v2180
        %v2182 = vand.u32 %v2181, 4294901760
        %2183 = vmatpush1.msra.mxu0 %v2182
        %v2184 = vand.u32 %v1299, 4294901760
        %2185 = vmatprep.mubr.f32.mxu0 %v2184
        %v2186 = vand.u32 %v1298, 4294901760
        %2187 = vmatmul.mubr.f32.gmra.mrb[0].mxu0 %v2186
        %v2188 = vpop.f32.mrb[0].mxu0
        %v2189 = vadd.f32 %v2021, %v2188
        %v2190 = vpop.f32.mrb[0].mxu0
        %2191 = vdwg.mxu0
        %2192 = vmatprep.subr.mxu0 0.0
        %v2193 = vand.u32 %v1306, 4294901760
        %2194 = vmatpush1.msra.mxu0 %v2193
        %2195 = vmatprep.subr.mxu0 0.0
        %v2196 = vand.u32 %v1307, 4294901760
        %2197 = vmatpush1.msra.mxu0 %v2196
        %2198 = vmatprep.subr.mxu0 0.0
        %v2199 = vand.u32 %v1308, 4294901760
        %2200 = vmatpush1.msra.mxu0 %v2199
        %2201 = vmatprep.subr.mxu0 0.0
        %v2202 = vand.u32 %v1309, 4294901760
        %2203 = vmatpush1.msra.mxu0 %v2202
        %2204 = vmatprep.subr.mxu0 0.0
        %v2205 = vand.u32 %v1310, 4294901760
        %2206 = vmatpush1.msra.mxu0 %v2205
        %2207 = vmatprep.subr.mxu0 0.0
        %v2208 = vand.u32 %v1311, 4294901760
        %2209 = vmatpush1.msra.mxu0 %v2208
        %2210 = vmatprep.subr.mxu0 0.0
        %v2211 = vand.u32 %v1312, 4294901760
        %2212 = vmatpush1.msra.mxu0 %v2211
        %2213 = vmatprep.subr.mxu0 0.0
        %v2214 = vand.u32 %v1313, 4294901760
        %2215 = vmatpush1.msra.mxu0 %v2214
        %2216 = vmatprep.subr.mxu0 0.0
        %v2217 = vand.u32 %v1314, 4294901760
        %2218 = vmatpush1.msra.mxu0 %v2217
        %2219 = vmatprep.subr.mxu0 0.0
        %v2220 = vand.u32 %v1315, 4294901760
        %2221 = vmatpush1.msra.mxu0 %v2220
        %2222 = vmatprep.subr.mxu0 0.0
        %v2223 = vand.u32 %v1316, 4294901760
        %2224 = vmatpush1.msra.mxu0 %v2223
        %2225 = vmatprep.subr.mxu0 0.0
        %v2226 = vand.u32 %v1317, 4294901760
        %2227 = vmatpush1.msra.mxu0 %v2226
        %2228 = vmatprep.subr.mxu0 0.0
        %v2229 = vand.u32 %v1318, 4294901760
        %2230 = vmatpush1.msra.mxu0 %v2229
        %2231 = vmatprep.subr.mxu0 0.0
        %v2232 = vand.u32 %v1319, 4294901760
        %2233 = vmatpush1.msra.mxu0 %v2232
        %2234 = vmatprep.subr.mxu0 0.0
        %v2235 = vand.u32 %v1320, 4294901760
        %2236 = vmatpush1.msra.mxu0 %v2235
        %2237 = vmatprep.subr.mxu0 0.0
        %v2238 = vand.u32 %v1321, 4294901760
        %2239 = vmatpush1.msra.mxu0 %v2238
        %2240 = vmatprep.subr.mxu0 0.0
        %v2241 = vand.u32 %v1322, 4294901760
        %2242 = vmatpush1.msra.mxu0 %v2241
        %2243 = vmatprep.subr.mxu0 0.0
        %v2244 = vand.u32 %v1323, 4294901760
        %2245 = vmatpush1.msra.mxu0 %v2244
        %2246 = vmatprep.subr.mxu0 0.0
        %v2247 = vand.u32 %v1324, 4294901760
        %2248 = vmatpush1.msra.mxu0 %v2247
        %2249 = vmatprep.subr.mxu0 0.0
        %v2250 = vand.u32 %v1325, 4294901760
        %2251 = vmatpush1.msra.mxu0 %v2250
        %2252 = vmatprep.subr.mxu0 0.0
        %v2253 = vand.u32 %v1326, 4294901760
        %2254 = vmatpush1.msra.mxu0 %v2253
        %2255 = vmatprep.subr.mxu0 0.0
        %v2256 = vand.u32 %v1327, 4294901760
        %2257 = vmatpush1.msra.mxu0 %v2256
        %2258 = vmatprep.subr.mxu0 0.0
        %v2259 = vand.u32 %v1328, 4294901760
        %2260 = vmatpush1.msra.mxu0 %v2259
        %2261 = vmatprep.subr.mxu0 0.0
        %v2262 = vand.u32 %v1329, 4294901760
        %2263 = vmatpush1.msra.mxu0 %v2262
        %2264 = vmatprep.subr.mxu0 0.0
        %v2265 = vand.u32 %v1330, 4294901760
        %2266 = vmatpush1.msra.mxu0 %v2265
        %2267 = vmatprep.subr.mxu0 0.0
        %v2268 = vand.u32 %v1331, 4294901760
        %2269 = vmatpush1.msra.mxu0 %v2268
        %2270 = vmatprep.subr.mxu0 0.0
        %v2271 = vand.u32 %v1332, 4294901760
        %2272 = vmatpush1.msra.mxu0 %v2271
        %2273 = vmatprep.subr.mxu0 0.0
        %v2274 = vand.u32 %v1333, 4294901760
        %2275 = vmatpush1.msra.mxu0 %v2274
        %2276 = vmatprep.subr.mxu0 0.0
        %v2277 = vand.u32 %v1334, 4294901760
        %2278 = vmatpush1.msra.mxu0 %v2277
        %2279 = vmatprep.subr.mxu0 0.0
        %v2280 = vand.u32 %v1335, 4294901760
        %2281 = vmatpush1.msra.mxu0 %v2280
        %2282 = vmatprep.subr.mxu0 0.0
        %v2283 = vand.u32 %v1336, 4294901760
        %2284 = vmatpush1.msra.mxu0 %v2283
        %2285 = vmatprep.subr.mxu0 0.0
        %v2286 = vand.u32 %v1337, 4294901760
        %2287 = vmatpush1.msra.mxu0 %v2286
        %v2288 = vand.u32 %v1299, 4294901760
        %2289 = vmatprep.mubr.f32.mxu0 %v2288
        %v2290 = vand.u32 %v1298, 4294901760
        %2291 = vmatmul.mubr.f32.gmra.mrb[0].mxu0 %v2290
        %v2292 = vpop.f32.mrb[0].mxu0
        %v2293 = vadd.f32 %v2189, %v2292
        %v2294 = vpop.f32.mrb[0].mxu0
        %2295 = vdwg.mxu0
        %2296 = vmatprep.subr.mxu0 0.0
        %v2297 = vand.u32 %v1338, 4294901760
        %2298 = vmatpush1.msra.mxu0 %v2297
        %2299 = vmatprep.subr.mxu0 0.0
        %v2300 = vand.u32 %v1339, 4294901760
        %2301 = vmatpush1.msra.mxu0 %v2300
        %2302 = vmatprep.subr.mxu0 0.0
        %v2303 = vand.u32 %v1340, 4294901760
        %2304 = vmatpush1.msra.mxu0 %v2303
        %2305 = vmatprep.subr.mxu0 0.0
        %v2306 = vand.u32 %v1341, 4294901760
        %2307 = vmatpush1.msra.mxu0 %v2306
        %2308 = vmatprep.subr.mxu0 0.0
        %v2309 = vand.u32 %v1342, 4294901760
        %2310 = vmatpush1.msra.mxu0 %v2309
        %2311 = vmatprep.subr.mxu0 0.0
        %v2312 = vand.u32 %v1343, 4294901760
        %2313 = vmatpush1.msra.mxu0 %v2312
        %2314 = vmatprep.subr.mxu0 0.0
        %v2315 = vand.u32 %v1344, 4294901760
        %2316 = vmatpush1.msra.mxu0 %v2315
        %2317 = vmatprep.subr.mxu0 0.0
        %v2318 = vand.u32 %v1345, 4294901760
        %2319 = vmatpush1.msra.mxu0 %v2318
        %2320 = vmatprep.subr.mxu0 0.0
        %v2321 = vand.u32 %v1346, 4294901760
        %2322 = vmatpush1.msra.mxu0 %v2321
        %2323 = vmatprep.subr.mxu0 0.0
        %v2324 = vand.u32 %v1347, 4294901760
        %2325 = vmatpush1.msra.mxu0 %v2324
        %2326 = vmatprep.subr.mxu0 0.0
        %v2327 = vand.u32 %v1348, 4294901760
        %2328 = vmatpush1.msra.mxu0 %v2327
        %2329 = vmatprep.subr.mxu0 0.0
        %v2330 = vand.u32 %v1349, 4294901760
        %2331 = vmatpush1.msra.mxu0 %v2330
        %2332 = vmatprep.subr.mxu0 0.0
        %v2333 = vand.u32 %v1350, 4294901760
        %2334 = vmatpush1.msra.mxu0 %v2333
        %2335 = vmatprep.subr.mxu0 0.0
        %v2336 = vand.u32 %v1351, 4294901760
        %2337 = vmatpush1.msra.mxu0 %v2336
        %2338 = vmatprep.subr.mxu0 0.0
        %v2339 = vand.u32 %v1352, 4294901760
        %2340 = vmatpush1.msra.mxu0 %v2339
        %2341 = vmatprep.subr.mxu0 0.0
        %v2342 = vand.u32 %v1353, 4294901760
        %2343 = vmatpush1.msra.mxu0 %v2342
        %2344 = vmatprep.subr.mxu0 0.0
        %v2345 = vand.u32 %v1354, 4294901760
        %2346 = vmatpush1.msra.mxu0 %v2345
        %2347 = vmatprep.subr.mxu0 0.0
        %v2348 = vand.u32 %v1355, 4294901760
        %2349 = vmatpush1.msra.mxu0 %v2348
        %2350 = vmatprep.subr.mxu0 0.0
        %v2351 = vand.u32 %v1356, 4294901760
        %2352 = vmatpush1.msra.mxu0 %v2351
        %2353 = vmatprep.subr.mxu0 0.0
        %v2354 = vand.u32 %v1357, 4294901760
        %2355 = vmatpush1.msra.mxu0 %v2354
        %2356 = vmatprep.subr.mxu0 0.0
        %v2357 = vand.u32 %v1358, 4294901760
        %2358 = vmatpush1.msra.mxu0 %v2357
        %2359 = vmatprep.subr.mxu0 0.0
        %v2360 = vand.u32 %v1359, 4294901760
        %2361 = vmatpush1.msra.mxu0 %v2360
        %2362 = vmatprep.subr.mxu0 0.0
        %v2363 = vand.u32 %v1360, 4294901760
        %2364 = vmatpush1.msra.mxu0 %v2363
        %2365 = vmatprep.subr.mxu0 0.0
        %v2366 = vand.u32 %v1361, 4294901760
        %2367 = vmatpush1.msra.mxu0 %v2366
        %2368 = vmatprep.subr.mxu0 0.0
        %v2369 = vand.u32 %v1362, 4294901760
        %2370 = vmatpush1.msra.mxu0 %v2369
        %2371 = vmatprep.subr.mxu0 0.0
        %v2372 = vand.u32 %v1363, 4294901760
        %2373 = vmatpush1.msra.mxu0 %v2372
        %2374 = vmatprep.subr.mxu0 0.0
        %v2375 = vand.u32 %v1364, 4294901760
        %2376 = vmatpush1.msra.mxu0 %v2375
        %2377 = vmatprep.subr.mxu0 0.0
        %v2378 = vand.u32 %v1365, 4294901760
        %2379 = vmatpush1.msra.mxu0 %v2378
        %2380 = vmatprep.subr.mxu0 0.0
        %v2381 = vand.u32 %v1366, 4294901760
        %2382 = vmatpush1.msra.mxu0 %v2381
        %2383 = vmatprep.subr.mxu0 0.0
        %v2384 = vand.u32 %v1367, 4294901760
        %2385 = vmatpush1.msra.mxu0 %v2384
        %2386 = vmatprep.subr.mxu0 0.0
        %v2387 = vand.u32 %v1368, 4294901760
        %2388 = vmatpush1.msra.mxu0 %v2387
        %2389 = vmatprep.subr.mxu0 0.0
        %v2390 = vand.u32 %v1369, 4294901760
        %2391 = vmatpush1.msra.mxu0 %v2390
        %v2392 = vand.u32 %v1301, 4294901760
        %v2393 = vsub.f32 %v1301, %v2392
        %v2394 = vand.u32 %v2393, 4294901760
        %v2395 = vsub.f32 %v2393, %v2394
        %v2396 = vand.u32 %v2395, 4294901760
        %2397 = vmatprep.mubr.f32.mxu0 %v2396
        %v2398 = vand.u32 %v1300, 4294901760
        %v2399 = vsub.f32 %v1300, %v2398
        %v2400 = vand.u32 %v2399, 4294901760
        %v2401 = vsub.f32 %v2399, %v2400
        %v2402 = vand.u32 %v2401, 4294901760
        %2403 = vmatmul.mubr.f32.gmra.mrb[0].mxu0 %v2402
        %v2404 = vpop.f32.mrb[0].mxu0
        %v2405 = vadd.f32 %v2293, %v2404
        %v2406 = vpop.f32.mrb[0].mxu0
        %2407 = vdwg.mxu0
        %2408 = vmatprep.subr.mxu0 0.0
        %v2409 = vand.u32 %v1338, 4294901760
        %v2410 = vsub.f32 %v1338, %v2409
        %v2411 = vand.u32 %v2410, 4294901760
        %v2412 = vsub.f32 %v2410, %v2411
        %v2413 = vand.u32 %v2412, 4294901760
        %2414 = vmatpush1.msra.mxu0 %v2413
        %2415 = vmatprep.subr.mxu0 0.0
        %v2416 = vand.u32 %v1339, 4294901760
        %v2417 = vsub.f32 %v1339, %v2416
        %v2418 = vand.u32 %v2417, 4294901760
        %v2419 = vsub.f32 %v2417, %v2418
        %v2420 = vand.u32 %v2419, 4294901760
        %2421 = vmatpush1.msra.mxu0 %v2420
        %2422 = vmatprep.subr.mxu0 0.0
        %v2423 = vand.u32 %v1340, 4294901760
        %v2424 = vsub.f32 %v1340, %v2423
        %v2425 = vand.u32 %v2424, 4294901760
        %v2426 = vsub.f32 %v2424, %v2425
        %v2427 = vand.u32 %v2426, 4294901760
        %2428 = vmatpush1.msra.mxu0 %v2427
        %2429 = vmatprep.subr.mxu0 0.0
        %v2430 = vand.u32 %v1341, 4294901760
        %v2431 = vsub.f32 %v1341, %v2430
        %v2432 = vand.u32 %v2431, 4294901760
        %v2433 = vsub.f32 %v2431, %v2432
        %v2434 = vand.u32 %v2433, 4294901760
        %2435 = vmatpush1.msra.mxu0 %v2434
        %2436 = vmatprep.subr.mxu0 0.0
        %v2437 = vand.u32 %v1342, 4294901760
        %v2438 = vsub.f32 %v1342, %v2437
        %v2439 = vand.u32 %v2438, 4294901760
        %v2440 = vsub.f32 %v2438, %v2439
        %v2441 = vand.u32 %v2440, 4294901760
        %2442 = vmatpush1.msra.mxu0 %v2441
        %2443 = vmatprep.subr.mxu0 0.0
        %v2444 = vand.u32 %v1343, 4294901760
        %v2445 = vsub.f32 %v1343, %v2444
        %v2446 = vand.u32 %v2445, 4294901760
        %v2447 = vsub.f32 %v2445, %v2446
        %v2448 = vand.u32 %v2447, 4294901760
        %2449 = vmatpush1.msra.mxu0 %v2448
        %2450 = vmatprep.subr.mxu0 0.0
        %v2451 = vand.u32 %v1344, 4294901760
        %v2452 = vsub.f32 %v1344, %v2451
        %v2453 = vand.u32 %v2452, 4294901760
        %v2454 = vsub.f32 %v2452, %v2453
        %v2455 = vand.u32 %v2454, 4294901760
        %2456 = vmatpush1.msra.mxu0 %v2455
        %2457 = vmatprep.subr.mxu0 0.0
        %v2458 = vand.u32 %v1345, 4294901760
        %v2459 = vsub.f32 %v1345, %v2458
        %v2460 = vand.u32 %v2459, 4294901760
        %v2461 = vsub.f32 %v2459, %v2460
        %v2462 = vand.u32 %v2461, 4294901760
        %2463 = vmatpush1.msra.mxu0 %v2462
        %2464 = vmatprep.subr.mxu0 0.0
        %v2465 = vand.u32 %v1346, 4294901760
        %v2466 = vsub.f32 %v1346, %v2465
        %v2467 = vand.u32 %v2466, 4294901760
        %v2468 = vsub.f32 %v2466, %v2467
        %v2469 = vand.u32 %v2468, 4294901760
        %2470 = vmatpush1.msra.mxu0 %v2469
        %2471 = vmatprep.subr.mxu0 0.0
        %v2472 = vand.u32 %v1347, 4294901760
        %v2473 = vsub.f32 %v1347, %v2472
        %v2474 = vand.u32 %v2473, 4294901760
        %v2475 = vsub.f32 %v2473, %v2474
        %v2476 = vand.u32 %v2475, 4294901760
        %2477 = vmatpush1.msra.mxu0 %v2476
        %2478 = vmatprep.subr.mxu0 0.0
        %v2479 = vand.u32 %v1348, 4294901760
        %v2480 = vsub.f32 %v1348, %v2479
        %v2481 = vand.u32 %v2480, 4294901760
        %v2482 = vsub.f32 %v2480, %v2481
        %v2483 = vand.u32 %v2482, 4294901760
        %2484 = vmatpush1.msra.mxu0 %v2483
        %2485 = vmatprep.subr.mxu0 0.0
        %v2486 = vand.u32 %v1349, 4294901760
        %v2487 = vsub.f32 %v1349, %v2486
        %v2488 = vand.u32 %v2487, 4294901760
        %v2489 = vsub.f32 %v2487, %v2488
        %v2490 = vand.u32 %v2489, 4294901760
        %2491 = vmatpush1.msra.mxu0 %v2490
        %2492 = vmatprep.subr.mxu0 0.0
        %v2493 = vand.u32 %v1350, 4294901760
        %v2494 = vsub.f32 %v1350, %v2493
        %v2495 = vand.u32 %v2494, 4294901760
        %v2496 = vsub.f32 %v2494, %v2495
        %v2497 = vand.u32 %v2496, 4294901760
        %2498 = vmatpush1.msra.mxu0 %v2497
        %2499 = vmatprep.subr.mxu0 0.0
        %v2500 = vand.u32 %v1351, 4294901760
        %v2501 = vsub.f32 %v1351, %v2500
        %v2502 = vand.u32 %v2501, 4294901760
        %v2503 = vsub.f32 %v2501, %v2502
        %v2504 = vand.u32 %v2503, 4294901760
        %2505 = vmatpush1.msra.mxu0 %v2504
        %2506 = vmatprep.subr.mxu0 0.0
        %v2507 = vand.u32 %v1352, 4294901760
        %v2508 = vsub.f32 %v1352, %v2507
        %v2509 = vand.u32 %v2508, 4294901760
        %v2510 = vsub.f32 %v2508, %v2509
        %v2511 = vand.u32 %v2510, 4294901760
        %2512 = vmatpush1.msra.mxu0 %v2511
        %2513 = vmatprep.subr.mxu0 0.0
        %v2514 = vand.u32 %v1353, 4294901760
        %v2515 = vsub.f32 %v1353, %v2514
        %v2516 = vand.u32 %v2515, 4294901760
        %v2517 = vsub.f32 %v2515, %v2516
        %v2518 = vand.u32 %v2517, 4294901760
        %2519 = vmatpush1.msra.mxu0 %v2518
        %2520 = vmatprep.subr.mxu0 0.0
        %v2521 = vand.u32 %v1354, 4294901760
        %v2522 = vsub.f32 %v1354, %v2521
        %v2523 = vand.u32 %v2522, 4294901760
        %v2524 = vsub.f32 %v2522, %v2523
        %v2525 = vand.u32 %v2524, 4294901760
        %2526 = vmatpush1.msra.mxu0 %v2525
        %2527 = vmatprep.subr.mxu0 0.0
        %v2528 = vand.u32 %v1355, 4294901760
        %v2529 = vsub.f32 %v1355, %v2528
        %v2530 = vand.u32 %v2529, 4294901760
        %v2531 = vsub.f32 %v2529, %v2530
        %v2532 = vand.u32 %v2531, 4294901760
        %2533 = vmatpush1.msra.mxu0 %v2532
        %2534 = vmatprep.subr.mxu0 0.0
        %v2535 = vand.u32 %v1356, 4294901760
        %v2536 = vsub.f32 %v1356, %v2535
        %v2537 = vand.u32 %v2536, 4294901760
        %v2538 = vsub.f32 %v2536, %v2537
        %v2539 = vand.u32 %v2538, 4294901760
        %2540 = vmatpush1.msra.mxu0 %v2539
        %2541 = vmatprep.subr.mxu0 0.0
        %v2542 = vand.u32 %v1357, 4294901760
        %v2543 = vsub.f32 %v1357, %v2542
        %v2544 = vand.u32 %v2543, 4294901760
        %v2545 = vsub.f32 %v2543, %v2544
        %v2546 = vand.u32 %v2545, 4294901760
        %2547 = vmatpush1.msra.mxu0 %v2546
        %2548 = vmatprep.subr.mxu0 0.0
        %v2549 = vand.u32 %v1358, 4294901760
        %v2550 = vsub.f32 %v1358, %v2549
        %v2551 = vand.u32 %v2550, 4294901760
        %v2552 = vsub.f32 %v2550, %v2551
        %v2553 = vand.u32 %v2552, 4294901760
        %2554 = vmatpush1.msra.mxu0 %v2553
        %2555 = vmatprep.subr.mxu0 0.0
        %v2556 = vand.u32 %v1359, 4294901760
        %v2557 = vsub.f32 %v1359, %v2556
        %v2558 = vand.u32 %v2557, 4294901760
        %v2559 = vsub.f32 %v2557, %v2558
        %v2560 = vand.u32 %v2559, 4294901760
        %2561 = vmatpush1.msra.mxu0 %v2560
        %2562 = vmatprep.subr.mxu0 0.0
        %v2563 = vand.u32 %v1360, 4294901760
        %v2564 = vsub.f32 %v1360, %v2563
        %v2565 = vand.u32 %v2564, 4294901760
        %v2566 = vsub.f32 %v2564, %v2565
        %v2567 = vand.u32 %v2566, 4294901760
        %2568 = vmatpush1.msra.mxu0 %v2567
        %2569 = vmatprep.subr.mxu0 0.0
        %v2570 = vand.u32 %v1361, 4294901760
        %v2571 = vsub.f32 %v1361, %v2570
        %v2572 = vand.u32 %v2571, 4294901760
        %v2573 = vsub.f32 %v2571, %v2572
        %v2574 = vand.u32 %v2573, 4294901760
        %2575 = vmatpush1.msra.mxu0 %v2574
        %2576 = vmatprep.subr.mxu0 0.0
        %v2577 = vand.u32 %v1362, 4294901760
        %v2578 = vsub.f32 %v1362, %v2577
        %v2579 = vand.u32 %v2578, 4294901760
        %v2580 = vsub.f32 %v2578, %v2579
        %v2581 = vand.u32 %v2580, 4294901760
        %2582 = vmatpush1.msra.mxu0 %v2581
        %2583 = vmatprep.subr.mxu0 0.0
        %v2584 = vand.u32 %v1363, 4294901760
        %v2585 = vsub.f32 %v1363, %v2584
        %v2586 = vand.u32 %v2585, 4294901760
        %v2587 = vsub.f32 %v2585, %v2586
        %v2588 = vand.u32 %v2587, 4294901760
        %2589 = vmatpush1.msra.mxu0 %v2588
        %2590 = vmatprep.subr.mxu0 0.0
        %v2591 = vand.u32 %v1364, 4294901760
        %v2592 = vsub.f32 %v1364, %v2591
        %v2593 = vand.u32 %v2592, 4294901760
        %v2594 = vsub.f32 %v2592, %v2593
        %v2595 = vand.u32 %v2594, 4294901760
        %2596 = vmatpush1.msra.mxu0 %v2595
        %2597 = vmatprep.subr.mxu0 0.0
        %v2598 = vand.u32 %v1365, 4294901760
        %v2599 = vsub.f32 %v1365, %v2598
        %v2600 = vand.u32 %v2599, 4294901760
        %v2601 = vsub.f32 %v2599, %v2600
        %v2602 = vand.u32 %v2601, 4294901760
        %2603 = vmatpush1.msra.mxu0 %v2602
        %2604 = vmatprep.subr.mxu0 0.0
        %v2605 = vand.u32 %v1366, 4294901760
        %v2606 = vsub.f32 %v1366, %v2605
        %v2607 = vand.u32 %v2606, 4294901760
        %v2608 = vsub.f32 %v2606, %v2607
        %v2609 = vand.u32 %v2608, 4294901760
        %2610 = vmatpush1.msra.mxu0 %v2609
        %2611 = vmatprep.subr.mxu0 0.0
        %v2612 = vand.u32 %v1367, 4294901760
        %v2613 = vsub.f32 %v1367, %v2612
        %v2614 = vand.u32 %v2613, 4294901760
        %v2615 = vsub.f32 %v2613, %v2614
        %v2616 = vand.u32 %v2615, 4294901760
        %2617 = vmatpush1.msra.mxu0 %v2616
        %2618 = vmatprep.subr.mxu0 0.0
        %v2619 = vand.u32 %v1368, 4294901760
        %v2620 = vsub.f32 %v1368, %v2619
        %v2621 = vand.u32 %v2620, 4294901760
        %v2622 = vsub.f32 %v2620, %v2621
        %v2623 = vand.u32 %v2622, 4294901760
        %2624 = vmatpush1.msra.mxu0 %v2623
        %2625 = vmatprep.subr.mxu0 0.0
        %v2626 = vand.u32 %v1369, 4294901760
        %v2627 = vsub.f32 %v1369, %v2626
        %v2628 = vand.u32 %v2627, 4294901760
        %v2629 = vsub.f32 %v2627, %v2628
        %v2630 = vand.u32 %v2629, 4294901760
        %2631 = vmatpush1.msra.mxu0 %v2630
        %v2632 = vand.u32 %v1301, 4294901760
        %2633 = vmatprep.mubr.f32.mxu0 %v2632
        %v2634 = vand.u32 %v1300, 4294901760
        %2635 = vmatmul.mubr.f32.gmra.mrb[0].mxu0 %v2634
        %v2636 = vpop.f32.mrb[0].mxu0
        %v2637 = vadd.f32 %v2405, %v2636
        %v2638 = vpop.f32.mrb[0].mxu0
        %2639 = vdwg.mxu0
        %2640 = vmatprep.subr.mxu0 0.0
        %v2641 = vand.u32 %v1338, 4294901760
        %v2642 = vsub.f32 %v1338, %v2641
        %2643 = vmatpush1.msra.mxu0 %v2642
        %2644 = vmatprep.subr.mxu0 0.0
        %v2645 = vand.u32 %v1339, 4294901760
        %v2646 = vsub.f32 %v1339, %v2645
        %2647 = vmatpush1.msra.mxu0 %v2646
        %2648 = vmatprep.subr.mxu0 0.0
        %v2649 = vand.u32 %v1340, 4294901760
        %v2650 = vsub.f32 %v1340, %v2649
        %2651 = vmatpush1.msra.mxu0 %v2650
        %2652 = vmatprep.subr.mxu0 0.0
        %v2653 = vand.u32 %v1341, 4294901760
        %v2654 = vsub.f32 %v1341, %v2653
        %2655 = vmatpush1.msra.mxu0 %v2654
        %2656 = vmatprep.subr.mxu0 0.0
        %v2657 = vand.u32 %v1342, 4294901760
        %v2658 = vsub.f32 %v1342, %v2657
        %2659 = vmatpush1.msra.mxu0 %v2658
        %2660 = vmatprep.subr.mxu0 0.0
        %v2661 = vand.u32 %v1343, 4294901760
        %v2662 = vsub.f32 %v1343, %v2661
        %2663 = vmatpush1.msra.mxu0 %v2662
        %2664 = vmatprep.subr.mxu0 0.0
        %v2665 = vand.u32 %v1344, 4294901760
        %v2666 = vsub.f32 %v1344, %v2665
        %2667 = vmatpush1.msra.mxu0 %v2666
        %2668 = vmatprep.subr.mxu0 0.0
        %v2669 = vand.u32 %v1345, 4294901760
        %v2670 = vsub.f32 %v1345, %v2669
        %2671 = vmatpush1.msra.mxu0 %v2670
        %2672 = vmatprep.subr.mxu0 0.0
        %v2673 = vand.u32 %v1346, 4294901760
        %v2674 = vsub.f32 %v1346, %v2673
        %2675 = vmatpush1.msra.mxu0 %v2674
        %2676 = vmatprep.subr.mxu0 0.0
        %v2677 = vand.u32 %v1347, 4294901760
        %v2678 = vsub.f32 %v1347, %v2677
        %2679 = vmatpush1.msra.mxu0 %v2678
        %2680 = vmatprep.subr.mxu0 0.0
        %v2681 = vand.u32 %v1348, 4294901760
        %v2682 = vsub.f32 %v1348, %v2681
        %2683 = vmatpush1.msra.mxu0 %v2682
        %2684 = vmatprep.subr.mxu0 0.0
        %v2685 = vand.u32 %v1349, 4294901760
        %v2686 = vsub.f32 %v1349, %v2685
        %2687 = vmatpush1.msra.mxu0 %v2686
        %2688 = vmatprep.subr.mxu0 0.0
        %v2689 = vand.u32 %v1350, 4294901760
        %v2690 = vsub.f32 %v1350, %v2689
        %2691 = vmatpush1.msra.mxu0 %v2690
        %2692 = vmatprep.subr.mxu0 0.0
        %v2693 = vand.u32 %v1351, 4294901760
        %v2694 = vsub.f32 %v1351, %v2693
        %2695 = vmatpush1.msra.mxu0 %v2694
        %2696 = vmatprep.subr.mxu0 0.0
        %v2697 = vand.u32 %v1352, 4294901760
        %v2698 = vsub.f32 %v1352, %v2697
        %2699 = vmatpush1.msra.mxu0 %v2698
        %2700 = vmatprep.subr.mxu0 0.0
        %v2701 = vand.u32 %v1353, 4294901760
        %v2702 = vsub.f32 %v1353, %v2701
        %2703 = vmatpush1.msra.mxu0 %v2702
        %2704 = vmatprep.subr.mxu0 0.0
        %v2705 = vand.u32 %v1354, 4294901760
        %v2706 = vsub.f32 %v1354, %v2705
        %2707 = vmatpush1.msra.mxu0 %v2706
        %2708 = vmatprep.subr.mxu0 0.0
        %v2709 = vand.u32 %v1355, 4294901760
        %v2710 = vsub.f32 %v1355, %v2709
        %2711 = vmatpush1.msra.mxu0 %v2710
        %2712 = vmatprep.subr.mxu0 0.0
        %v2713 = vand.u32 %v1356, 4294901760
        %v2714 = vsub.f32 %v1356, %v2713
        %2715 = vmatpush1.msra.mxu0 %v2714
        %2716 = vmatprep.subr.mxu0 0.0
        %v2717 = vand.u32 %v1357, 4294901760
        %v2718 = vsub.f32 %v1357, %v2717
        %2719 = vmatpush1.msra.mxu0 %v2718
        %2720 = vmatprep.subr.mxu0 0.0
        %v2721 = vand.u32 %v1358, 4294901760
        %v2722 = vsub.f32 %v1358, %v2721
        %2723 = vmatpush1.msra.mxu0 %v2722
        %2724 = vmatprep.subr.mxu0 0.0
        %v2725 = vand.u32 %v1359, 4294901760
        %v2726 = vsub.f32 %v1359, %v2725
        %2727 = vmatpush1.msra.mxu0 %v2726
        %2728 = vmatprep.subr.mxu0 0.0
        %v2729 = vand.u32 %v1360, 4294901760
        %v2730 = vsub.f32 %v1360, %v2729
        %2731 = vmatpush1.msra.mxu0 %v2730
        %2732 = vmatprep.subr.mxu0 0.0
        %v2733 = vand.u32 %v1361, 4294901760
        %v2734 = vsub.f32 %v1361, %v2733
        %2735 = vmatpush1.msra.mxu0 %v2734
        %2736 = vmatprep.subr.mxu0 0.0
        %v2737 = vand.u32 %v1362, 4294901760
        %v2738 = vsub.f32 %v1362, %v2737
        %2739 = vmatpush1.msra.mxu0 %v2738
        %2740 = vmatprep.subr.mxu0 0.0
        %v2741 = vand.u32 %v1363, 4294901760
        %v2742 = vsub.f32 %v1363, %v2741
        %2743 = vmatpush1.msra.mxu0 %v2742
        %2744 = vmatprep.subr.mxu0 0.0
        %v2745 = vand.u32 %v1364, 4294901760
        %v2746 = vsub.f32 %v1364, %v2745
        %2747 = vmatpush1.msra.mxu0 %v2746
        %2748 = vmatprep.subr.mxu0 0.0
        %v2749 = vand.u32 %v1365, 4294901760
        %v2750 = vsub.f32 %v1365, %v2749
        %2751 = vmatpush1.msra.mxu0 %v2750
        %2752 = vmatprep.subr.mxu0 0.0
        %v2753 = vand.u32 %v1366, 4294901760
        %v2754 = vsub.f32 %v1366, %v2753
        %2755 = vmatpush1.msra.mxu0 %v2754
        %2756 = vmatprep.subr.mxu0 0.0
        %v2757 = vand.u32 %v1367, 4294901760
        %v2758 = vsub.f32 %v1367, %v2757
        %2759 = vmatpush1.msra.mxu0 %v2758
        %2760 = vmatprep.subr.mxu0 0.0
        %v2761 = vand.u32 %v1368, 4294901760
        %v2762 = vsub.f32 %v1368, %v2761
        %2763 = vmatpush1.msra.mxu0 %v2762
        %2764 = vmatprep.subr.mxu0 0.0
        %v2765 = vand.u32 %v1369, 4294901760
        %v2766 = vsub.f32 %v1369, %v2765
        %2767 = vmatpush1.msra.mxu0 %v2766
        %v2768 = vand.u32 %v1301, 4294901760
        %v2769 = vsub.f32 %v1301, %v2768
        %2770 = vmatprep.mubr.f32.mxu0 %v2769
        %v2771 = vand.u32 %v1300, 4294901760
        %v2772 = vsub.f32 %v1300, %v2771
        %2773 = vmatmul.mubr.f32.gmra.mrb[0].mxu0 %v2772
        %v2774 = vpop.f32.mrb[0].mxu0
        %v2775 = vadd.f32 %v2637, %v2774
        %v2776 = vpop.f32.mrb[0].mxu0
        %2777 = vdwg.mxu0
        %2778 = vmatprep.subr.mxu0 0.0
        %v2779 = vand.u32 %v1338, 4294901760
        %2780 = vmatpush1.msra.mxu0 %v2779
        %2781 = vmatprep.subr.mxu0 0.0
        %v2782 = vand.u32 %v1339, 4294901760
        %2783 = vmatpush1.msra.mxu0 %v2782
        %2784 = vmatprep.subr.mxu0 0.0
        %v2785 = vand.u32 %v1340, 4294901760
        %2786 = vmatpush1.msra.mxu0 %v2785
        %2787 = vmatprep.subr.mxu0 0.0
        %v2788 = vand.u32 %v1341, 4294901760
        %2789 = vmatpush1.msra.mxu0 %v2788
        %2790 = vmatprep.subr.mxu0 0.0
        %v2791 = vand.u32 %v1342, 4294901760
        %2792 = vmatpush1.msra.mxu0 %v2791
        %2793 = vmatprep.subr.mxu0 0.0
        %v2794 = vand.u32 %v1343, 4294901760
        %2795 = vmatpush1.msra.mxu0 %v2794
        %2796 = vmatprep.subr.mxu0 0.0
        %v2797 = vand.u32 %v1344, 4294901760
        %2798 = vmatpush1.msra.mxu0 %v2797
        %2799 = vmatprep.subr.mxu0 0.0
        %v2800 = vand.u32 %v1345, 4294901760
        %2801 = vmatpush1.msra.mxu0 %v2800
        %2802 = vmatprep.subr.mxu0 0.0
        %v2803 = vand.u32 %v1346, 4294901760
        %2804 = vmatpush1.msra.mxu0 %v2803
        %2805 = vmatprep.subr.mxu0 0.0
        %v2806 = vand.u32 %v1347, 4294901760
        %2807 = vmatpush1.msra.mxu0 %v2806
        %2808 = vmatprep.subr.mxu0 0.0
        %v2809 = vand.u32 %v1348, 4294901760
        %2810 = vmatpush1.msra.mxu0 %v2809
        %2811 = vmatprep.subr.mxu0 0.0
        %v2812 = vand.u32 %v1349, 4294901760
        %2813 = vmatpush1.msra.mxu0 %v2812
        %2814 = vmatprep.subr.mxu0 0.0
        %v2815 = vand.u32 %v1350, 4294901760
        %2816 = vmatpush1.msra.mxu0 %v2815
        %2817 = vmatprep.subr.mxu0 0.0
        %v2818 = vand.u32 %v1351, 4294901760
        %2819 = vmatpush1.msra.mxu0 %v2818
        %2820 = vmatprep.subr.mxu0 0.0
        %v2821 = vand.u32 %v1352, 4294901760
        %2822 = vmatpush1.msra.mxu0 %v2821
        %2823 = vmatprep.subr.mxu0 0.0
        %v2824 = vand.u32 %v1353, 4294901760
        %2825 = vmatpush1.msra.mxu0 %v2824
        %2826 = vmatprep.subr.mxu0 0.0
        %v2827 = vand.u32 %v1354, 4294901760
        %2828 = vmatpush1.msra.mxu0 %v2827
        %2829 = vmatprep.subr.mxu0 0.0
        %v2830 = vand.u32 %v1355, 4294901760
        %2831 = vmatpush1.msra.mxu0 %v2830
        %2832 = vmatprep.subr.mxu0 0.0
        %v2833 = vand.u32 %v1356, 4294901760
        %2834 = vmatpush1.msra.mxu0 %v2833
        %2835 = vmatprep.subr.mxu0 0.0
        %v2836 = vand.u32 %v1357, 4294901760
        %2837 = vmatpush1.msra.mxu0 %v2836
        %2838 = vmatprep.subr.mxu0 0.0
        %v2839 = vand.u32 %v1358, 4294901760
        %2840 = vmatpush1.msra.mxu0 %v2839
        %2841 = vmatprep.subr.mxu0 0.0
        %v2842 = vand.u32 %v1359, 4294901760
        %2843 = vmatpush1.msra.mxu0 %v2842
        %2844 = vmatprep.subr.mxu0 0.0
        %v2845 = vand.u32 %v1360, 4294901760
        %2846 = vmatpush1.msra.mxu0 %v2845
        %2847 = vmatprep.subr.mxu0 0.0
        %v2848 = vand.u32 %v1361, 4294901760
        %2849 = vmatpush1.msra.mxu0 %v2848
        %2850 = vmatprep.subr.mxu0 0.0
        %v2851 = vand.u32 %v1362, 4294901760
        %2852 = vmatpush1.msra.mxu0 %v2851
        %2853 = vmatprep.subr.mxu0 0.0
        %v2854 = vand.u32 %v1363, 4294901760
        %2855 = vmatpush1.msra.mxu0 %v2854
        %2856 = vmatprep.subr.mxu0 0.0
        %v2857 = vand.u32 %v1364, 4294901760
        %2858 = vmatpush1.msra.mxu0 %v2857
        %2859 = vmatprep.subr.mxu0 0.0
        %v2860 = vand.u32 %v1365, 4294901760
        %2861 = vmatpush1.msra.mxu0 %v2860
        %2862 = vmatprep.subr.mxu0 0.0
        %v2863 = vand.u32 %v1366, 4294901760
        %2864 = vmatpush1.msra.mxu0 %v2863
        %2865 = vmatprep.subr.mxu0 0.0
        %v2866 = vand.u32 %v1367, 4294901760
        %2867 = vmatpush1.msra.mxu0 %v2866
        %2868 = vmatprep.subr.mxu0 0.0
        %v2869 = vand.u32 %v1368, 4294901760
        %2870 = vmatpush1.msra.mxu0 %v2869
        %2871 = vmatprep.subr.mxu0 0.0
        %v2872 = vand.u32 %v1369, 4294901760
        %2873 = vmatpush1.msra.mxu0 %v2872
        %v2874 = vand.u32 %v1301, 4294901760
        %v2875 = vsub.f32 %v1301, %v2874
        %v2876 = vand.u32 %v2875, 4294901760
        %2877 = vmatprep.mubr.f32.mxu0 %v2876
        %v2878 = vand.u32 %v1300, 4294901760
        %v2879 = vsub.f32 %v1300, %v2878
        %v2880 = vand.u32 %v2879, 4294901760
        %2881 = vmatmul.mubr.f32.gmra.mrb[0].mxu0 %v2880
        %v2882 = vpop.f32.mrb[0].mxu0
        %v2883 = vadd.f32 %v2775, %v2882
        %v2884 = vpop.f32.mrb[0].mxu0
        %2885 = vdwg.mxu0
        %2886 = vmatprep.subr.mxu0 0.0
        %v2887 = vand.u32 %v1338, 4294901760
        %v2888 = vsub.f32 %v1338, %v2887
        %v2889 = vand.u32 %v2888, 4294901760
        %2890 = vmatpush1.msra.mxu0 %v2889
        %2891 = vmatprep.subr.mxu0 0.0
        %v2892 = vand.u32 %v1339, 4294901760
        %v2893 = vsub.f32 %v1339, %v2892
        %v2894 = vand.u32 %v2893, 4294901760
        %2895 = vmatpush1.msra.mxu0 %v2894
        %2896 = vmatprep.subr.mxu0 0.0
        %v2897 = vand.u32 %v1340, 4294901760
        %v2898 = vsub.f32 %v1340, %v2897
        %v2899 = vand.u32 %v2898, 4294901760
        %2900 = vmatpush1.msra.mxu0 %v2899
        %2901 = vmatprep.subr.mxu0 0.0
        %v2902 = vand.u32 %v1341, 4294901760
        %v2903 = vsub.f32 %v1341, %v2902
        %v2904 = vand.u32 %v2903, 4294901760
        %2905 = vmatpush1.msra.mxu0 %v2904
        %2906 = vmatprep.subr.mxu0 0.0
        %v2907 = vand.u32 %v1342, 4294901760
        %v2908 = vsub.f32 %v1342, %v2907
        %v2909 = vand.u32 %v2908, 4294901760
        %2910 = vmatpush1.msra.mxu0 %v2909
        %2911 = vmatprep.subr.mxu0 0.0
        %v2912 = vand.u32 %v1343, 4294901760
        %v2913 = vsub.f32 %v1343, %v2912
        %v2914 = vand.u32 %v2913, 4294901760
        %2915 = vmatpush1.msra.mxu0 %v2914
        %2916 = vmatprep.subr.mxu0 0.0
        %v2917 = vand.u32 %v1344, 4294901760
        %v2918 = vsub.f32 %v1344, %v2917
        %v2919 = vand.u32 %v2918, 4294901760
        %2920 = vmatpush1.msra.mxu0 %v2919
        %2921 = vmatprep.subr.mxu0 0.0
        %v2922 = vand.u32 %v1345, 4294901760
        %v2923 = vsub.f32 %v1345, %v2922
        %v2924 = vand.u32 %v2923, 4294901760
        %2925 = vmatpush1.msra.mxu0 %v2924
        %2926 = vmatprep.subr.mxu0 0.0
        %v2927 = vand.u32 %v1346, 4294901760
        %v2928 = vsub.f32 %v1346, %v2927
        %v2929 = vand.u32 %v2928, 4294901760
        %2930 = vmatpush1.msra.mxu0 %v2929
        %2931 = vmatprep.subr.mxu0 0.0
        %v2932 = vand.u32 %v1347, 4294901760
        %v2933 = vsub.f32 %v1347, %v2932
        %v2934 = vand.u32 %v2933, 4294901760
        %2935 = vmatpush1.msra.mxu0 %v2934
        %2936 = vmatprep.subr.mxu0 0.0
        %v2937 = vand.u32 %v1348, 4294901760
        %v2938 = vsub.f32 %v1348, %v2937
        %v2939 = vand.u32 %v2938, 4294901760
        %2940 = vmatpush1.msra.mxu0 %v2939
        %2941 = vmatprep.subr.mxu0 0.0
        %v2942 = vand.u32 %v1349, 4294901760
        %v2943 = vsub.f32 %v1349, %v2942
        %v2944 = vand.u32 %v2943, 4294901760
        %2945 = vmatpush1.msra.mxu0 %v2944
        %2946 = vmatprep.subr.mxu0 0.0
        %v2947 = vand.u32 %v1350, 4294901760
        %v2948 = vsub.f32 %v1350, %v2947
        %v2949 = vand.u32 %v2948, 4294901760
        %2950 = vmatpush1.msra.mxu0 %v2949
        %2951 = vmatprep.subr.mxu0 0.0
        %v2952 = vand.u32 %v1351, 4294901760
        %v2953 = vsub.f32 %v1351, %v2952
        %v2954 = vand.u32 %v2953, 4294901760
        %2955 = vmatpush1.msra.mxu0 %v2954
        %2956 = vmatprep.subr.mxu0 0.0
        %v2957 = vand.u32 %v1352, 4294901760
        %v2958 = vsub.f32 %v1352, %v2957
        %v2959 = vand.u32 %v2958, 4294901760
        %2960 = vmatpush1.msra.mxu0 %v2959
        %2961 = vmatprep.subr.mxu0 0.0
        %v2962 = vand.u32 %v1353, 4294901760
        %v2963 = vsub.f32 %v1353, %v2962
        %v2964 = vand.u32 %v2963, 4294901760
        %2965 = vmatpush1.msra.mxu0 %v2964
        %2966 = vmatprep.subr.mxu0 0.0
        %v2967 = vand.u32 %v1354, 4294901760
        %v2968 = vsub.f32 %v1354, %v2967
        %v2969 = vand.u32 %v2968, 4294901760
        %2970 = vmatpush1.msra.mxu0 %v2969
        %2971 = vmatprep.subr.mxu0 0.0
        %v2972 = vand.u32 %v1355, 4294901760
        %v2973 = vsub.f32 %v1355, %v2972
        %v2974 = vand.u32 %v2973, 4294901760
        %2975 = vmatpush1.msra.mxu0 %v2974
        %2976 = vmatprep.subr.mxu0 0.0
        %v2977 = vand.u32 %v1356, 4294901760
        %v2978 = vsub.f32 %v1356, %v2977
        %v2979 = vand.u32 %v2978, 4294901760
        %2980 = vmatpush1.msra.mxu0 %v2979
        %2981 = vmatprep.subr.mxu0 0.0
        %v2982 = vand.u32 %v1357, 4294901760
        %v2983 = vsub.f32 %v1357, %v2982
        %v2984 = vand.u32 %v2983, 4294901760
        %2985 = vmatpush1.msra.mxu0 %v2984
        %2986 = vmatprep.subr.mxu0 0.0
        %v2987 = vand.u32 %v1358, 4294901760
        %v2988 = vsub.f32 %v1358, %v2987
        %v2989 = vand.u32 %v2988, 4294901760
        %2990 = vmatpush1.msra.mxu0 %v2989
        %2991 = vmatprep.subr.mxu0 0.0
        %v2992 = vand.u32 %v1359, 4294901760
        %v2993 = vsub.f32 %v1359, %v2992
        %v2994 = vand.u32 %v2993, 4294901760
        %2995 = vmatpush1.msra.mxu0 %v2994
        %2996 = vmatprep.subr.mxu0 0.0
        %v2997 = vand.u32 %v1360, 4294901760
        %v2998 = vsub.f32 %v1360, %v2997
        %v2999 = vand.u32 %v2998, 4294901760
        %3000 = vmatpush1.msra.mxu0 %v2999
        %3001 = vmatprep.subr.mxu0 0.0
        %v3002 = vand.u32 %v1361, 4294901760
        %v3003 = vsub.f32 %v1361, %v3002
        %v3004 = vand.u32 %v3003, 4294901760
        %3005 = vmatpush1.msra.mxu0 %v3004
        %3006 = vmatprep.subr.mxu0 0.0
        %v3007 = vand.u32 %v1362, 4294901760
        %v3008 = vsub.f32 %v1362, %v3007
        %v3009 = vand.u32 %v3008, 4294901760
        %3010 = vmatpush1.msra.mxu0 %v3009
        %3011 = vmatprep.subr.mxu0 0.0
        %v3012 = vand.u32 %v1363, 4294901760
        %v3013 = vsub.f32 %v1363, %v3012
        %v3014 = vand.u32 %v3013, 4294901760
        %3015 = vmatpush1.msra.mxu0 %v3014
        %3016 = vmatprep.subr.mxu0 0.0
        %v3017 = vand.u32 %v1364, 4294901760
        %v3018 = vsub.f32 %v1364, %v3017
        %v3019 = vand.u32 %v3018, 4294901760
        %3020 = vmatpush1.msra.mxu0 %v3019
        %3021 = vmatprep.subr.mxu0 0.0
        %v3022 = vand.u32 %v1365, 4294901760
        %v3023 = vsub.f32 %v1365, %v3022
        %v3024 = vand.u32 %v3023, 4294901760
        %3025 = vmatpush1.msra.mxu0 %v3024
        %3026 = vmatprep.subr.mxu0 0.0
        %v3027 = vand.u32 %v1366, 4294901760
        %v3028 = vsub.f32 %v1366, %v3027
        %v3029 = vand.u32 %v3028, 4294901760
        %3030 = vmatpush1.msra.mxu0 %v3029
        %3031 = vmatprep.subr.mxu0 0.0
        %v3032 = vand.u32 %v1367, 4294901760
        %v3033 = vsub.f32 %v1367, %v3032
        %v3034 = vand.u32 %v3033, 4294901760
        %3035 = vmatpush1.msra.mxu0 %v3034
        %3036 = vmatprep.subr.mxu0 0.0
        %v3037 = vand.u32 %v1368, 4294901760
        %v3038 = vsub.f32 %v1368, %v3037
        %v3039 = vand.u32 %v3038, 4294901760
        %3040 = vmatpush1.msra.mxu0 %v3039
        %3041 = vmatprep.subr.mxu0 0.0
        %v3042 = vand.u32 %v1369, 4294901760
        %v3043 = vsub.f32 %v1369, %v3042
        %v3044 = vand.u32 %v3043, 4294901760
        %3045 = vmatpush1.msra.mxu0 %v3044
        %v3046 = vand.u32 %v1301, 4294901760
        %3047 = vmatprep.mubr.f32.mxu0 %v3046
        %v3048 = vand.u32 %v1300, 4294901760
        %3049 = vmatmul.mubr.f32.gmra.mrb[0].mxu0 %v3048
        %v3050 = vpop.f32.mrb[0].mxu0
        %v3051 = vadd.f32 %v2883, %v3050
        %v3052 = vpop.f32.mrb[0].mxu0
        %3053 = vdwg.mxu0
        %3054 = vmatprep.subr.mxu0 0.0
        %v3055 = vand.u32 %v1338, 4294901760
        %3056 = vmatpush1.msra.mxu0 %v3055
        %3057 = vmatprep.subr.mxu0 0.0
        %v3058 = vand.u32 %v1339, 4294901760
        %3059 = vmatpush1.msra.mxu0 %v3058
        %3060 = vmatprep.subr.mxu0 0.0
        %v3061 = vand.u32 %v1340, 4294901760
        %3062 = vmatpush1.msra.mxu0 %v3061
        %3063 = vmatprep.subr.mxu0 0.0
        %v3064 = vand.u32 %v1341, 4294901760
        %3065 = vmatpush1.msra.mxu0 %v3064
        %3066 = vmatprep.subr.mxu0 0.0
        %v3067 = vand.u32 %v1342, 4294901760
        %3068 = vmatpush1.msra.mxu0 %v3067
        %3069 = vmatprep.subr.mxu0 0.0
        %v3070 = vand.u32 %v1343, 4294901760
        %3071 = vmatpush1.msra.mxu0 %v3070
        %3072 = vmatprep.subr.mxu0 0.0
        %v3073 = vand.u32 %v1344, 4294901760
        %3074 = vmatpush1.msra.mxu0 %v3073
        %3075 = vmatprep.subr.mxu0 0.0
        %v3076 = vand.u32 %v1345, 4294901760
        %3077 = vmatpush1.msra.mxu0 %v3076
        %3078 = vmatprep.subr.mxu0 0.0
        %v3079 = vand.u32 %v1346, 4294901760
        %3080 = vmatpush1.msra.mxu0 %v3079
        %3081 = vmatprep.subr.mxu0 0.0
        %v3082 = vand.u32 %v1347, 4294901760
        %3083 = vmatpush1.msra.mxu0 %v3082
        %3084 = vmatprep.subr.mxu0 0.0
        %v3085 = vand.u32 %v1348, 4294901760
        %3086 = vmatpush1.msra.mxu0 %v3085
        %3087 = vmatprep.subr.mxu0 0.0
        %v3088 = vand.u32 %v1349, 4294901760
        %3089 = vmatpush1.msra.mxu0 %v3088
        %3090 = vmatprep.subr.mxu0 0.0
        %v3091 = vand.u32 %v1350, 4294901760
        %3092 = vmatpush1.msra.mxu0 %v3091
        %3093 = vmatprep.subr.mxu0 0.0
        %v3094 = vand.u32 %v1351, 4294901760
        %3095 = vmatpush1.msra.mxu0 %v3094
        %3096 = vmatprep.subr.mxu0 0.0
        %v3097 = vand.u32 %v1352, 4294901760
        %3098 = vmatpush1.msra.mxu0 %v3097
        %3099 = vmatprep.subr.mxu0 0.0
        %v3100 = vand.u32 %v1353, 4294901760
        %3101 = vmatpush1.msra.mxu0 %v3100
        %3102 = vmatprep.subr.mxu0 0.0
        %v3103 = vand.u32 %v1354, 4294901760
        %3104 = vmatpush1.msra.mxu0 %v3103
        %3105 = vmatprep.subr.mxu0 0.0
        %v3106 = vand.u32 %v1355, 4294901760
        %3107 = vmatpush1.msra.mxu0 %v3106
        %3108 = vmatprep.subr.mxu0 0.0
        %v3109 = vand.u32 %v1356, 4294901760
        %3110 = vmatpush1.msra.mxu0 %v3109
        %3111 = vmatprep.subr.mxu0 0.0
        %v3112 = vand.u32 %v1357, 4294901760
        %3113 = vmatpush1.msra.mxu0 %v3112
        %3114 = vmatprep.subr.mxu0 0.0
        %v3115 = vand.u32 %v1358, 4294901760
        %3116 = vmatpush1.msra.mxu0 %v3115
        %3117 = vmatprep.subr.mxu0 0.0
        %v3118 = vand.u32 %v1359, 4294901760
        %3119 = vmatpush1.msra.mxu0 %v3118
        %3120 = vmatprep.subr.mxu0 0.0
        %v3121 = vand.u32 %v1360, 4294901760
        %3122 = vmatpush1.msra.mxu0 %v3121
        %3123 = vmatprep.subr.mxu0 0.0
        %v3124 = vand.u32 %v1361, 4294901760
        %3125 = vmatpush1.msra.mxu0 %v3124
        %3126 = vmatprep.subr.mxu0 0.0
        %v3127 = vand.u32 %v1362, 4294901760
        %3128 = vmatpush1.msra.mxu0 %v3127
        %3129 = vmatprep.subr.mxu0 0.0
        %v3130 = vand.u32 %v1363, 4294901760
        %3131 = vmatpush1.msra.mxu0 %v3130
        %3132 = vmatprep.subr.mxu0 0.0
        %v3133 = vand.u32 %v1364, 4294901760
        %3134 = vmatpush1.msra.mxu0 %v3133
        %3135 = vmatprep.subr.mxu0 0.0
        %v3136 = vand.u32 %v1365, 4294901760
        %3137 = vmatpush1.msra.mxu0 %v3136
        %3138 = vmatprep.subr.mxu0 0.0
        %v3139 = vand.u32 %v1366, 4294901760
        %3140 = vmatpush1.msra.mxu0 %v3139
        %3141 = vmatprep.subr.mxu0 0.0
        %v3142 = vand.u32 %v1367, 4294901760
        %3143 = vmatpush1.msra.mxu0 %v3142
        %3144 = vmatprep.subr.mxu0 0.0
        %v3145 = vand.u32 %v1368, 4294901760
        %3146 = vmatpush1.msra.mxu0 %v3145
        %3147 = vmatprep.subr.mxu0 0.0
        %v3148 = vand.u32 %v1369, 4294901760
        %3149 = vmatpush1.msra.mxu0 %v3148
        %v3150 = vand.u32 %v1301, 4294901760
        %3151 = vmatprep.mubr.f32.mxu0 %v3150
        %v3152 = vand.u32 %v1300, 4294901760
        %3153 = vmatmul.mubr.f32.gmra.mrb[0].mxu0 %v3152
        %v3154 = vpop.f32.mrb[0].mxu0
        %v3155 = vadd.f32 %v3051, %v3154
        %v3156 = vpop.f32.mrb[0].mxu0
        %3157 = vdwg.mxu0
        %3158 = vmatprep.subr.mxu0 0.0
        %v3159 = vand.u32 %v1370, 4294901760
        %3160 = vmatpush1.msra.mxu0 %v3159
        %3161 = vmatprep.subr.mxu0 0.0
        %v3162 = vand.u32 %v1371, 4294901760
        %3163 = vmatpush1.msra.mxu0 %v3162
        %3164 = vmatprep.subr.mxu0 0.0
        %v3165 = vand.u32 %v1372, 4294901760
        %3166 = vmatpush1.msra.mxu0 %v3165
        %3167 = vmatprep.subr.mxu0 0.0
        %v3168 = vand.u32 %v1373, 4294901760
        %3169 = vmatpush1.msra.mxu0 %v3168
        %3170 = vmatprep.subr.mxu0 0.0
        %v3171 = vand.u32 %v1374, 4294901760
        %3172 = vmatpush1.msra.mxu0 %v3171
        %3173 = vmatprep.subr.mxu0 0.0
        %v3174 = vand.u32 %v1375, 4294901760
        %3175 = vmatpush1.msra.mxu0 %v3174
        %3176 = vmatprep.subr.mxu0 0.0
        %v3177 = vand.u32 %v1376, 4294901760
        %3178 = vmatpush1.msra.mxu0 %v3177
        %3179 = vmatprep.subr.mxu0 0.0
        %v3180 = vand.u32 %v1377, 4294901760
        %3181 = vmatpush1.msra.mxu0 %v3180
        %3182 = vmatprep.subr.mxu0 0.0
        %v3183 = vand.u32 %v1378, 4294901760
        %3184 = vmatpush1.msra.mxu0 %v3183
        %3185 = vmatprep.subr.mxu0 0.0
        %v3186 = vand.u32 %v1379, 4294901760
        %3187 = vmatpush1.msra.mxu0 %v3186
        %3188 = vmatprep.subr.mxu0 0.0
        %v3189 = vand.u32 %v1380, 4294901760
        %3190 = vmatpush1.msra.mxu0 %v3189
        %3191 = vmatprep.subr.mxu0 0.0
        %v3192 = vand.u32 %v1381, 4294901760
        %3193 = vmatpush1.msra.mxu0 %v3192
        %3194 = vmatprep.subr.mxu0 0.0
        %v3195 = vand.u32 %v1382, 4294901760
        %3196 = vmatpush1.msra.mxu0 %v3195
        %3197 = vmatprep.subr.mxu0 0.0
        %v3198 = vand.u32 %v1383, 4294901760
        %3199 = vmatpush1.msra.mxu0 %v3198
        %3200 = vmatprep.subr.mxu0 0.0
        %v3201 = vand.u32 %v1384, 4294901760
        %3202 = vmatpush1.msra.mxu0 %v3201
        %3203 = vmatprep.subr.mxu0 0.0
        %v3204 = vand.u32 %v1385, 4294901760
        %3205 = vmatpush1.msra.mxu0 %v3204
        %3206 = vmatprep.subr.mxu0 0.0
        %v3207 = vand.u32 %v1386, 4294901760
        %3208 = vmatpush1.msra.mxu0 %v3207
        %3209 = vmatprep.subr.mxu0 0.0
        %v3210 = vand.u32 %v1387, 4294901760
        %3211 = vmatpush1.msra.mxu0 %v3210
        %3212 = vmatprep.subr.mxu0 0.0
        %v3213 = vand.u32 %v1388, 4294901760
        %3214 = vmatpush1.msra.mxu0 %v3213
        %3215 = vmatprep.subr.mxu0 0.0
        %v3216 = vand.u32 %v1389, 4294901760
        %3217 = vmatpush1.msra.mxu0 %v3216
        %3218 = vmatprep.subr.mxu0 0.0
        %v3219 = vand.u32 %v1390, 4294901760
        %3220 = vmatpush1.msra.mxu0 %v3219
        %3221 = vmatprep.subr.mxu0 0.0
        %v3222 = vand.u32 %v1391, 4294901760
        %3223 = vmatpush1.msra.mxu0 %v3222
        %3224 = vmatprep.subr.mxu0 0.0
        %v3225 = vand.u32 %v1392, 4294901760
        %3226 = vmatpush1.msra.mxu0 %v3225
        %3227 = vmatprep.subr.mxu0 0.0
        %v3228 = vand.u32 %v1393, 4294901760
        %3229 = vmatpush1.msra.mxu0 %v3228
        %3230 = vmatprep.subr.mxu0 0.0
        %v3231 = vand.u32 %v1394, 4294901760
        %3232 = vmatpush1.msra.mxu0 %v3231
        %3233 = vmatprep.subr.mxu0 0.0
        %v3234 = vand.u32 %v1395, 4294901760
        %3235 = vmatpush1.msra.mxu0 %v3234
        %3236 = vmatprep.subr.mxu0 0.0
        %v3237 = vand.u32 %v1396, 4294901760
        %3238 = vmatpush1.msra.mxu0 %v3237
        %3239 = vmatprep.subr.mxu0 0.0
        %v3240 = vand.u32 %v1397, 4294901760
        %3241 = vmatpush1.msra.mxu0 %v3240
        %3242 = vmatprep.subr.mxu0 0.0
        %v3243 = vand.u32 %v1398, 4294901760
        %3244 = vmatpush1.msra.mxu0 %v3243
        %3245 = vmatprep.subr.mxu0 0.0
        %v3246 = vand.u32 %v1399, 4294901760
        %3247 = vmatpush1.msra.mxu0 %v3246
        %3248 = vmatprep.subr.mxu0 0.0
        %v3249 = vand.u32 %v1400, 4294901760
        %3250 = vmatpush1.msra.mxu0 %v3249
        %3251 = vmatprep.subr.mxu0 0.0
        %v3252 = vand.u32 %v1401, 4294901760
        %3253 = vmatpush1.msra.mxu0 %v3252
        %v3254 = vand.u32 %v1303, 4294901760
        %v3255 = vsub.f32 %v1303, %v3254
        %v3256 = vand.u32 %v3255, 4294901760
        %v3257 = vsub.f32 %v3255, %v3256
        %v3258 = vand.u32 %v3257, 4294901760
        %3259 = vmatprep.mubr.f32.mxu0 %v3258
        %v3260 = vand.u32 %v1302, 4294901760
        %v3261 = vsub.f32 %v1302, %v3260
        %v3262 = vand.u32 %v3261, 4294901760
        %v3263 = vsub.f32 %v3261, %v3262
        %v3264 = vand.u32 %v3263, 4294901760
        %3265 = vmatmul.mubr.f32.gmra.mrb[0].mxu0 %v3264
        %v3266 = vpop.f32.mrb[0].mxu0
        %v3267 = vadd.f32 %v3155, %v3266
        %v3268 = vpop.f32.mrb[0].mxu0
        %3269 = vdwg.mxu0
        %3270 = vmatprep.subr.mxu0 0.0
        %v3271 = vand.u32 %v1370, 4294901760
        %v3272 = vsub.f32 %v1370, %v3271
        %v3273 = vand.u32 %v3272, 4294901760
        %v3274 = vsub.f32 %v3272, %v3273
        %v3275 = vand.u32 %v3274, 4294901760
        %3276 = vmatpush1.msra.mxu0 %v3275
        %3277 = vmatprep.subr.mxu0 0.0
        %v3278 = vand.u32 %v1371, 4294901760
        %v3279 = vsub.f32 %v1371, %v3278
        %v3280 = vand.u32 %v3279, 4294901760
        %v3281 = vsub.f32 %v3279, %v3280
        %v3282 = vand.u32 %v3281, 4294901760
        %3283 = vmatpush1.msra.mxu0 %v3282
        %3284 = vmatprep.subr.mxu0 0.0
        %v3285 = vand.u32 %v1372, 4294901760
        %v3286 = vsub.f32 %v1372, %v3285
        %v3287 = vand.u32 %v3286, 4294901760
        %v3288 = vsub.f32 %v3286, %v3287
        %v3289 = vand.u32 %v3288, 4294901760
        %3290 = vmatpush1.msra.mxu0 %v3289
        %3291 = vmatprep.subr.mxu0 0.0
        %v3292 = vand.u32 %v1373, 4294901760
        %v3293 = vsub.f32 %v1373, %v3292
        %v3294 = vand.u32 %v3293, 4294901760
        %v3295 = vsub.f32 %v3293, %v3294
        %v3296 = vand.u32 %v3295, 4294901760
        %3297 = vmatpush1.msra.mxu0 %v3296
        %3298 = vmatprep.subr.mxu0 0.0
        %v3299 = vand.u32 %v1374, 4294901760
        %v3300 = vsub.f32 %v1374, %v3299
        %v3301 = vand.u32 %v3300, 4294901760
        %v3302 = vsub.f32 %v3300, %v3301
        %v3303 = vand.u32 %v3302, 4294901760
        %3304 = vmatpush1.msra.mxu0 %v3303
        %3305 = vmatprep.subr.mxu0 0.0
        %v3306 = vand.u32 %v1375, 4294901760
        %v3307 = vsub.f32 %v1375, %v3306
        %v3308 = vand.u32 %v3307, 4294901760
        %v3309 = vsub.f32 %v3307, %v3308
        %v3310 = vand.u32 %v3309, 4294901760
        %3311 = vmatpush1.msra.mxu0 %v3310
        %3312 = vmatprep.subr.mxu0 0.0
        %v3313 = vand.u32 %v1376, 4294901760
        %v3314 = vsub.f32 %v1376, %v3313
        %v3315 = vand.u32 %v3314, 4294901760
        %v3316 = vsub.f32 %v3314, %v3315
        %v3317 = vand.u32 %v3316, 4294901760
        %3318 = vmatpush1.msra.mxu0 %v3317
        %3319 = vmatprep.subr.mxu0 0.0
        %v3320 = vand.u32 %v1377, 4294901760
        %v3321 = vsub.f32 %v1377, %v3320
        %v3322 = vand.u32 %v3321, 4294901760
        %v3323 = vsub.f32 %v3321, %v3322
        %v3324 = vand.u32 %v3323, 4294901760
        %3325 = vmatpush1.msra.mxu0 %v3324
        %3326 = vmatprep.subr.mxu0 0.0
        %v3327 = vand.u32 %v1378, 4294901760
        %v3328 = vsub.f32 %v1378, %v3327
        %v3329 = vand.u32 %v3328, 4294901760
        %v3330 = vsub.f32 %v3328, %v3329
        %v3331 = vand.u32 %v3330, 4294901760
        %3332 = vmatpush1.msra.mxu0 %v3331
        %3333 = vmatprep.subr.mxu0 0.0
        %v3334 = vand.u32 %v1379, 4294901760
        %v3335 = vsub.f32 %v1379, %v3334
        %v3336 = vand.u32 %v3335, 4294901760
        %v3337 = vsub.f32 %v3335, %v3336
        %v3338 = vand.u32 %v3337, 4294901760
        %3339 = vmatpush1.msra.mxu0 %v3338
        %3340 = vmatprep.subr.mxu0 0.0
        %v3341 = vand.u32 %v1380, 4294901760
        %v3342 = vsub.f32 %v1380, %v3341
        %v3343 = vand.u32 %v3342, 4294901760
        %v3344 = vsub.f32 %v3342, %v3343
        %v3345 = vand.u32 %v3344, 4294901760
        %3346 = vmatpush1.msra.mxu0 %v3345
        %3347 = vmatprep.subr.mxu0 0.0
        %v3348 = vand.u32 %v1381, 4294901760
        %v3349 = vsub.f32 %v1381, %v3348
        %v3350 = vand.u32 %v3349, 4294901760
        %v3351 = vsub.f32 %v3349, %v3350
        %v3352 = vand.u32 %v3351, 4294901760
        %3353 = vmatpush1.msra.mxu0 %v3352
        %3354 = vmatprep.subr.mxu0 0.0
        %v3355 = vand.u32 %v1382, 4294901760
        %v3356 = vsub.f32 %v1382, %v3355
        %v3357 = vand.u32 %v3356, 4294901760
        %v3358 = vsub.f32 %v3356, %v3357
        %v3359 = vand.u32 %v3358, 4294901760
        %3360 = vmatpush1.msra.mxu0 %v3359
        %3361 = vmatprep.subr.mxu0 0.0
        %v3362 = vand.u32 %v1383, 4294901760
        %v3363 = vsub.f32 %v1383, %v3362
        %v3364 = vand.u32 %v3363, 4294901760
        %v3365 = vsub.f32 %v3363, %v3364
        %v3366 = vand.u32 %v3365, 4294901760
        %3367 = vmatpush1.msra.mxu0 %v3366
        %3368 = vmatprep.subr.mxu0 0.0
        %v3369 = vand.u32 %v1384, 4294901760
        %v3370 = vsub.f32 %v1384, %v3369
        %v3371 = vand.u32 %v3370, 4294901760
        %v3372 = vsub.f32 %v3370, %v3371
        %v3373 = vand.u32 %v3372, 4294901760
        %3374 = vmatpush1.msra.mxu0 %v3373
        %3375 = vmatprep.subr.mxu0 0.0
        %v3376 = vand.u32 %v1385, 4294901760
        %v3377 = vsub.f32 %v1385, %v3376
        %v3378 = vand.u32 %v3377, 4294901760
        %v3379 = vsub.f32 %v3377, %v3378
        %v3380 = vand.u32 %v3379, 4294901760
        %3381 = vmatpush1.msra.mxu0 %v3380
        %3382 = vmatprep.subr.mxu0 0.0
        %v3383 = vand.u32 %v1386, 4294901760
        %v3384 = vsub.f32 %v1386, %v3383
        %v3385 = vand.u32 %v3384, 4294901760
        %v3386 = vsub.f32 %v3384, %v3385
        %v3387 = vand.u32 %v3386, 4294901760
        %3388 = vmatpush1.msra.mxu0 %v3387
        %3389 = vmatprep.subr.mxu0 0.0
        %v3390 = vand.u32 %v1387, 4294901760
        %v3391 = vsub.f32 %v1387, %v3390
        %v3392 = vand.u32 %v3391, 4294901760
        %v3393 = vsub.f32 %v3391, %v3392
        %v3394 = vand.u32 %v3393, 4294901760
        %3395 = vmatpush1.msra.mxu0 %v3394
        %3396 = vmatprep.subr.mxu0 0.0
        %v3397 = vand.u32 %v1388, 4294901760
        %v3398 = vsub.f32 %v1388, %v3397
        %v3399 = vand.u32 %v3398, 4294901760
        %v3400 = vsub.f32 %v3398, %v3399
        %v3401 = vand.u32 %v3400, 4294901760
        %3402 = vmatpush1.msra.mxu0 %v3401
        %3403 = vmatprep.subr.mxu0 0.0
        %v3404 = vand.u32 %v1389, 4294901760
        %v3405 = vsub.f32 %v1389, %v3404
        %v3406 = vand.u32 %v3405, 4294901760
        %v3407 = vsub.f32 %v3405, %v3406
        %v3408 = vand.u32 %v3407, 4294901760
        %3409 = vmatpush1.msra.mxu0 %v3408
        %3410 = vmatprep.subr.mxu0 0.0
        %v3411 = vand.u32 %v1390, 4294901760
        %v3412 = vsub.f32 %v1390, %v3411
        %v3413 = vand.u32 %v3412, 4294901760
        %v3414 = vsub.f32 %v3412, %v3413
        %v3415 = vand.u32 %v3414, 4294901760
        %3416 = vmatpush1.msra.mxu0 %v3415
        %3417 = vmatprep.subr.mxu0 0.0
        %v3418 = vand.u32 %v1391, 4294901760
        %v3419 = vsub.f32 %v1391, %v3418
        %v3420 = vand.u32 %v3419, 4294901760
        %v3421 = vsub.f32 %v3419, %v3420
        %v3422 = vand.u32 %v3421, 4294901760
        %3423 = vmatpush1.msra.mxu0 %v3422
        %3424 = vmatprep.subr.mxu0 0.0
        %v3425 = vand.u32 %v1392, 4294901760
        %v3426 = vsub.f32 %v1392, %v3425
        %v3427 = vand.u32 %v3426, 4294901760
        %v3428 = vsub.f32 %v3426, %v3427
        %v3429 = vand.u32 %v3428, 4294901760
        %3430 = vmatpush1.msra.mxu0 %v3429
        %3431 = vmatprep.subr.mxu0 0.0
        %v3432 = vand.u32 %v1393, 4294901760
        %v3433 = vsub.f32 %v1393, %v3432
        %v3434 = vand.u32 %v3433, 4294901760
        %v3435 = vsub.f32 %v3433, %v3434
        %v3436 = vand.u32 %v3435, 4294901760
        %3437 = vmatpush1.msra.mxu0 %v3436
        %3438 = vmatprep.subr.mxu0 0.0
        %v3439 = vand.u32 %v1394, 4294901760
        %v3440 = vsub.f32 %v1394, %v3439
        %v3441 = vand.u32 %v3440, 4294901760
        %v3442 = vsub.f32 %v3440, %v3441
        %v3443 = vand.u32 %v3442, 4294901760
        %3444 = vmatpush1.msra.mxu0 %v3443
        %3445 = vmatprep.subr.mxu0 0.0
        %v3446 = vand.u32 %v1395, 4294901760
        %v3447 = vsub.f32 %v1395, %v3446
        %v3448 = vand.u32 %v3447, 4294901760
        %v3449 = vsub.f32 %v3447, %v3448
        %v3450 = vand.u32 %v3449, 4294901760
        %3451 = vmatpush1.msra.mxu0 %v3450
        %3452 = vmatprep.subr.mxu0 0.0
        %v3453 = vand.u32 %v1396, 4294901760
        %v3454 = vsub.f32 %v1396, %v3453
        %v3455 = vand.u32 %v3454, 4294901760
        %v3456 = vsub.f32 %v3454, %v3455
        %v3457 = vand.u32 %v3456, 4294901760
        %3458 = vmatpush1.msra.mxu0 %v3457
        %3459 = vmatprep.subr.mxu0 0.0
        %v3460 = vand.u32 %v1397, 4294901760
        %v3461 = vsub.f32 %v1397, %v3460
        %v3462 = vand.u32 %v3461, 4294901760
        %v3463 = vsub.f32 %v3461, %v3462
        %v3464 = vand.u32 %v3463, 4294901760
        %3465 = vmatpush1.msra.mxu0 %v3464
        %3466 = vmatprep.subr.mxu0 0.0
        %v3467 = vand.u32 %v1398, 4294901760
        %v3468 = vsub.f32 %v1398, %v3467
        %v3469 = vand.u32 %v3468, 4294901760
        %v3470 = vsub.f32 %v3468, %v3469
        %v3471 = vand.u32 %v3470, 4294901760
        %3472 = vmatpush1.msra.mxu0 %v3471
        %3473 = vmatprep.subr.mxu0 0.0
        %v3474 = vand.u32 %v1399, 4294901760
        %v3475 = vsub.f32 %v1399, %v3474
        %v3476 = vand.u32 %v3475, 4294901760
        %v3477 = vsub.f32 %v3475, %v3476
        %v3478 = vand.u32 %v3477, 4294901760
        %3479 = vmatpush1.msra.mxu0 %v3478
        %3480 = vmatprep.subr.mxu0 0.0
        %v3481 = vand.u32 %v1400, 4294901760
        %v3482 = vsub.f32 %v1400, %v3481
        %v3483 = vand.u32 %v3482, 4294901760
        %v3484 = vsub.f32 %v3482, %v3483
        %v3485 = vand.u32 %v3484, 4294901760
        %3486 = vmatpush1.msra.mxu0 %v3485
        %3487 = vmatprep.subr.mxu0 0.0
        %v3488 = vand.u32 %v1401, 4294901760
        %v3489 = vsub.f32 %v1401, %v3488
        %v3490 = vand.u32 %v3489, 4294901760
        %v3491 = vsub.f32 %v3489, %v3490
        %v3492 = vand.u32 %v3491, 4294901760
        %3493 = vmatpush1.msra.mxu0 %v3492
        %v3494 = vand.u32 %v1303, 4294901760
        %3495 = vmatprep.mubr.f32.mxu0 %v3494
        %v3496 = vand.u32 %v1302, 4294901760
        %3497 = vmatmul.mubr.f32.gmra.mrb[0].mxu0 %v3496
        %v3498 = vpop.f32.mrb[0].mxu0
        %v3499 = vadd.f32 %v3267, %v3498
        %v3500 = vpop.f32.mrb[0].mxu0
        %3501 = vdwg.mxu0
        %3502 = vmatprep.subr.mxu0 0.0
        %v3503 = vand.u32 %v1370, 4294901760
        %v3504 = vsub.f32 %v1370, %v3503
        %3505 = vmatpush1.msra.mxu0 %v3504
        %3506 = vmatprep.subr.mxu0 0.0
        %v3507 = vand.u32 %v1371, 4294901760
        %v3508 = vsub.f32 %v1371, %v3507
        %3509 = vmatpush1.msra.mxu0 %v3508
        %3510 = vmatprep.subr.mxu0 0.0
        %v3511 = vand.u32 %v1372, 4294901760
        %v3512 = vsub.f32 %v1372, %v3511
        %3513 = vmatpush1.msra.mxu0 %v3512
        %3514 = vmatprep.subr.mxu0 0.0
        %v3515 = vand.u32 %v1373, 4294901760
        %v3516 = vsub.f32 %v1373, %v3515
        %3517 = vmatpush1.msra.mxu0 %v3516
        %3518 = vmatprep.subr.mxu0 0.0
        %v3519 = vand.u32 %v1374, 4294901760
        %v3520 = vsub.f32 %v1374, %v3519
        %3521 = vmatpush1.msra.mxu0 %v3520
        %3522 = vmatprep.subr.mxu0 0.0
        %v3523 = vand.u32 %v1375, 4294901760
        %v3524 = vsub.f32 %v1375, %v3523
        %3525 = vmatpush1.msra.mxu0 %v3524
        %3526 = vmatprep.subr.mxu0 0.0
        %v3527 = vand.u32 %v1376, 4294901760
        %v3528 = vsub.f32 %v1376, %v3527
        %3529 = vmatpush1.msra.mxu0 %v3528
        %3530 = vmatprep.subr.mxu0 0.0
        %v3531 = vand.u32 %v1377, 4294901760
        %v3532 = vsub.f32 %v1377, %v3531
        %3533 = vmatpush1.msra.mxu0 %v3532
        %3534 = vmatprep.subr.mxu0 0.0
        %v3535 = vand.u32 %v1378, 4294901760
        %v3536 = vsub.f32 %v1378, %v3535
        %3537 = vmatpush1.msra.mxu0 %v3536
        %3538 = vmatprep.subr.mxu0 0.0
        %v3539 = vand.u32 %v1379, 4294901760
        %v3540 = vsub.f32 %v1379, %v3539
        %3541 = vmatpush1.msra.mxu0 %v3540
        %3542 = vmatprep.subr.mxu0 0.0
        %v3543 = vand.u32 %v1380, 4294901760
        %v3544 = vsub.f32 %v1380, %v3543
        %3545 = vmatpush1.msra.mxu0 %v3544
        %3546 = vmatprep.subr.mxu0 0.0
        %v3547 = vand.u32 %v1381, 4294901760
        %v3548 = vsub.f32 %v1381, %v3547
        %3549 = vmatpush1.msra.mxu0 %v3548
        %3550 = vmatprep.subr.mxu0 0.0
        %v3551 = vand.u32 %v1382, 4294901760
        %v3552 = vsub.f32 %v1382, %v3551
        %3553 = vmatpush1.msra.mxu0 %v3552
        %3554 = vmatprep.subr.mxu0 0.0
        %v3555 = vand.u32 %v1383, 4294901760
        %v3556 = vsub.f32 %v1383, %v3555
        %3557 = vmatpush1.msra.mxu0 %v3556
        %3558 = vmatprep.subr.mxu0 0.0
        %v3559 = vand.u32 %v1384, 4294901760
        %v3560 = vsub.f32 %v1384, %v3559
        %3561 = vmatpush1.msra.mxu0 %v3560
        %3562 = vmatprep.subr.mxu0 0.0
        %v3563 = vand.u32 %v1385, 4294901760
        %v3564 = vsub.f32 %v1385, %v3563
        %3565 = vmatpush1.msra.mxu0 %v3564
        %3566 = vmatprep.subr.mxu0 0.0
        %v3567 = vand.u32 %v1386, 4294901760
        %v3568 = vsub.f32 %v1386, %v3567
        %3569 = vmatpush1.msra.mxu0 %v3568
        %3570 = vmatprep.subr.mxu0 0.0
        %v3571 = vand.u32 %v1387, 4294901760
        %v3572 = vsub.f32 %v1387, %v3571
        %3573 = vmatpush1.msra.mxu0 %v3572
        %3574 = vmatprep.subr.mxu0 0.0
        %v3575 = vand.u32 %v1388, 4294901760
        %v3576 = vsub.f32 %v1388, %v3575
        %3577 = vmatpush1.msra.mxu0 %v3576
        %3578 = vmatprep.subr.mxu0 0.0
        %v3579 = vand.u32 %v1389, 4294901760
        %v3580 = vsub.f32 %v1389, %v3579
        %3581 = vmatpush1.msra.mxu0 %v3580
        %3582 = vmatprep.subr.mxu0 0.0
        %v3583 = vand.u32 %v1390, 4294901760
        %v3584 = vsub.f32 %v1390, %v3583
        %3585 = vmatpush1.msra.mxu0 %v3584
        %3586 = vmatprep.subr.mxu0 0.0
        %v3587 = vand.u32 %v1391, 4294901760
        %v3588 = vsub.f32 %v1391, %v3587
        %3589 = vmatpush1.msra.mxu0 %v3588
        %3590 = vmatprep.subr.mxu0 0.0
        %v3591 = vand.u32 %v1392, 4294901760
        %v3592 = vsub.f32 %v1392, %v3591
        %3593 = vmatpush1.msra.mxu0 %v3592
        %3594 = vmatprep.subr.mxu0 0.0
        %v3595 = vand.u32 %v1393, 4294901760
        %v3596 = vsub.f32 %v1393, %v3595
        %3597 = vmatpush1.msra.mxu0 %v3596
        %3598 = vmatprep.subr.mxu0 0.0
        %v3599 = vand.u32 %v1394, 4294901760
        %v3600 = vsub.f32 %v1394, %v3599
        %3601 = vmatpush1.msra.mxu0 %v3600
        %3602 = vmatprep.subr.mxu0 0.0
        %v3603 = vand.u32 %v1395, 4294901760
        %v3604 = vsub.f32 %v1395, %v3603
        %3605 = vmatpush1.msra.mxu0 %v3604
        %3606 = vmatprep.subr.mxu0 0.0
        %v3607 = vand.u32 %v1396, 4294901760
        %v3608 = vsub.f32 %v1396, %v3607
        %3609 = vmatpush1.msra.mxu0 %v3608
        %3610 = vmatprep.subr.mxu0 0.0
        %v3611 = vand.u32 %v1397, 4294901760
        %v3612 = vsub.f32 %v1397, %v3611
        %3613 = vmatpush1.msra.mxu0 %v3612
        %3614 = vmatprep.subr.mxu0 0.0
        %v3615 = vand.u32 %v1398, 4294901760
        %v3616 = vsub.f32 %v1398, %v3615
        %3617 = vmatpush1.msra.mxu0 %v3616
        %3618 = vmatprep.subr.mxu0 0.0
        %v3619 = vand.u32 %v1399, 4294901760
        %v3620 = vsub.f32 %v1399, %v3619
        %3621 = vmatpush1.msra.mxu0 %v3620
        %3622 = vmatprep.subr.mxu0 0.0
        %v3623 = vand.u32 %v1400, 4294901760
        %v3624 = vsub.f32 %v1400, %v3623
        %3625 = vmatpush1.msra.mxu0 %v3624
        %3626 = vmatprep.subr.mxu0 0.0
        %v3627 = vand.u32 %v1401, 4294901760
        %v3628 = vsub.f32 %v1401, %v3627
        %3629 = vmatpush1.msra.mxu0 %v3628
        %v3630 = vand.u32 %v1303, 4294901760
        %v3631 = vsub.f32 %v1303, %v3630
        %3632 = vmatprep.mubr.f32.mxu0 %v3631
        %v3633 = vand.u32 %v1302, 4294901760
        %v3634 = vsub.f32 %v1302, %v3633
        %3635 = vmatmul.mubr.f32.gmra.mrb[0].mxu0 %v3634
        %v3636 = vpop.f32.mrb[0].mxu0
        %v3637 = vadd.f32 %v3499, %v3636
        %v3638 = vpop.f32.mrb[0].mxu0
        %3639 = vdwg.mxu0
        %3640 = vmatprep.subr.mxu0 0.0
        %v3641 = vand.u32 %v1370, 4294901760
        %3642 = vmatpush1.msra.mxu0 %v3641
        %3643 = vmatprep.subr.mxu0 0.0
        %v3644 = vand.u32 %v1371, 4294901760
        %3645 = vmatpush1.msra.mxu0 %v3644
        %3646 = vmatprep.subr.mxu0 0.0
        %v3647 = vand.u32 %v1372, 4294901760
        %3648 = vmatpush1.msra.mxu0 %v3647
        %3649 = vmatprep.subr.mxu0 0.0
        %v3650 = vand.u32 %v1373, 4294901760
        %3651 = vmatpush1.msra.mxu0 %v3650
        %3652 = vmatprep.subr.mxu0 0.0
        %v3653 = vand.u32 %v1374, 4294901760
        %3654 = vmatpush1.msra.mxu0 %v3653
        %3655 = vmatprep.subr.mxu0 0.0
        %v3656 = vand.u32 %v1375, 4294901760
        %3657 = vmatpush1.msra.mxu0 %v3656
        %3658 = vmatprep.subr.mxu0 0.0
        %v3659 = vand.u32 %v1376, 4294901760
        %3660 = vmatpush1.msra.mxu0 %v3659
        %3661 = vmatprep.subr.mxu0 0.0
        %v3662 = vand.u32 %v1377, 4294901760
        %3663 = vmatpush1.msra.mxu0 %v3662
        %3664 = vmatprep.subr.mxu0 0.0
        %v3665 = vand.u32 %v1378, 4294901760
        %3666 = vmatpush1.msra.mxu0 %v3665
        %3667 = vmatprep.subr.mxu0 0.0
        %v3668 = vand.u32 %v1379, 4294901760
        %3669 = vmatpush1.msra.mxu0 %v3668
        %3670 = vmatprep.subr.mxu0 0.0
        %v3671 = vand.u32 %v1380, 4294901760
        %3672 = vmatpush1.msra.mxu0 %v3671
        %3673 = vmatprep.subr.mxu0 0.0
        %v3674 = vand.u32 %v1381, 4294901760
        %3675 = vmatpush1.msra.mxu0 %v3674
        %3676 = vmatprep.subr.mxu0 0.0
        %v3677 = vand.u32 %v1382, 4294901760
        %3678 = vmatpush1.msra.mxu0 %v3677
        %3679 = vmatprep.subr.mxu0 0.0
        %v3680 = vand.u32 %v1383, 4294901760
        %3681 = vmatpush1.msra.mxu0 %v3680
        %3682 = vmatprep.subr.mxu0 0.0
        %v3683 = vand.u32 %v1384, 4294901760
        %3684 = vmatpush1.msra.mxu0 %v3683
        %3685 = vmatprep.subr.mxu0 0.0
        %v3686 = vand.u32 %v1385, 4294901760
        %3687 = vmatpush1.msra.mxu0 %v3686
        %3688 = vmatprep.subr.mxu0 0.0
        %v3689 = vand.u32 %v1386, 4294901760
        %3690 = vmatpush1.msra.mxu0 %v3689
        %3691 = vmatprep.subr.mxu0 0.0
        %v3692 = vand.u32 %v1387, 4294901760
        %3693 = vmatpush1.msra.mxu0 %v3692
        %3694 = vmatprep.subr.mxu0 0.0
        %v3695 = vand.u32 %v1388, 4294901760
        %3696 = vmatpush1.msra.mxu0 %v3695
        %3697 = vmatprep.subr.mxu0 0.0
        %v3698 = vand.u32 %v1389, 4294901760
        %3699 = vmatpush1.msra.mxu0 %v3698
        %3700 = vmatprep.subr.mxu0 0.0
        %v3701 = vand.u32 %v1390, 4294901760
        %3702 = vmatpush1.msra.mxu0 %v3701
        %3703 = vmatprep.subr.mxu0 0.0
        %v3704 = vand.u32 %v1391, 4294901760
        %3705 = vmatpush1.msra.mxu0 %v3704
        %3706 = vmatprep.subr.mxu0 0.0
        %v3707 = vand.u32 %v1392, 4294901760
        %3708 = vmatpush1.msra.mxu0 %v3707
        %3709 = vmatprep.subr.mxu0 0.0
        %v3710 = vand.u32 %v1393, 4294901760
        %3711 = vmatpush1.msra.mxu0 %v3710
        %3712 = vmatprep.subr.mxu0 0.0
        %v3713 = vand.u32 %v1394, 4294901760
        %3714 = vmatpush1.msra.mxu0 %v3713
        %3715 = vmatprep.subr.mxu0 0.0
        %v3716 = vand.u32 %v1395, 4294901760
        %3717 = vmatpush1.msra.mxu0 %v3716
        %3718 = vmatprep.subr.mxu0 0.0
        %v3719 = vand.u32 %v1396, 4294901760
        %3720 = vmatpush1.msra.mxu0 %v3719
        %3721 = vmatprep.subr.mxu0 0.0
        %v3722 = vand.u32 %v1397, 4294901760
        %3723 = vmatpush1.msra.mxu0 %v3722
        %3724 = vmatprep.subr.mxu0 0.0
        %v3725 = vand.u32 %v1398, 4294901760
        %3726 = vmatpush1.msra.mxu0 %v3725
        %3727 = vmatprep.subr.mxu0 0.0
        %v3728 = vand.u32 %v1399, 4294901760
        %3729 = vmatpush1.msra.mxu0 %v3728
        %3730 = vmatprep.subr.mxu0 0.0
        %v3731 = vand.u32 %v1400, 4294901760
        %3732 = vmatpush1.msra.mxu0 %v3731
        %3733 = vmatprep.subr.mxu0 0.0
        %v3734 = vand.u32 %v1401, 4294901760
        %3735 = vmatpush1.msra.mxu0 %v3734
        %v3736 = vand.u32 %v1303, 4294901760
        %v3737 = vsub.f32 %v1303, %v3736
        %v3738 = vand.u32 %v3737, 4294901760
        %3739 = vmatprep.mubr.f32.mxu0 %v3738
        %v3740 = vand.u32 %v1302, 4294901760
        %v3741 = vsub.f32 %v1302, %v3740
        %v3742 = vand.u32 %v3741, 4294901760
        %3743 = vmatmul.mubr.f32.gmra.mrb[0].mxu0 %v3742
        %v3744 = vpop.f32.mrb[0].mxu0
        %v3745 = vadd.f32 %v3637, %v3744
        %v3746 = vpop.f32.mrb[0].mxu0
        %3747 = vdwg.mxu0
        %3748 = vmatprep.subr.mxu0 0.0
        %v3749 = vand.u32 %v1370, 4294901760
        %v3750 = vsub.f32 %v1370, %v3749
        %v3751 = vand.u32 %v3750, 4294901760
        %3752 = vmatpush1.msra.mxu0 %v3751
        %3753 = vmatprep.subr.mxu0 0.0
        %v3754 = vand.u32 %v1371, 4294901760
        %v3755 = vsub.f32 %v1371, %v3754
        %v3756 = vand.u32 %v3755, 4294901760
        %3757 = vmatpush1.msra.mxu0 %v3756
        %3758 = vmatprep.subr.mxu0 0.0
        %v3759 = vand.u32 %v1372, 4294901760
        %v3760 = vsub.f32 %v1372, %v3759
        %v3761 = vand.u32 %v3760, 4294901760
        %3762 = vmatpush1.msra.mxu0 %v3761
        %3763 = vmatprep.subr.mxu0 0.0
        %v3764 = vand.u32 %v1373, 4294901760
        %v3765 = vsub.f32 %v1373, %v3764
        %v3766 = vand.u32 %v3765, 4294901760
        %3767 = vmatpush1.msra.mxu0 %v3766
        %3768 = vmatprep.subr.mxu0 0.0
        %v3769 = vand.u32 %v1374, 4294901760
        %v3770 = vsub.f32 %v1374, %v3769
        %v3771 = vand.u32 %v3770, 4294901760
        %3772 = vmatpush1.msra.mxu0 %v3771
        %3773 = vmatprep.subr.mxu0 0.0
        %v3774 = vand.u32 %v1375, 4294901760
        %v3775 = vsub.f32 %v1375, %v3774
        %v3776 = vand.u32 %v3775, 4294901760
        %3777 = vmatpush1.msra.mxu0 %v3776
        %3778 = vmatprep.subr.mxu0 0.0
        %v3779 = vand.u32 %v1376, 4294901760
        %v3780 = vsub.f32 %v1376, %v3779
        %v3781 = vand.u32 %v3780, 4294901760
        %3782 = vmatpush1.msra.mxu0 %v3781
        %3783 = vmatprep.subr.mxu0 0.0
        %v3784 = vand.u32 %v1377, 4294901760
        %v3785 = vsub.f32 %v1377, %v3784
        %v3786 = vand.u32 %v3785, 4294901760
        %3787 = vmatpush1.msra.mxu0 %v3786
        %3788 = vmatprep.subr.mxu0 0.0
        %v3789 = vand.u32 %v1378, 4294901760
        %v3790 = vsub.f32 %v1378, %v3789
        %v3791 = vand.u32 %v3790, 4294901760
        %3792 = vmatpush1.msra.mxu0 %v3791
        %3793 = vmatprep.subr.mxu0 0.0
        %v3794 = vand.u32 %v1379, 4294901760
        %v3795 = vsub.f32 %v1379, %v3794
        %v3796 = vand.u32 %v3795, 4294901760
        %3797 = vmatpush1.msra.mxu0 %v3796
        %3798 = vmatprep.subr.mxu0 0.0
        %v3799 = vand.u32 %v1380, 4294901760
        %v3800 = vsub.f32 %v1380, %v3799
        %v3801 = vand.u32 %v3800, 4294901760
        %3802 = vmatpush1.msra.mxu0 %v3801
        %3803 = vmatprep.subr.mxu0 0.0
        %v3804 = vand.u32 %v1381, 4294901760
        %v3805 = vsub.f32 %v1381, %v3804
        %v3806 = vand.u32 %v3805, 4294901760
        %3807 = vmatpush1.msra.mxu0 %v3806
        %3808 = vmatprep.subr.mxu0 0.0
        %v3809 = vand.u32 %v1382, 4294901760
        %v3810 = vsub.f32 %v1382, %v3809
        %v3811 = vand.u32 %v3810, 4294901760
        %3812 = vmatpush1.msra.mxu0 %v3811
        %3813 = vmatprep.subr.mxu0 0.0
        %v3814 = vand.u32 %v1383, 4294901760
        %v3815 = vsub.f32 %v1383, %v3814
        %v3816 = vand.u32 %v3815, 4294901760
        %3817 = vmatpush1.msra.mxu0 %v3816
        %3818 = vmatprep.subr.mxu0 0.0
        %v3819 = vand.u32 %v1384, 4294901760
        %v3820 = vsub.f32 %v1384, %v3819
        %v3821 = vand.u32 %v3820, 4294901760
        %3822 = vmatpush1.msra.mxu0 %v3821
        %3823 = vmatprep.subr.mxu0 0.0
        %v3824 = vand.u32 %v1385, 4294901760
        %v3825 = vsub.f32 %v1385, %v3824
        %v3826 = vand.u32 %v3825, 4294901760
        %3827 = vmatpush1.msra.mxu0 %v3826
        %3828 = vmatprep.subr.mxu0 0.0
        %v3829 = vand.u32 %v1386, 4294901760
        %v3830 = vsub.f32 %v1386, %v3829
        %v3831 = vand.u32 %v3830, 4294901760
        %3832 = vmatpush1.msra.mxu0 %v3831
        %3833 = vmatprep.subr.mxu0 0.0
        %v3834 = vand.u32 %v1387, 4294901760
        %v3835 = vsub.f32 %v1387, %v3834
        %v3836 = vand.u32 %v3835, 4294901760
        %3837 = vmatpush1.msra.mxu0 %v3836
        %3838 = vmatprep.subr.mxu0 0.0
        %v3839 = vand.u32 %v1388, 4294901760
        %v3840 = vsub.f32 %v1388, %v3839
        %v3841 = vand.u32 %v3840, 4294901760
        %3842 = vmatpush1.msra.mxu0 %v3841
        %3843 = vmatprep.subr.mxu0 0.0
        %v3844 = vand.u32 %v1389, 4294901760
        %v3845 = vsub.f32 %v1389, %v3844
        %v3846 = vand.u32 %v3845, 4294901760
        %3847 = vmatpush1.msra.mxu0 %v3846
        %3848 = vmatprep.subr.mxu0 0.0
        %v3849 = vand.u32 %v1390, 4294901760
        %v3850 = vsub.f32 %v1390, %v3849
        %v3851 = vand.u32 %v3850, 4294901760
        %3852 = vmatpush1.msra.mxu0 %v3851
        %3853 = vmatprep.subr.mxu0 0.0
        %v3854 = vand.u32 %v1391, 4294901760
        %v3855 = vsub.f32 %v1391, %v3854
        %v3856 = vand.u32 %v3855, 4294901760
        %3857 = vmatpush1.msra.mxu0 %v3856
        %3858 = vmatprep.subr.mxu0 0.0
        %v3859 = vand.u32 %v1392, 4294901760
        %v3860 = vsub.f32 %v1392, %v3859
        %v3861 = vand.u32 %v3860, 4294901760
        %3862 = vmatpush1.msra.mxu0 %v3861
        %3863 = vmatprep.subr.mxu0 0.0
        %v3864 = vand.u32 %v1393, 4294901760
        %v3865 = vsub.f32 %v1393, %v3864
        %v3866 = vand.u32 %v3865, 4294901760
        %3867 = vmatpush1.msra.mxu0 %v3866
        %3868 = vmatprep.subr.mxu0 0.0
        %v3869 = vand.u32 %v1394, 4294901760
        %v3870 = vsub.f32 %v1394, %v3869
        %v3871 = vand.u32 %v3870, 4294901760
        %3872 = vmatpush1.msra.mxu0 %v3871
        %3873 = vmatprep.subr.mxu0 0.0
        %v3874 = vand.u32 %v1395, 4294901760
        %v3875 = vsub.f32 %v1395, %v3874
        %v3876 = vand.u32 %v3875, 4294901760
        %3877 = vmatpush1.msra.mxu0 %v3876
        %3878 = vmatprep.subr.mxu0 0.0
        %v3879 = vand.u32 %v1396, 4294901760
        %v3880 = vsub.f32 %v1396, %v3879
        %v3881 = vand.u32 %v3880, 4294901760
        %3882 = vmatpush1.msra.mxu0 %v3881
        %3883 = vmatprep.subr.mxu0 0.0
        %v3884 = vand.u32 %v1397, 4294901760
        %v3885 = vsub.f32 %v1397, %v3884
        %v3886 = vand.u32 %v3885, 4294901760
        %3887 = vmatpush1.msra.mxu0 %v3886
        %3888 = vmatprep.subr.mxu0 0.0
        %v3889 = vand.u32 %v1398, 4294901760
        %v3890 = vsub.f32 %v1398, %v3889
        %v3891 = vand.u32 %v3890, 4294901760
        %3892 = vmatpush1.msra.mxu0 %v3891
        %3893 = vmatprep.subr.mxu0 0.0
        %v3894 = vand.u32 %v1399, 4294901760
        %v3895 = vsub.f32 %v1399, %v3894
        %v3896 = vand.u32 %v3895, 4294901760
        %3897 = vmatpush1.msra.mxu0 %v3896
        %3898 = vmatprep.subr.mxu0 0.0
        %v3899 = vand.u32 %v1400, 4294901760
        %v3900 = vsub.f32 %v1400, %v3899
        %v3901 = vand.u32 %v3900, 4294901760
        %3902 = vmatpush1.msra.mxu0 %v3901
        %3903 = vmatprep.subr.mxu0 0.0
        %v3904 = vand.u32 %v1401, 4294901760
        %v3905 = vsub.f32 %v1401, %v3904
        %v3906 = vand.u32 %v3905, 4294901760
        %3907 = vmatpush1.msra.mxu0 %v3906
        %v3908 = vand.u32 %v1303, 4294901760
        %3909 = vmatprep.mubr.f32.mxu0 %v3908
        %v3910 = vand.u32 %v1302, 4294901760
        %3911 = vmatmul.mubr.f32.gmra.mrb[0].mxu0 %v3910
        %v3912 = vpop.f32.mrb[0].mxu0
        %v3913 = vadd.f32 %v3745, %v3912
        %v3914 = vpop.f32.mrb[0].mxu0
        %3915 = vdwg.mxu0
        %3916 = vmatprep.subr.mxu0 0.0
        %v3917 = vand.u32 %v1370, 4294901760
        %3918 = vmatpush1.msra.mxu0 %v3917
        %3919 = vmatprep.subr.mxu0 0.0
        %v3920 = vand.u32 %v1371, 4294901760
        %3921 = vmatpush1.msra.mxu0 %v3920
        %3922 = vmatprep.subr.mxu0 0.0
        %v3923 = vand.u32 %v1372, 4294901760
        %3924 = vmatpush1.msra.mxu0 %v3923
        %3925 = vmatprep.subr.mxu0 0.0
        %v3926 = vand.u32 %v1373, 4294901760
        %3927 = vmatpush1.msra.mxu0 %v3926
        %3928 = vmatprep.subr.mxu0 0.0
        %v3929 = vand.u32 %v1374, 4294901760
        %3930 = vmatpush1.msra.mxu0 %v3929
        %3931 = vmatprep.subr.mxu0 0.0
        %v3932 = vand.u32 %v1375, 4294901760
        %3933 = vmatpush1.msra.mxu0 %v3932
        %3934 = vmatprep.subr.mxu0 0.0
        %v3935 = vand.u32 %v1376, 4294901760
        %3936 = vmatpush1.msra.mxu0 %v3935
        %3937 = vmatprep.subr.mxu0 0.0
        %v3938 = vand.u32 %v1377, 4294901760
        %3939 = vmatpush1.msra.mxu0 %v3938
        %3940 = vmatprep.subr.mxu0 0.0
        %v3941 = vand.u32 %v1378, 4294901760
        %3942 = vmatpush1.msra.mxu0 %v3941
        %3943 = vmatprep.subr.mxu0 0.0
        %v3944 = vand.u32 %v1379, 4294901760
        %3945 = vmatpush1.msra.mxu0 %v3944
        %3946 = vmatprep.subr.mxu0 0.0
        %v3947 = vand.u32 %v1380, 4294901760
        %3948 = vmatpush1.msra.mxu0 %v3947
        %3949 = vmatprep.subr.mxu0 0.0
        %v3950 = vand.u32 %v1381, 4294901760
        %3951 = vmatpush1.msra.mxu0 %v3950
        %3952 = vmatprep.subr.mxu0 0.0
        %v3953 = vand.u32 %v1382, 4294901760
        %3954 = vmatpush1.msra.mxu0 %v3953
        %3955 = vmatprep.subr.mxu0 0.0
        %v3956 = vand.u32 %v1383, 4294901760
        %3957 = vmatpush1.msra.mxu0 %v3956
        %3958 = vmatprep.subr.mxu0 0.0
        %v3959 = vand.u32 %v1384, 4294901760
        %3960 = vmatpush1.msra.mxu0 %v3959
        %3961 = vmatprep.subr.mxu0 0.0
        %v3962 = vand.u32 %v1385, 4294901760
        %3963 = vmatpush1.msra.mxu0 %v3962
        %3964 = vmatprep.subr.mxu0 0.0
        %v3965 = vand.u32 %v1386, 4294901760
        %3966 = vmatpush1.msra.mxu0 %v3965
        %3967 = vmatprep.subr.mxu0 0.0
        %v3968 = vand.u32 %v1387, 4294901760
        %3969 = vmatpush1.msra.mxu0 %v3968
        %3970 = vmatprep.subr.mxu0 0.0
        %v3971 = vand.u32 %v1388, 4294901760
        %3972 = vmatpush1.msra.mxu0 %v3971
        %3973 = vmatprep.subr.mxu0 0.0
        %v3974 = vand.u32 %v1389, 4294901760
        %3975 = vmatpush1.msra.mxu0 %v3974
        %3976 = vmatprep.subr.mxu0 0.0
        %v3977 = vand.u32 %v1390, 4294901760
        %3978 = vmatpush1.msra.mxu0 %v3977
        %3979 = vmatprep.subr.mxu0 0.0
        %v3980 = vand.u32 %v1391, 4294901760
        %3981 = vmatpush1.msra.mxu0 %v3980
        %3982 = vmatprep.subr.mxu0 0.0
        %v3983 = vand.u32 %v1392, 4294901760
        %3984 = vmatpush1.msra.mxu0 %v3983
        %3985 = vmatprep.subr.mxu0 0.0
        %v3986 = vand.u32 %v1393, 4294901760
        %3987 = vmatpush1.msra.mxu0 %v3986
        %3988 = vmatprep.subr.mxu0 0.0
        %v3989 = vand.u32 %v1394, 4294901760
        %3990 = vmatpush1.msra.mxu0 %v3989
        %3991 = vmatprep.subr.mxu0 0.0
        %v3992 = vand.u32 %v1395, 4294901760
        %3993 = vmatpush1.msra.mxu0 %v3992
        %3994 = vmatprep.subr.mxu0 0.0
        %v3995 = vand.u32 %v1396, 4294901760
        %3996 = vmatpush1.msra.mxu0 %v3995
        %3997 = vmatprep.subr.mxu0 0.0
        %v3998 = vand.u32 %v1397, 4294901760
        %3999 = vmatpush1.msra.mxu0 %v3998
        %4000 = vmatprep.subr.mxu0 0.0
        %v4001 = vand.u32 %v1398, 4294901760
        %4002 = vmatpush1.msra.mxu0 %v4001
        %4003 = vmatprep.subr.mxu0 0.0
        %v4004 = vand.u32 %v1399, 4294901760
        %4005 = vmatpush1.msra.mxu0 %v4004
        %4006 = vmatprep.subr.mxu0 0.0
        %v4007 = vand.u32 %v1400, 4294901760
        %4008 = vmatpush1.msra.mxu0 %v4007
        %4009 = vmatprep.subr.mxu0 0.0
        %v4010 = vand.u32 %v1401, 4294901760
        %4011 = vmatpush1.msra.mxu0 %v4010
        %v4012 = vand.u32 %v1303, 4294901760
        %4013 = vmatprep.mubr.f32.mxu0 %v4012
        %v4014 = vand.u32 %v1302, 4294901760
        %4015 = vmatmul.mubr.f32.gmra.mrb[0].mxu0 %v4014
        %v4016 = vpop.f32.mrb[0].mxu0
        %v4017 = vadd.f32 %v3913, %v4016
        %v4018 = vpop.f32.mrb[0].mxu0
        %4019 = vdwg.mxu0
        %4020 = vmatprep.subr.mxu0 0.0
        %v4021 = vand.u32 %v1402, 4294901760
        %4022 = vmatpush1.msra.mxu0 %v4021
        %4023 = vmatprep.subr.mxu0 0.0
        %v4024 = vand.u32 %v1403, 4294901760
        %4025 = vmatpush1.msra.mxu0 %v4024
        %4026 = vmatprep.subr.mxu0 0.0
        %v4027 = vand.u32 %v1404, 4294901760
        %4028 = vmatpush1.msra.mxu0 %v4027
        %4029 = vmatprep.subr.mxu0 0.0
        %v4030 = vand.u32 %v1405, 4294901760
        %4031 = vmatpush1.msra.mxu0 %v4030
        %4032 = vmatprep.subr.mxu0 0.0
        %v4033 = vand.u32 %v1406, 4294901760
        %4034 = vmatpush1.msra.mxu0 %v4033
        %4035 = vmatprep.subr.mxu0 0.0
        %v4036 = vand.u32 %v1407, 4294901760
        %4037 = vmatpush1.msra.mxu0 %v4036
        %4038 = vmatprep.subr.mxu0 0.0
        %v4039 = vand.u32 %v1408, 4294901760
        %4040 = vmatpush1.msra.mxu0 %v4039
        %4041 = vmatprep.subr.mxu0 0.0
        %v4042 = vand.u32 %v1409, 4294901760
        %4043 = vmatpush1.msra.mxu0 %v4042
        %4044 = vmatprep.subr.mxu0 0.0
        %v4045 = vand.u32 %v1410, 4294901760
        %4046 = vmatpush1.msra.mxu0 %v4045
        %4047 = vmatprep.subr.mxu0 0.0
        %v4048 = vand.u32 %v1411, 4294901760
        %4049 = vmatpush1.msra.mxu0 %v4048
        %4050 = vmatprep.subr.mxu0 0.0
        %v4051 = vand.u32 %v1412, 4294901760
        %4052 = vmatpush1.msra.mxu0 %v4051
        %4053 = vmatprep.subr.mxu0 0.0
        %v4054 = vand.u32 %v1413, 4294901760
        %4055 = vmatpush1.msra.mxu0 %v4054
        %4056 = vmatprep.subr.mxu0 0.0
        %v4057 = vand.u32 %v1414, 4294901760
        %4058 = vmatpush1.msra.mxu0 %v4057
        %4059 = vmatprep.subr.mxu0 0.0
        %v4060 = vand.u32 %v1415, 4294901760
        %4061 = vmatpush1.msra.mxu0 %v4060
        %4062 = vmatprep.subr.mxu0 0.0
        %v4063 = vand.u32 %v1416, 4294901760
        %4064 = vmatpush1.msra.mxu0 %v4063
        %4065 = vmatprep.subr.mxu0 0.0
        %v4066 = vand.u32 %v1417, 4294901760
        %4067 = vmatpush1.msra.mxu0 %v4066
        %4068 = vmatprep.subr.mxu0 0.0
        %v4069 = vand.u32 %v1418, 4294901760
        %4070 = vmatpush1.msra.mxu0 %v4069
        %4071 = vmatprep.subr.mxu0 0.0
        %v4072 = vand.u32 %v1419, 4294901760
        %4073 = vmatpush1.msra.mxu0 %v4072
        %4074 = vmatprep.subr.mxu0 0.0
        %v4075 = vand.u32 %v1420, 4294901760
        %4076 = vmatpush1.msra.mxu0 %v4075
        %4077 = vmatprep.subr.mxu0 0.0
        %v4078 = vand.u32 %v1421, 4294901760
        %4079 = vmatpush1.msra.mxu0 %v4078
        %4080 = vmatprep.subr.mxu0 0.0
        %v4081 = vand.u32 %v1422, 4294901760
        %4082 = vmatpush1.msra.mxu0 %v4081
        %4083 = vmatprep.subr.mxu0 0.0
        %v4084 = vand.u32 %v1423, 4294901760
        %4085 = vmatpush1.msra.mxu0 %v4084
        %4086 = vmatprep.subr.mxu0 0.0
        %v4087 = vand.u32 %v1424, 4294901760
        %4088 = vmatpush1.msra.mxu0 %v4087
        %4089 = vmatprep.subr.mxu0 0.0
        %v4090 = vand.u32 %v1425, 4294901760
        %4091 = vmatpush1.msra.mxu0 %v4090
        %4092 = vmatprep.subr.mxu0 0.0
        %v4093 = vand.u32 %v1426, 4294901760
        %4094 = vmatpush1.msra.mxu0 %v4093
        %4095 = vmatprep.subr.mxu0 0.0
        %v4096 = vand.u32 %v1427, 4294901760
        %4097 = vmatpush1.msra.mxu0 %v4096
        %4098 = vmatprep.subr.mxu0 0.0
        %v4099 = vand.u32 %v1428, 4294901760
        %4100 = vmatpush1.msra.mxu0 %v4099
        %4101 = vmatprep.subr.mxu0 0.0
        %v4102 = vand.u32 %v1429, 4294901760
        %4103 = vmatpush1.msra.mxu0 %v4102
        %4104 = vmatprep.subr.mxu0 0.0
        %v4105 = vand.u32 %v1430, 4294901760
        %4106 = vmatpush1.msra.mxu0 %v4105
        %4107 = vmatprep.subr.mxu0 0.0
        %v4108 = vand.u32 %v1431, 4294901760
        %4109 = vmatpush1.msra.mxu0 %v4108
        %4110 = vmatprep.subr.mxu0 0.0
        %v4111 = vand.u32 %v1432, 4294901760
        %4112 = vmatpush1.msra.mxu0 %v4111
        %4113 = vmatprep.subr.mxu0 0.0
        %v4114 = vand.u32 %v1433, 4294901760
        %4115 = vmatpush1.msra.mxu0 %v4114
        %v4116 = vand.u32 %v1305, 4294901760
        %v4117 = vsub.f32 %v1305, %v4116
        %v4118 = vand.u32 %v4117, 4294901760
        %v4119 = vsub.f32 %v4117, %v4118
        %v4120 = vand.u32 %v4119, 4294901760
        %4121 = vmatprep.mubr.f32.mxu0 %v4120
        %v4122 = vand.u32 %v1304, 4294901760
        %v4123 = vsub.f32 %v1304, %v4122
        %v4124 = vand.u32 %v4123, 4294901760
        %v4125 = vsub.f32 %v4123, %v4124
        %v4126 = vand.u32 %v4125, 4294901760
        %4127 = vmatmul.mubr.f32.gmra.mrb[0].mxu0 %v4126
        %v4128 = vpop.f32.mrb[0].mxu0
        %v4129 = vadd.f32 %v4017, %v4128
        %v4130 = vpop.f32.mrb[0].mxu0
        %4131 = vdwg.mxu0
        %4132 = vmatprep.subr.mxu0 0.0
        %v4133 = vand.u32 %v1402, 4294901760
        %v4134 = vsub.f32 %v1402, %v4133
        %v4135 = vand.u32 %v4134, 4294901760
        %v4136 = vsub.f32 %v4134, %v4135
        %v4137 = vand.u32 %v4136, 4294901760
        %4138 = vmatpush1.msra.mxu0 %v4137
        %4139 = vmatprep.subr.mxu0 0.0
        %v4140 = vand.u32 %v1403, 4294901760
        %v4141 = vsub.f32 %v1403, %v4140
        %v4142 = vand.u32 %v4141, 4294901760
        %v4143 = vsub.f32 %v4141, %v4142
        %v4144 = vand.u32 %v4143, 4294901760
        %4145 = vmatpush1.msra.mxu0 %v4144
        %4146 = vmatprep.subr.mxu0 0.0
        %v4147 = vand.u32 %v1404, 4294901760
        %v4148 = vsub.f32 %v1404, %v4147
        %v4149 = vand.u32 %v4148, 4294901760
        %v4150 = vsub.f32 %v4148, %v4149
        %v4151 = vand.u32 %v4150, 4294901760
        %4152 = vmatpush1.msra.mxu0 %v4151
        %4153 = vmatprep.subr.mxu0 0.0
        %v4154 = vand.u32 %v1405, 4294901760
        %v4155 = vsub.f32 %v1405, %v4154
        %v4156 = vand.u32 %v4155, 4294901760
        %v4157 = vsub.f32 %v4155, %v4156
        %v4158 = vand.u32 %v4157, 4294901760
        %4159 = vmatpush1.msra.mxu0 %v4158
        %4160 = vmatprep.subr.mxu0 0.0
        %v4161 = vand.u32 %v1406, 4294901760
        %v4162 = vsub.f32 %v1406, %v4161
        %v4163 = vand.u32 %v4162, 4294901760
        %v4164 = vsub.f32 %v4162, %v4163
        %v4165 = vand.u32 %v4164, 4294901760
        %4166 = vmatpush1.msra.mxu0 %v4165
        %4167 = vmatprep.subr.mxu0 0.0
        %v4168 = vand.u32 %v1407, 4294901760
        %v4169 = vsub.f32 %v1407, %v4168
        %v4170 = vand.u32 %v4169, 4294901760
        %v4171 = vsub.f32 %v4169, %v4170
        %v4172 = vand.u32 %v4171, 4294901760
        %4173 = vmatpush1.msra.mxu0 %v4172
        %4174 = vmatprep.subr.mxu0 0.0
        %v4175 = vand.u32 %v1408, 4294901760
        %v4176 = vsub.f32 %v1408, %v4175
        %v4177 = vand.u32 %v4176, 4294901760
        %v4178 = vsub.f32 %v4176, %v4177
        %v4179 = vand.u32 %v4178, 4294901760
        %4180 = vmatpush1.msra.mxu0 %v4179
        %4181 = vmatprep.subr.mxu0 0.0
        %v4182 = vand.u32 %v1409, 4294901760
        %v4183 = vsub.f32 %v1409, %v4182
        %v4184 = vand.u32 %v4183, 4294901760
        %v4185 = vsub.f32 %v4183, %v4184
        %v4186 = vand.u32 %v4185, 4294901760
        %4187 = vmatpush1.msra.mxu0 %v4186
        %4188 = vmatprep.subr.mxu0 0.0
        %v4189 = vand.u32 %v1410, 4294901760
        %v4190 = vsub.f32 %v1410, %v4189
        %v4191 = vand.u32 %v4190, 4294901760
        %v4192 = vsub.f32 %v4190, %v4191
        %v4193 = vand.u32 %v4192, 4294901760
        %4194 = vmatpush1.msra.mxu0 %v4193
        %4195 = vmatprep.subr.mxu0 0.0
        %v4196 = vand.u32 %v1411, 4294901760
        %v4197 = vsub.f32 %v1411, %v4196
        %v4198 = vand.u32 %v4197, 4294901760
        %v4199 = vsub.f32 %v4197, %v4198
        %v4200 = vand.u32 %v4199, 4294901760
        %4201 = vmatpush1.msra.mxu0 %v4200
        %4202 = vmatprep.subr.mxu0 0.0
        %v4203 = vand.u32 %v1412, 4294901760
        %v4204 = vsub.f32 %v1412, %v4203
        %v4205 = vand.u32 %v4204, 4294901760
        %v4206 = vsub.f32 %v4204, %v4205
        %v4207 = vand.u32 %v4206, 4294901760
        %4208 = vmatpush1.msra.mxu0 %v4207
        %4209 = vmatprep.subr.mxu0 0.0
        %v4210 = vand.u32 %v1413, 4294901760
        %v4211 = vsub.f32 %v1413, %v4210
        %v4212 = vand.u32 %v4211, 4294901760
        %v4213 = vsub.f32 %v4211, %v4212
        %v4214 = vand.u32 %v4213, 4294901760
        %4215 = vmatpush1.msra.mxu0 %v4214
        %4216 = vmatprep.subr.mxu0 0.0
        %v4217 = vand.u32 %v1414, 4294901760
        %v4218 = vsub.f32 %v1414, %v4217
        %v4219 = vand.u32 %v4218, 4294901760
        %v4220 = vsub.f32 %v4218, %v4219
        %v4221 = vand.u32 %v4220, 4294901760
        %4222 = vmatpush1.msra.mxu0 %v4221
        %4223 = vmatprep.subr.mxu0 0.0
        %v4224 = vand.u32 %v1415, 4294901760
        %v4225 = vsub.f32 %v1415, %v4224
        %v4226 = vand.u32 %v4225, 4294901760
        %v4227 = vsub.f32 %v4225, %v4226
        %v4228 = vand.u32 %v4227, 4294901760
        %4229 = vmatpush1.msra.mxu0 %v4228
        %4230 = vmatprep.subr.mxu0 0.0
        %v4231 = vand.u32 %v1416, 4294901760
        %v4232 = vsub.f32 %v1416, %v4231
        %v4233 = vand.u32 %v4232, 4294901760
        %v4234 = vsub.f32 %v4232, %v4233
        %v4235 = vand.u32 %v4234, 4294901760
        %4236 = vmatpush1.msra.mxu0 %v4235
        %4237 = vmatprep.subr.mxu0 0.0
        %v4238 = vand.u32 %v1417, 4294901760
        %v4239 = vsub.f32 %v1417, %v4238
        %v4240 = vand.u32 %v4239, 4294901760
        %v4241 = vsub.f32 %v4239, %v4240
        %v4242 = vand.u32 %v4241, 4294901760
        %4243 = vmatpush1.msra.mxu0 %v4242
        %4244 = vmatprep.subr.mxu0 0.0
        %v4245 = vand.u32 %v1418, 4294901760
        %v4246 = vsub.f32 %v1418, %v4245
        %v4247 = vand.u32 %v4246, 4294901760
        %v4248 = vsub.f32 %v4246, %v4247
        %v4249 = vand.u32 %v4248, 4294901760
        %4250 = vmatpush1.msra.mxu0 %v4249
        %4251 = vmatprep.subr.mxu0 0.0
        %v4252 = vand.u32 %v1419, 4294901760
        %v4253 = vsub.f32 %v1419, %v4252
        %v4254 = vand.u32 %v4253, 4294901760
        %v4255 = vsub.f32 %v4253, %v4254
        %v4256 = vand.u32 %v4255, 4294901760
        %4257 = vmatpush1.msra.mxu0 %v4256
        %4258 = vmatprep.subr.mxu0 0.0
        %v4259 = vand.u32 %v1420, 4294901760
        %v4260 = vsub.f32 %v1420, %v4259
        %v4261 = vand.u32 %v4260, 4294901760
        %v4262 = vsub.f32 %v4260, %v4261
        %v4263 = vand.u32 %v4262, 4294901760
        %4264 = vmatpush1.msra.mxu0 %v4263
        %4265 = vmatprep.subr.mxu0 0.0
        %v4266 = vand.u32 %v1421, 4294901760
        %v4267 = vsub.f32 %v1421, %v4266
        %v4268 = vand.u32 %v4267, 4294901760
        %v4269 = vsub.f32 %v4267, %v4268
        %v4270 = vand.u32 %v4269, 4294901760
        %4271 = vmatpush1.msra.mxu0 %v4270
        %4272 = vmatprep.subr.mxu0 0.0
        %v4273 = vand.u32 %v1422, 4294901760
        %v4274 = vsub.f32 %v1422, %v4273
        %v4275 = vand.u32 %v4274, 4294901760
        %v4276 = vsub.f32 %v4274, %v4275
        %v4277 = vand.u32 %v4276, 4294901760
        %4278 = vmatpush1.msra.mxu0 %v4277
        %4279 = vmatprep.subr.mxu0 0.0
        %v4280 = vand.u32 %v1423, 4294901760
        %v4281 = vsub.f32 %v1423, %v4280
        %v4282 = vand.u32 %v4281, 4294901760
        %v4283 = vsub.f32 %v4281, %v4282
        %v4284 = vand.u32 %v4283, 4294901760
        %4285 = vmatpush1.msra.mxu0 %v4284
        %4286 = vmatprep.subr.mxu0 0.0
        %v4287 = vand.u32 %v1424, 4294901760
        %v4288 = vsub.f32 %v1424, %v4287
        %v4289 = vand.u32 %v4288, 4294901760
        %v4290 = vsub.f32 %v4288, %v4289
        %v4291 = vand.u32 %v4290, 4294901760
        %4292 = vmatpush1.msra.mxu0 %v4291
        %4293 = vmatprep.subr.mxu0 0.0
        %v4294 = vand.u32 %v1425, 4294901760
        %v4295 = vsub.f32 %v1425, %v4294
        %v4296 = vand.u32 %v4295, 4294901760
        %v4297 = vsub.f32 %v4295, %v4296
        %v4298 = vand.u32 %v4297, 4294901760
        %4299 = vmatpush1.msra.mxu0 %v4298
        %4300 = vmatprep.subr.mxu0 0.0
        %v4301 = vand.u32 %v1426, 4294901760
        %v4302 = vsub.f32 %v1426, %v4301
        %v4303 = vand.u32 %v4302, 4294901760
        %v4304 = vsub.f32 %v4302, %v4303
        %v4305 = vand.u32 %v4304, 4294901760
        %4306 = vmatpush1.msra.mxu0 %v4305
        %4307 = vmatprep.subr.mxu0 0.0
        %v4308 = vand.u32 %v1427, 4294901760
        %v4309 = vsub.f32 %v1427, %v4308
        %v4310 = vand.u32 %v4309, 4294901760
        %v4311 = vsub.f32 %v4309, %v4310
        %v4312 = vand.u32 %v4311, 4294901760
        %4313 = vmatpush1.msra.mxu0 %v4312
        %4314 = vmatprep.subr.mxu0 0.0
        %v4315 = vand.u32 %v1428, 4294901760
        %v4316 = vsub.f32 %v1428, %v4315
        %v4317 = vand.u32 %v4316, 4294901760
        %v4318 = vsub.f32 %v4316, %v4317
        %v4319 = vand.u32 %v4318, 4294901760
        %4320 = vmatpush1.msra.mxu0 %v4319
        %4321 = vmatprep.subr.mxu0 0.0
        %v4322 = vand.u32 %v1429, 4294901760
        %v4323 = vsub.f32 %v1429, %v4322
        %v4324 = vand.u32 %v4323, 4294901760
        %v4325 = vsub.f32 %v4323, %v4324
        %v4326 = vand.u32 %v4325, 4294901760
        %4327 = vmatpush1.msra.mxu0 %v4326
        %4328 = vmatprep.subr.mxu0 0.0
        %v4329 = vand.u32 %v1430, 4294901760
        %v4330 = vsub.f32 %v1430, %v4329
        %v4331 = vand.u32 %v4330, 4294901760
        %v4332 = vsub.f32 %v4330, %v4331
        %v4333 = vand.u32 %v4332, 4294901760
        %4334 = vmatpush1.msra.mxu0 %v4333
        %4335 = vmatprep.subr.mxu0 0.0
        %v4336 = vand.u32 %v1431, 4294901760
        %v4337 = vsub.f32 %v1431, %v4336
        %v4338 = vand.u32 %v4337, 4294901760
        %v4339 = vsub.f32 %v4337, %v4338
        %v4340 = vand.u32 %v4339, 4294901760
        %4341 = vmatpush1.msra.mxu0 %v4340
        %4342 = vmatprep.subr.mxu0 0.0
        %v4343 = vand.u32 %v1432, 4294901760
        %v4344 = vsub.f32 %v1432, %v4343
        %v4345 = vand.u32 %v4344, 4294901760
        %v4346 = vsub.f32 %v4344, %v4345
        %v4347 = vand.u32 %v4346, 4294901760
        %4348 = vmatpush1.msra.mxu0 %v4347
        %4349 = vmatprep.subr.mxu0 0.0
        %v4350 = vand.u32 %v1433, 4294901760
        %v4351 = vsub.f32 %v1433, %v4350
        %v4352 = vand.u32 %v4351, 4294901760
        %v4353 = vsub.f32 %v4351, %v4352
        %v4354 = vand.u32 %v4353, 4294901760
        %4355 = vmatpush1.msra.mxu0 %v4354
        %v4356 = vand.u32 %v1305, 4294901760
        %4357 = vmatprep.mubr.f32.mxu0 %v4356
        %v4358 = vand.u32 %v1304, 4294901760
        %4359 = vmatmul.mubr.f32.gmra.mrb[0].mxu0 %v4358
        %v4360 = vpop.f32.mrb[0].mxu0
        %v4361 = vadd.f32 %v4129, %v4360
        %v4362 = vpop.f32.mrb[0].mxu0
        %4363 = vdwg.mxu0
        %4364 = vmatprep.subr.mxu0 0.0
        %v4365 = vand.u32 %v1402, 4294901760
        %v4366 = vsub.f32 %v1402, %v4365
        %4367 = vmatpush1.msra.mxu0 %v4366
        %4368 = vmatprep.subr.mxu0 0.0
        %v4369 = vand.u32 %v1403, 4294901760
        %v4370 = vsub.f32 %v1403, %v4369
        %4371 = vmatpush1.msra.mxu0 %v4370
        %4372 = vmatprep.subr.mxu0 0.0
        %v4373 = vand.u32 %v1404, 4294901760
        %v4374 = vsub.f32 %v1404, %v4373
        %4375 = vmatpush1.msra.mxu0 %v4374
        %4376 = vmatprep.subr.mxu0 0.0
        %v4377 = vand.u32 %v1405, 4294901760
        %v4378 = vsub.f32 %v1405, %v4377
        %4379 = vmatpush1.msra.mxu0 %v4378
        %4380 = vmatprep.subr.mxu0 0.0
        %v4381 = vand.u32 %v1406, 4294901760
        %v4382 = vsub.f32 %v1406, %v4381
        %4383 = vmatpush1.msra.mxu0 %v4382
        %4384 = vmatprep.subr.mxu0 0.0
        %v4385 = vand.u32 %v1407, 4294901760
        %v4386 = vsub.f32 %v1407, %v4385
        %4387 = vmatpush1.msra.mxu0 %v4386
        %4388 = vmatprep.subr.mxu0 0.0
        %v4389 = vand.u32 %v1408, 4294901760
        %v4390 = vsub.f32 %v1408, %v4389
        %4391 = vmatpush1.msra.mxu0 %v4390
        %4392 = vmatprep.subr.mxu0 0.0
        %v4393 = vand.u32 %v1409, 4294901760
        %v4394 = vsub.f32 %v1409, %v4393
        %4395 = vmatpush1.msra.mxu0 %v4394
        %4396 = vmatprep.subr.mxu0 0.0
        %v4397 = vand.u32 %v1410, 4294901760
        %v4398 = vsub.f32 %v1410, %v4397
        %4399 = vmatpush1.msra.mxu0 %v4398
        %4400 = vmatprep.subr.mxu0 0.0
        %v4401 = vand.u32 %v1411, 4294901760
        %v4402 = vsub.f32 %v1411, %v4401
        %4403 = vmatpush1.msra.mxu0 %v4402
        %4404 = vmatprep.subr.mxu0 0.0
        %v4405 = vand.u32 %v1412, 4294901760
        %v4406 = vsub.f32 %v1412, %v4405
        %4407 = vmatpush1.msra.mxu0 %v4406
        %4408 = vmatprep.subr.mxu0 0.0
        %v4409 = vand.u32 %v1413, 4294901760
        %v4410 = vsub.f32 %v1413, %v4409
        %4411 = vmatpush1.msra.mxu0 %v4410
        %4412 = vmatprep.subr.mxu0 0.0
        %v4413 = vand.u32 %v1414, 4294901760
        %v4414 = vsub.f32 %v1414, %v4413
        %4415 = vmatpush1.msra.mxu0 %v4414
        %4416 = vmatprep.subr.mxu0 0.0
        %v4417 = vand.u32 %v1415, 4294901760
        %v4418 = vsub.f32 %v1415, %v4417
        %4419 = vmatpush1.msra.mxu0 %v4418
        %4420 = vmatprep.subr.mxu0 0.0
        %v4421 = vand.u32 %v1416, 4294901760
        %v4422 = vsub.f32 %v1416, %v4421
        %4423 = vmatpush1.msra.mxu0 %v4422
        %4424 = vmatprep.subr.mxu0 0.0
        %v4425 = vand.u32 %v1417, 4294901760
        %v4426 = vsub.f32 %v1417, %v4425
        %4427 = vmatpush1.msra.mxu0 %v4426
        %4428 = vmatprep.subr.mxu0 0.0
        %v4429 = vand.u32 %v1418, 4294901760
        %v4430 = vsub.f32 %v1418, %v4429
        %4431 = vmatpush1.msra.mxu0 %v4430
        %4432 = vmatprep.subr.mxu0 0.0
        %v4433 = vand.u32 %v1419, 4294901760
        %v4434 = vsub.f32 %v1419, %v4433
        %4435 = vmatpush1.msra.mxu0 %v4434
        %4436 = vmatprep.subr.mxu0 0.0
        %v4437 = vand.u32 %v1420, 4294901760
        %v4438 = vsub.f32 %v1420, %v4437
        %4439 = vmatpush1.msra.mxu0 %v4438
        %4440 = vmatprep.subr.mxu0 0.0
        %v4441 = vand.u32 %v1421, 4294901760
        %v4442 = vsub.f32 %v1421, %v4441
        %4443 = vmatpush1.msra.mxu0 %v4442
        %4444 = vmatprep.subr.mxu0 0.0
        %v4445 = vand.u32 %v1422, 4294901760
        %v4446 = vsub.f32 %v1422, %v4445
        %4447 = vmatpush1.msra.mxu0 %v4446
        %4448 = vmatprep.subr.mxu0 0.0
        %v4449 = vand.u32 %v1423, 4294901760
        %v4450 = vsub.f32 %v1423, %v4449
        %4451 = vmatpush1.msra.mxu0 %v4450
        %4452 = vmatprep.subr.mxu0 0.0
        %v4453 = vand.u32 %v1424, 4294901760
        %v4454 = vsub.f32 %v1424, %v4453
        %4455 = vmatpush1.msra.mxu0 %v4454
        %4456 = vmatprep.subr.mxu0 0.0
        %v4457 = vand.u32 %v1425, 4294901760
        %v4458 = vsub.f32 %v1425, %v4457
        %4459 = vmatpush1.msra.mxu0 %v4458
        %4460 = vmatprep.subr.mxu0 0.0
        %v4461 = vand.u32 %v1426, 4294901760
        %v4462 = vsub.f32 %v1426, %v4461
        %4463 = vmatpush1.msra.mxu0 %v4462
        %4464 = vmatprep.subr.mxu0 0.0
        %v4465 = vand.u32 %v1427, 4294901760
        %v4466 = vsub.f32 %v1427, %v4465
        %4467 = vmatpush1.msra.mxu0 %v4466
        %4468 = vmatprep.subr.mxu0 0.0
        %v4469 = vand.u32 %v1428, 4294901760
        %v4470 = vsub.f32 %v1428, %v4469
        %4471 = vmatpush1.msra.mxu0 %v4470
        %4472 = vmatprep.subr.mxu0 0.0
        %v4473 = vand.u32 %v1429, 4294901760
        %v4474 = vsub.f32 %v1429, %v4473
        %4475 = vmatpush1.msra.mxu0 %v4474
        %4476 = vmatprep.subr.mxu0 0.0
        %v4477 = vand.u32 %v1430, 4294901760
        %v4478 = vsub.f32 %v1430, %v4477
        %4479 = vmatpush1.msra.mxu0 %v4478
        %4480 = vmatprep.subr.mxu0 0.0
        %v4481 = vand.u32 %v1431, 4294901760
        %v4482 = vsub.f32 %v1431, %v4481
        %4483 = vmatpush1.msra.mxu0 %v4482
        %4484 = vmatprep.subr.mxu0 0.0
        %v4485 = vand.u32 %v1432, 4294901760
        %v4486 = vsub.f32 %v1432, %v4485
        %4487 = vmatpush1.msra.mxu0 %v4486
        %4488 = vmatprep.subr.mxu0 0.0
        %v4489 = vand.u32 %v1433, 4294901760
        %v4490 = vsub.f32 %v1433, %v4489
        %4491 = vmatpush1.msra.mxu0 %v4490
        %v4492 = vand.u32 %v1305, 4294901760
        %v4493 = vsub.f32 %v1305, %v4492
        %4494 = vmatprep.mubr.f32.mxu0 %v4493
        %v4495 = vand.u32 %v1304, 4294901760
        %v4496 = vsub.f32 %v1304, %v4495
        %4497 = vmatmul.mubr.f32.gmra.mrb[0].mxu0 %v4496
        %v4498 = vpop.f32.mrb[0].mxu0
        %v4499 = vadd.f32 %v4361, %v4498
        %v4500 = vpop.f32.mrb[0].mxu0
        %4501 = vdwg.mxu0
        %4502 = vmatprep.subr.mxu0 0.0
        %v4503 = vand.u32 %v1402, 4294901760
        %4504 = vmatpush1.msra.mxu0 %v4503
        %4505 = vmatprep.subr.mxu0 0.0
        %v4506 = vand.u32 %v1403, 4294901760
        %4507 = vmatpush1.msra.mxu0 %v4506
        %4508 = vmatprep.subr.mxu0 0.0
        %v4509 = vand.u32 %v1404, 4294901760
        %4510 = vmatpush1.msra.mxu0 %v4509
        %4511 = vmatprep.subr.mxu0 0.0
        %v4512 = vand.u32 %v1405, 4294901760
        %4513 = vmatpush1.msra.mxu0 %v4512
        %4514 = vmatprep.subr.mxu0 0.0
        %v4515 = vand.u32 %v1406, 4294901760
        %4516 = vmatpush1.msra.mxu0 %v4515
        %4517 = vmatprep.subr.mxu0 0.0
        %v4518 = vand.u32 %v1407, 4294901760
        %4519 = vmatpush1.msra.mxu0 %v4518
        %4520 = vmatprep.subr.mxu0 0.0
        %v4521 = vand.u32 %v1408, 4294901760
        %4522 = vmatpush1.msra.mxu0 %v4521
        %4523 = vmatprep.subr.mxu0 0.0
        %v4524 = vand.u32 %v1409, 4294901760
        %4525 = vmatpush1.msra.mxu0 %v4524
        %4526 = vmatprep.subr.mxu0 0.0
        %v4527 = vand.u32 %v1410, 4294901760
        %4528 = vmatpush1.msra.mxu0 %v4527
        %4529 = vmatprep.subr.mxu0 0.0
        %v4530 = vand.u32 %v1411, 4294901760
        %4531 = vmatpush1.msra.mxu0 %v4530
        %4532 = vmatprep.subr.mxu0 0.0
        %v4533 = vand.u32 %v1412, 4294901760
        %4534 = vmatpush1.msra.mxu0 %v4533
        %4535 = vmatprep.subr.mxu0 0.0
        %v4536 = vand.u32 %v1413, 4294901760
        %4537 = vmatpush1.msra.mxu0 %v4536
        %4538 = vmatprep.subr.mxu0 0.0
        %v4539 = vand.u32 %v1414, 4294901760
        %4540 = vmatpush1.msra.mxu0 %v4539
        %4541 = vmatprep.subr.mxu0 0.0
        %v4542 = vand.u32 %v1415, 4294901760
        %4543 = vmatpush1.msra.mxu0 %v4542
        %4544 = vmatprep.subr.mxu0 0.0
        %v4545 = vand.u32 %v1416, 4294901760
        %4546 = vmatpush1.msra.mxu0 %v4545
        %4547 = vmatprep.subr.mxu0 0.0
        %v4548 = vand.u32 %v1417, 4294901760
        %4549 = vmatpush1.msra.mxu0 %v4548
        %4550 = vmatprep.subr.mxu0 0.0
        %v4551 = vand.u32 %v1418, 4294901760
        %4552 = vmatpush1.msra.mxu0 %v4551
        %4553 = vmatprep.subr.mxu0 0.0
        %v4554 = vand.u32 %v1419, 4294901760
        %4555 = vmatpush1.msra.mxu0 %v4554
        %4556 = vmatprep.subr.mxu0 0.0
        %v4557 = vand.u32 %v1420, 4294901760
        %4558 = vmatpush1.msra.mxu0 %v4557
        %4559 = vmatprep.subr.mxu0 0.0
        %v4560 = vand.u32 %v1421, 4294901760
        %4561 = vmatpush1.msra.mxu0 %v4560
        %4562 = vmatprep.subr.mxu0 0.0
        %v4563 = vand.u32 %v1422, 4294901760
        %4564 = vmatpush1.msra.mxu0 %v4563
        %4565 = vmatprep.subr.mxu0 0.0
        %v4566 = vand.u32 %v1423, 4294901760
        %4567 = vmatpush1.msra.mxu0 %v4566
        %4568 = vmatprep.subr.mxu0 0.0
        %v4569 = vand.u32 %v1424, 4294901760
        %4570 = vmatpush1.msra.mxu0 %v4569
        %4571 = vmatprep.subr.mxu0 0.0
        %v4572 = vand.u32 %v1425, 4294901760
        %4573 = vmatpush1.msra.mxu0 %v4572
        %4574 = vmatprep.subr.mxu0 0.0
        %v4575 = vand.u32 %v1426, 4294901760
        %4576 = vmatpush1.msra.mxu0 %v4575
        %4577 = vmatprep.subr.mxu0 0.0
        %v4578 = vand.u32 %v1427, 4294901760
        %4579 = vmatpush1.msra.mxu0 %v4578
        %4580 = vmatprep.subr.mxu0 0.0
        %v4581 = vand.u32 %v1428, 4294901760
        %4582 = vmatpush1.msra.mxu0 %v4581
        %4583 = vmatprep.subr.mxu0 0.0
        %v4584 = vand.u32 %v1429, 4294901760
        %4585 = vmatpush1.msra.mxu0 %v4584
        %4586 = vmatprep.subr.mxu0 0.0
        %v4587 = vand.u32 %v1430, 4294901760
        %4588 = vmatpush1.msra.mxu0 %v4587
        %4589 = vmatprep.subr.mxu0 0.0
        %v4590 = vand.u32 %v1431, 4294901760
        %4591 = vmatpush1.msra.mxu0 %v4590
        %4592 = vmatprep.subr.mxu0 0.0
        %v4593 = vand.u32 %v1432, 4294901760
        %4594 = vmatpush1.msra.mxu0 %v4593
        %4595 = vmatprep.subr.mxu0 0.0
        %v4596 = vand.u32 %v1433, 4294901760
        %4597 = vmatpush1.msra.mxu0 %v4596
        %v4598 = vand.u32 %v1305, 4294901760
        %v4599 = vsub.f32 %v1305, %v4598
        %v4600 = vand.u32 %v4599, 4294901760
        %4601 = vmatprep.mubr.f32.mxu0 %v4600
        %v4602 = vand.u32 %v1304, 4294901760
        %v4603 = vsub.f32 %v1304, %v4602
        %v4604 = vand.u32 %v4603, 4294901760
        %4605 = vmatmul.mubr.f32.gmra.mrb[0].mxu0 %v4604
        %v4606 = vpop.f32.mrb[0].mxu0
        %v4607 = vadd.f32 %v4499, %v4606
        %v4608 = vpop.f32.mrb[0].mxu0
        %4609 = vdwg.mxu0
        %4610 = vmatprep.subr.mxu0 0.0
        %v4611 = vand.u32 %v1402, 4294901760
        %v4612 = vsub.f32 %v1402, %v4611
        %v4613 = vand.u32 %v4612, 4294901760
        %4614 = vmatpush1.msra.mxu0 %v4613
        %4615 = vmatprep.subr.mxu0 0.0
        %v4616 = vand.u32 %v1403, 4294901760
        %v4617 = vsub.f32 %v1403, %v4616
        %v4618 = vand.u32 %v4617, 4294901760
        %4619 = vmatpush1.msra.mxu0 %v4618
        %4620 = vmatprep.subr.mxu0 0.0
        %v4621 = vand.u32 %v1404, 4294901760
        %v4622 = vsub.f32 %v1404, %v4621
        %v4623 = vand.u32 %v4622, 4294901760
        %4624 = vmatpush1.msra.mxu0 %v4623
        %4625 = vmatprep.subr.mxu0 0.0
        %v4626 = vand.u32 %v1405, 4294901760
        %v4627 = vsub.f32 %v1405, %v4626
        %v4628 = vand.u32 %v4627, 4294901760
        %4629 = vmatpush1.msra.mxu0 %v4628
        %4630 = vmatprep.subr.mxu0 0.0
        %v4631 = vand.u32 %v1406, 4294901760
        %v4632 = vsub.f32 %v1406, %v4631
        %v4633 = vand.u32 %v4632, 4294901760
        %4634 = vmatpush1.msra.mxu0 %v4633
        %4635 = vmatprep.subr.mxu0 0.0
        %v4636 = vand.u32 %v1407, 4294901760
        %v4637 = vsub.f32 %v1407, %v4636
        %v4638 = vand.u32 %v4637, 4294901760
        %4639 = vmatpush1.msra.mxu0 %v4638
        %4640 = vmatprep.subr.mxu0 0.0
        %v4641 = vand.u32 %v1408, 4294901760
        %v4642 = vsub.f32 %v1408, %v4641
        %v4643 = vand.u32 %v4642, 4294901760
        %4644 = vmatpush1.msra.mxu0 %v4643
        %4645 = vmatprep.subr.mxu0 0.0
        %v4646 = vand.u32 %v1409, 4294901760
        %v4647 = vsub.f32 %v1409, %v4646
        %v4648 = vand.u32 %v4647, 4294901760
        %4649 = vmatpush1.msra.mxu0 %v4648
        %4650 = vmatprep.subr.mxu0 0.0
        %v4651 = vand.u32 %v1410, 4294901760
        %v4652 = vsub.f32 %v1410, %v4651
        %v4653 = vand.u32 %v4652, 4294901760
        %4654 = vmatpush1.msra.mxu0 %v4653
        %4655 = vmatprep.subr.mxu0 0.0
        %v4656 = vand.u32 %v1411, 4294901760
        %v4657 = vsub.f32 %v1411, %v4656
        %v4658 = vand.u32 %v4657, 4294901760
        %4659 = vmatpush1.msra.mxu0 %v4658
        %4660 = vmatprep.subr.mxu0 0.0
        %v4661 = vand.u32 %v1412, 4294901760
        %v4662 = vsub.f32 %v1412, %v4661
        %v4663 = vand.u32 %v4662, 4294901760
        %4664 = vmatpush1.msra.mxu0 %v4663
        %4665 = vmatprep.subr.mxu0 0.0
        %v4666 = vand.u32 %v1413, 4294901760
        %v4667 = vsub.f32 %v1413, %v4666
        %v4668 = vand.u32 %v4667, 4294901760
        %4669 = vmatpush1.msra.mxu0 %v4668
        %4670 = vmatprep.subr.mxu0 0.0
        %v4671 = vand.u32 %v1414, 4294901760
        %v4672 = vsub.f32 %v1414, %v4671
        %v4673 = vand.u32 %v4672, 4294901760
        %4674 = vmatpush1.msra.mxu0 %v4673
        %4675 = vmatprep.subr.mxu0 0.0
        %v4676 = vand.u32 %v1415, 4294901760
        %v4677 = vsub.f32 %v1415, %v4676
        %v4678 = vand.u32 %v4677, 4294901760
        %4679 = vmatpush1.msra.mxu0 %v4678
        %4680 = vmatprep.subr.mxu0 0.0
        %v4681 = vand.u32 %v1416, 4294901760
        %v4682 = vsub.f32 %v1416, %v4681
        %v4683 = vand.u32 %v4682, 4294901760
        %4684 = vmatpush1.msra.mxu0 %v4683
        %4685 = vmatprep.subr.mxu0 0.0
        %v4686 = vand.u32 %v1417, 4294901760
        %v4687 = vsub.f32 %v1417, %v4686
        %v4688 = vand.u32 %v4687, 4294901760
        %4689 = vmatpush1.msra.mxu0 %v4688
        %4690 = vmatprep.subr.mxu0 0.0
        %v4691 = vand.u32 %v1418, 4294901760
        %v4692 = vsub.f32 %v1418, %v4691
        %v4693 = vand.u32 %v4692, 4294901760
        %4694 = vmatpush1.msra.mxu0 %v4693
        %4695 = vmatprep.subr.mxu0 0.0
        %v4696 = vand.u32 %v1419, 4294901760
        %v4697 = vsub.f32 %v1419, %v4696
        %v4698 = vand.u32 %v4697, 4294901760
        %4699 = vmatpush1.msra.mxu0 %v4698
        %4700 = vmatprep.subr.mxu0 0.0
        %v4701 = vand.u32 %v1420, 4294901760
        %v4702 = vsub.f32 %v1420, %v4701
        %v4703 = vand.u32 %v4702, 4294901760
        %4704 = vmatpush1.msra.mxu0 %v4703
        %4705 = vmatprep.subr.mxu0 0.0
        %v4706 = vand.u32 %v1421, 4294901760
        %v4707 = vsub.f32 %v1421, %v4706
        %v4708 = vand.u32 %v4707, 4294901760
        %4709 = vmatpush1.msra.mxu0 %v4708
        %4710 = vmatprep.subr.mxu0 0.0
        %v4711 = vand.u32 %v1422, 4294901760
        %v4712 = vsub.f32 %v1422, %v4711
        %v4713 = vand.u32 %v4712, 4294901760
        %4714 = vmatpush1.msra.mxu0 %v4713
        %4715 = vmatprep.subr.mxu0 0.0
        %v4716 = vand.u32 %v1423, 4294901760
        %v4717 = vsub.f32 %v1423, %v4716
        %v4718 = vand.u32 %v4717, 4294901760
        %4719 = vmatpush1.msra.mxu0 %v4718
        %4720 = vmatprep.subr.mxu0 0.0
        %v4721 = vand.u32 %v1424, 4294901760
        %v4722 = vsub.f32 %v1424, %v4721
        %v4723 = vand.u32 %v4722, 4294901760
        %4724 = vmatpush1.msra.mxu0 %v4723
        %4725 = vmatprep.subr.mxu0 0.0
        %v4726 = vand.u32 %v1425, 4294901760
        %v4727 = vsub.f32 %v1425, %v4726
        %v4728 = vand.u32 %v4727, 4294901760
        %4729 = vmatpush1.msra.mxu0 %v4728
        %4730 = vmatprep.subr.mxu0 0.0
        %v4731 = vand.u32 %v1426, 4294901760
        %v4732 = vsub.f32 %v1426, %v4731
        %v4733 = vand.u32 %v4732, 4294901760
        %4734 = vmatpush1.msra.mxu0 %v4733
        %4735 = vmatprep.subr.mxu0 0.0
        %v4736 = vand.u32 %v1427, 4294901760
        %v4737 = vsub.f32 %v1427, %v4736
        %v4738 = vand.u32 %v4737, 4294901760
        %4739 = vmatpush1.msra.mxu0 %v4738
        %4740 = vmatprep.subr.mxu0 0.0
        %v4741 = vand.u32 %v1428, 4294901760
        %v4742 = vsub.f32 %v1428, %v4741
        %v4743 = vand.u32 %v4742, 4294901760
        %4744 = vmatpush1.msra.mxu0 %v4743
        %4745 = vmatprep.subr.mxu0 0.0
        %v4746 = vand.u32 %v1429, 4294901760
        %v4747 = vsub.f32 %v1429, %v4746
        %v4748 = vand.u32 %v4747, 4294901760
        %4749 = vmatpush1.msra.mxu0 %v4748
        %4750 = vmatprep.subr.mxu0 0.0
        %v4751 = vand.u32 %v1430, 4294901760
        %v4752 = vsub.f32 %v1430, %v4751
        %v4753 = vand.u32 %v4752, 4294901760
        %4754 = vmatpush1.msra.mxu0 %v4753
        %4755 = vmatprep.subr.mxu0 0.0
        %v4756 = vand.u32 %v1431, 4294901760
        %v4757 = vsub.f32 %v1431, %v4756
        %v4758 = vand.u32 %v4757, 4294901760
        %4759 = vmatpush1.msra.mxu0 %v4758
        %4760 = vmatprep.subr.mxu0 0.0
        %v4761 = vand.u32 %v1432, 4294901760
        %v4762 = vsub.f32 %v1432, %v4761
        %v4763 = vand.u32 %v4762, 4294901760
        %4764 = vmatpush1.msra.mxu0 %v4763
        %4765 = vmatprep.subr.mxu0 0.0
        %v4766 = vand.u32 %v1433, 4294901760
        %v4767 = vsub.f32 %v1433, %v4766
        %v4768 = vand.u32 %v4767, 4294901760
        %4769 = vmatpush1.msra.mxu0 %v4768
        %v4770 = vand.u32 %v1305, 4294901760
        %4771 = vmatprep.mubr.f32.mxu0 %v4770
        %v4772 = vand.u32 %v1304, 4294901760
        %4773 = vmatmul.mubr.f32.gmra.mrb[0].mxu0 %v4772
        %v4774 = vpop.f32.mrb[0].mxu0
        %v4775 = vadd.f32 %v4607, %v4774
        %v4776 = vpop.f32.mrb[0].mxu0
        %4777 = vdwg.mxu0
        %4778 = vmatprep.subr.mxu0 0.0
        %v4779 = vand.u32 %v1402, 4294901760
        %4780 = vmatpush1.msra.mxu0 %v4779
        %4781 = vmatprep.subr.mxu0 0.0
        %v4782 = vand.u32 %v1403, 4294901760
        %4783 = vmatpush1.msra.mxu0 %v4782
        %4784 = vmatprep.subr.mxu0 0.0
        %v4785 = vand.u32 %v1404, 4294901760
        %4786 = vmatpush1.msra.mxu0 %v4785
        %4787 = vmatprep.subr.mxu0 0.0
        %v4788 = vand.u32 %v1405, 4294901760
        %4789 = vmatpush1.msra.mxu0 %v4788
        %4790 = vmatprep.subr.mxu0 0.0
        %v4791 = vand.u32 %v1406, 4294901760
        %4792 = vmatpush1.msra.mxu0 %v4791
        %4793 = vmatprep.subr.mxu0 0.0
        %v4794 = vand.u32 %v1407, 4294901760
        %4795 = vmatpush1.msra.mxu0 %v4794
        %4796 = vmatprep.subr.mxu0 0.0
        %v4797 = vand.u32 %v1408, 4294901760
        %4798 = vmatpush1.msra.mxu0 %v4797
        %4799 = vmatprep.subr.mxu0 0.0
        %v4800 = vand.u32 %v1409, 4294901760
        %4801 = vmatpush1.msra.mxu0 %v4800
        %4802 = vmatprep.subr.mxu0 0.0
        %v4803 = vand.u32 %v1410, 4294901760
        %4804 = vmatpush1.msra.mxu0 %v4803
        %4805 = vmatprep.subr.mxu0 0.0
        %v4806 = vand.u32 %v1411, 4294901760
        %4807 = vmatpush1.msra.mxu0 %v4806
        %4808 = vmatprep.subr.mxu0 0.0
        %v4809 = vand.u32 %v1412, 4294901760
        %4810 = vmatpush1.msra.mxu0 %v4809
        %4811 = vmatprep.subr.mxu0 0.0
        %v4812 = vand.u32 %v1413, 4294901760
        %4813 = vmatpush1.msra.mxu0 %v4812
        %4814 = vmatprep.subr.mxu0 0.0
        %v4815 = vand.u32 %v1414, 4294901760
        %4816 = vmatpush1.msra.mxu0 %v4815
        %4817 = vmatprep.subr.mxu0 0.0
        %v4818 = vand.u32 %v1415, 4294901760
        %4819 = vmatpush1.msra.mxu0 %v4818
        %4820 = vmatprep.subr.mxu0 0.0
        %v4821 = vand.u32 %v1416, 4294901760
        %4822 = vmatpush1.msra.mxu0 %v4821
        %4823 = vmatprep.subr.mxu0 0.0
        %v4824 = vand.u32 %v1417, 4294901760
        %4825 = vmatpush1.msra.mxu0 %v4824
        %4826 = vmatprep.subr.mxu0 0.0
        %v4827 = vand.u32 %v1418, 4294901760
        %4828 = vmatpush1.msra.mxu0 %v4827
        %4829 = vmatprep.subr.mxu0 0.0
        %v4830 = vand.u32 %v1419, 4294901760
        %4831 = vmatpush1.msra.mxu0 %v4830
        %4832 = vmatprep.subr.mxu0 0.0
        %v4833 = vand.u32 %v1420, 4294901760
        %4834 = vmatpush1.msra.mxu0 %v4833
        %4835 = vmatprep.subr.mxu0 0.0
        %v4836 = vand.u32 %v1421, 4294901760
        %4837 = vmatpush1.msra.mxu0 %v4836
        %4838 = vmatprep.subr.mxu0 0.0
        %v4839 = vand.u32 %v1422, 4294901760
        %4840 = vmatpush1.msra.mxu0 %v4839
        %4841 = vmatprep.subr.mxu0 0.0
        %v4842 = vand.u32 %v1423, 4294901760
        %4843 = vmatpush1.msra.mxu0 %v4842
        %4844 = vmatprep.subr.mxu0 0.0
        %v4845 = vand.u32 %v1424, 4294901760
        %4846 = vmatpush1.msra.mxu0 %v4845
        %4847 = vmatprep.subr.mxu0 0.0
        %v4848 = vand.u32 %v1425, 4294901760
        %4849 = vmatpush1.msra.mxu0 %v4848
        %4850 = vmatprep.subr.mxu0 0.0
        %v4851 = vand.u32 %v1426, 4294901760
        %4852 = vmatpush1.msra.mxu0 %v4851
        %4853 = vmatprep.subr.mxu0 0.0
        %v4854 = vand.u32 %v1427, 4294901760
        %4855 = vmatpush1.msra.mxu0 %v4854
        %4856 = vmatprep.subr.mxu0 0.0
        %v4857 = vand.u32 %v1428, 4294901760
        %4858 = vmatpush1.msra.mxu0 %v4857
        %4859 = vmatprep.subr.mxu0 0.0
        %v4860 = vand.u32 %v1429, 4294901760
        %4861 = vmatpush1.msra.mxu0 %v4860
        %4862 = vmatprep.subr.mxu0 0.0
        %v4863 = vand.u32 %v1430, 4294901760
        %4864 = vmatpush1.msra.mxu0 %v4863
        %4865 = vmatprep.subr.mxu0 0.0
        %v4866 = vand.u32 %v1431, 4294901760
        %4867 = vmatpush1.msra.mxu0 %v4866
        %4868 = vmatprep.subr.mxu0 0.0
        %v4869 = vand.u32 %v1432, 4294901760
        %4870 = vmatpush1.msra.mxu0 %v4869
        %4871 = vmatprep.subr.mxu0 0.0
        %v4872 = vand.u32 %v1433, 4294901760
        %4873 = vmatpush1.msra.mxu0 %v4872
        %v4874 = vand.u32 %v1305, 4294901760
        %4875 = vmatprep.mubr.f32.mxu0 %v4874
        %v4876 = vand.u32 %v1304, 4294901760
        %4877 = vmatmul.mubr.f32.gmra.mrb[0].mxu0 %v4876
        %v4878 = vpop.f32.mrb[0].mxu0
        %v4879 = vadd.f32 %v4775, %v4878
        %v4880 = vpop.f32.mrb[0].mxu0
        %4881 = vdwg.mxu0
        %vm4882 = vcmask 517120
        %4883 = vst.msk [vmem:[%s263] sm:$0x3] %vm4882, %v4879
        %s4884 = sand.u32 %s124, 1
        %s4885 = scalar_lea.sflag [#allocation4], %s4884
        %s4886 = sand.u32 %s124, 1
        %s4887 = smul.addr %s4886, 2
        %s4888 = scalar_lea.vmem [#allocation8], %s4887
        // Predicated region
        $region49: #{tpu_custom_call.1} parent=35 // pred_check
          %p4889 = pneg %p134
        $region50: #{tpu_custom_call.1} parent=35 // pred_check_branch
          %4891 = sbr.rel (%p4889) target = $region52
        $region51: #{tpu_custom_call.1} parent=35 // pred_region
          %s4893 = ssub.s32 32, 32
          %4894 = vsyncadd %s4885, %s4893
          %s4895 = smul.addr %s22, 32
          %s4896 = scalar_lea.hbm %s4, %s4895
          %s4898 = sshll.u32 %s4888, 4
          %s4899 = int_to_ptr.vmem [resolvable:$true] %s4898
          %4901 = dma.vmem_to_hbm [thread:$0]  %s4899, 32, %s4896, %s4885
        $region52: #{tpu_custom_call.1} parent=35 // pred_fallthru
          _
      $region36: #{tpu_custom_call.1} parent=5 // pred_fallthru
        _
      %p4902 = scmp.le.s32.totalorder 2, %s17
      // Predicated region
      $region53: #{tpu_custom_call.1} parent=5 // pred_check
        %p4903 = pneg %p4902
      $region54: #{tpu_custom_call.1} parent=5 // pred_check_branch
        %4905 = sbr.rel (%p4903) target = $region56
      $region55: #{tpu_custom_call.1} parent=5 // pred_region
        %s4906 = ssub.s32 %s17, 2
        // Predicated region
        $region57: #{tpu_custom_call.1} parent=55 // pred_check
          %p4907 = pneg %p140
        $region58: #{tpu_custom_call.1} parent=55 // pred_check_branch
          %4909 = sbr.rel (%p4907) target = $region60
        $region59: #{tpu_custom_call.1} parent=55 // pred_region
          %s4910 = sand.u32 %s125, 1
          %s4911 = scalar_lea.sflag [#allocation4], %s4910
          %s4912 = sand.u32 %s125, 1
          %s4913 = smul.addr %s4912, 2
          %s4914 = scalar_lea.vmem [#allocation8], %s4913
          %4915 = dma.done %s4911, 32
        $region60: #{tpu_custom_call.1} parent=55 // pred_fallthru
          _
      $region56: #{tpu_custom_call.1} parent=5 // pred_fallthru
        _
    $region6: #{tpu_custom_call.1} parent=1 // loop_footer
      %s21 = sadd.s32 1, %s17
    $region7: #{tpu_custom_call.1} parent=1 // loop_footer_branch
      %16 = sbr.rel target = $region3
    $region8: #{tpu_custom_call.1} parent=1 // loop_exit
      _
    %4916 = vsyncpa [#allocation3], 1
    %s4917 = scalar_lea.sflag [#allocation3], 1
    %4918 = vsyncpa %s4917, 1
    %4919 = vsyncpa [#allocation6], 1
    %s4920 = scalar_lea.sflag [#allocation6], 1
    %4921 = vsyncpa %s4920, 1
    %4922 = vsyncpa [#allocation4], 1
    %s4923 = scalar_lea.sflag [#allocation4], 1
    %4924 = vsyncpa %s4923, 1

</llo_original>
